<compile_context>
chip_gen: v5e
topology: v5e:2x2
jax: 0.10.0
libtpu: 0.0.40
codegen_flags: <defaults>
</compile_context>

<pallas_src>
import functools

import jax
import jax.numpy as jnp
from jax.experimental import pallas as pl
from jax.experimental.pallas import tpu as pltpu


MATMUL_DTYPE = jnp.bfloat16


def _round_up(n, m):
    return ((n + m - 1) // m) * m


def _default_elementwise_bf16():
    """bf16 tanh between layers only on chips with a bf16 VPU/EUP path."""
    try:
        kind = jax.devices()[0].device_kind.lower()
    except Exception:
        return False
    return ("v6" in kind) or ("v7" in kind) or ("tpu7" in kind)


def _pick_tile_b(batch):
    """Rows per grid step: aim for M=256 and >=2 grid steps when possible."""
    b128 = _round_up(max(int(batch), 1), 128)
    if b128 <= 256:
        return b128                       # single step; M is the whole batch
    half = _round_up(b128 // 2, 128)      # keep >= 2 steps (v7x megacore)
    return min(512, half)


# ----------------------------------------------------------------------------
# Kernel
# ----------------------------------------------------------------------------
def _iwae1_kernel(
    x_ref, eps_ref,
    # encoder params (padded, weights bf16, biases f32)
    w1_ref, b1_ref, w2_ref, b2_ref, wh_ref, bh_ref,
    # decoder params
    dw1_ref, db1_ref, dw2_ref, db2_ref, dw3_ref, db3_ref,
    # outputs (f32)
    mu_ref, sigma_ref, p_ref,
    *, act_dtype,
):
    dh = mu_ref.shape[-1]          # padded dim_h1 (multiple of 128)
    md = w1_ref.dtype              # matmul operand dtype (bf16)

    def mm(a, w_ref, b_ref):
        # bf16 operands, f32 accumulation, f32 bias add.
        return (
            jnp.dot(a.astype(md), w_ref[...], preferred_element_type=jnp.float32)
            + b_ref[...]
        )

    # ---- encoder: Linear -> Tanh -> Linear -> Tanh ----
    # Intermediate activations only feed the next bf16 matmul, so on v6e/v7x
    # the tanh itself runs in bf16 (act_dtype); on v5e act_dtype == f32.
    h = jnp.tanh(mm(x_ref[...], w1_ref, b1_ref).astype(act_dtype))
    h = jnp.tanh(mm(h, w2_ref, b2_ref).astype(act_dtype))

    # ---- fused heads: one matmul -> [mu | logsigma] (f32) ----
    head = mm(h, wh_ref, bh_ref)
    mu = head[:, :dh]
    sigma = jnp.exp(head[:, dh:])

    # Early stores: free the f32 output vregs before the decoder matmuls.
    mu_ref[...] = mu
    sigma_ref[...] = sigma

    # ---- reparameterization (f32 elementwise) ----
    h1 = mu + sigma * eps_ref[...]

    # ---- decoder: Linear -> Tanh -> Linear -> Tanh -> Linear -> Sigmoid ----
    d = jnp.tanh(mm(h1, dw1_ref, db1_ref).astype(act_dtype))
    d = jnp.tanh(mm(d, dw2_ref, db2_ref).astype(act_dtype))
    p_ref[...] = jax.nn.sigmoid(mm(d, dw3_ref, db3_ref))


# ----------------------------------------------------------------------------
# Parameter preparation: pad to 128-lane multiples, fuse heads, cast to bf16.
# Done once per set of parameters (outside the per-batch forward).
# ----------------------------------------------------------------------------
def prepare_params(params, matmul_dtype=MATMUL_DTYPE):
    (w1, b1, w2, b2, wmu, bmu, wls, bls,
     dw1, db1, dw2, db2, dw3, db3) = params
    dim_x, hidden = w1.shape
    dim_h1 = wmu.shape[1]
    Dx = _round_up(dim_x, 128)
    H = _round_up(hidden, 128)
    Dh = _round_up(dim_h1, 128)

    def pad2(a, r, c):
        return jnp.pad(a, ((0, r - a.shape[0]), (0, c - a.shape[1])))

    # fused mu/logsigma head: (hidden, 2*Dh)
    wh = jnp.concatenate([pad2(wmu, hidden, Dh), pad2(wls, hidden, Dh)], axis=1)
    bh = jnp.concatenate([pad2(bmu, 1, Dh), pad2(bls, 1, Dh)], axis=1)

    pp = dict(
        w1=pad2(w1, Dx, H).astype(matmul_dtype),   b1=pad2(b1, 1, H),
        w2=pad2(w2, H, H).astype(matmul_dtype),    b2=pad2(b2, 1, H),
        wh=pad2(wh, H, 2 * Dh).astype(matmul_dtype), bh=bh,
        dw1=pad2(dw1, Dh, H).astype(matmul_dtype), db1=pad2(db1, 1, H),
        dw2=pad2(dw2, H, H).astype(matmul_dtype),  db2=pad2(db2, 1, H),
        dw3=pad2(dw3, H, Dx).astype(matmul_dtype), db3=pad2(db3, 1, Dx),
    )
    dims = (dim_x, hidden, dim_h1, Dx, H, Dh)
    return pp, dims


def padded_eps_shape(dims, batch, tile_b=None):
    """Shape at which callers should draw eps to skip the wrapper-side pad."""
    _, _, _, _, _, Dh = dims
    tb = tile_b if tile_b is not None else _pick_tile_b(batch)
    return _round_up(batch, tb), Dh


# ----------------------------------------------------------------------------
# Forward wrapper
# ----------------------------------------------------------------------------
def make_iwae1_forward(dims, tile_b=None, matmul_dtype=MATMUL_DTYPE,
                       elementwise_bf16=None):
    dim_x, hidden, dim_h1, Dx, H, Dh = dims
    if elementwise_bf16 is None:
        elementwise_bf16 = _default_elementwise_bf16()
    act_dtype = jnp.bfloat16 if elementwise_bf16 else jnp.float32
    kernel = functools.partial(_iwae1_kernel, act_dtype=act_dtype)

    @jax.jit
    def forward(x, eps, pp):
        batch = x.shape[0]
        tb = tile_b if tile_b is not None else _pick_tile_b(batch)
        B = _round_up(batch, tb)

        # --- x: bf16 cast, padded only if not already tile/lane aligned ---
        xp = x.astype(matmul_dtype)
        if x.shape != (B, Dx):
            xp = jnp.pad(xp, ((0, B - batch), (0, Dx - dim_x)))

        # --- eps: accept pre-padded (B, Dh) (preferred, no copy) or logical ---
        if eps.shape[1] == Dh:
            eps_logical = eps[:batch, :dim_h1]
            if eps.shape[0] == B:
                epsp = eps
            elif eps.shape[0] > B:
                epsp = eps[:B]
            else:
                epsp = jnp.pad(eps, ((0, B - eps.shape[0]), (0, 0)))
        else:
            eps_logical = eps
            epsp = jnp.pad(eps, ((0, B - batch), (0, Dh - dim_h1)))

        grid = (B // tb,)

        def batch_spec(cols):
            return pl.BlockSpec((tb, cols), lambda i: (i, 0))

        def weight_spec(shape):
            # Constant block index: weights stay VMEM-resident across steps.
            return pl.BlockSpec(shape, lambda i: (0, 0))

        in_arrays = (xp, epsp,
                     pp["w1"], pp["b1"], pp["w2"], pp["b2"], pp["wh"], pp["bh"],
                     pp["dw1"], pp["db1"], pp["dw2"], pp["db2"],
                     pp["dw3"], pp["db3"])
        in_specs = ([batch_spec(Dx), batch_spec(Dh)]
                    + [weight_spec(a.shape) for a in in_arrays[2:]])

        out_shape = (
            jax.ShapeDtypeStruct((B, Dh), jnp.float32),   # mu
            jax.ShapeDtypeStruct((B, Dh), jnp.float32),   # sigma
            jax.ShapeDtypeStruct((B, Dx), jnp.float32),   # p
        )
        out_specs = [batch_spec(Dh), batch_spec(Dh), batch_spec(Dx)]

        # Advisory cost estimate (padded shapes).
        flops = 2 * B * (Dx * H + H * H + H * 2 * Dh + Dh * H + H * H + H * Dx)
        transcendentals = B * (2 * H + Dh + 2 * H + Dx)
        bytes_accessed = (
            sum(int(a.size) * a.dtype.itemsize for a in in_arrays)
            + (2 * B * Dh + B * Dx) * 4
        )

        mu, sigma, p = pl.pallas_call(
            kernel,
            out_shape=out_shape,
            grid=grid,
            in_specs=in_specs,
            out_specs=out_specs,
            compiler_params=pltpu.CompilerParams(
                dimension_semantics=("parallel",),
            ),
            cost_estimate=pl.CostEstimate(
                flops=int(flops),
                transcendentals=int(transcendentals),
                bytes_accessed=int(bytes_accessed),
            ),
        )(*in_arrays)

        # Slice padding back off; h1 is a trivial fused VPU op outside the
        # kernel (cheaper than an extra HBM output stream).
        mu_l = mu[:batch, :dim_h1]
        sigma_l = sigma[:batch, :dim_h1]
        h1 = mu_l + sigma_l * eps_logical
        return ((h1, mu_l, sigma_l), p[:batch, :dim_x])

    return forward


# ----------------------------------------------------------------------------
# Parameter init (shapes from IWAE_1.__init__; weights stored (in, out))
# ----------------------------------------------------------------------------
def init_params(key, dim_image_vars, dim_h1, hidden=200):
    ks = jax.random.split(key, 7)

    def lin(k, fan_in, fan_out):
        kw, kb = jax.random.split(k)
        scale = 1.0 / jnp.sqrt(fan_in)
        w = jax.random.uniform(kw, (fan_in, fan_out), jnp.float32, -scale, scale)
        b = jax.random.uniform(kb, (1, fan_out), jnp.float32, -scale, scale)
        return w, b

    w1, b1 = lin(ks[0], dim_image_vars, hidden)
    w2, b2 = lin(ks[1], hidden, hidden)
    wmu, bmu = lin(ks[2], hidden, dim_h1)
    wls, bls = lin(ks[3], hidden, dim_h1)
    dw1, db1 = lin(ks[4], dim_h1, hidden)
    dw2, db2 = lin(ks[5], hidden, hidden)
    dw3, db3 = lin(ks[6], hidden, dim_image_vars)
    return (w1, b1, w2, b2, wmu, bmu, wls, bls,
            dw1, db1, dw2, db2, dw3, db3)


# Pure-JAX reference with the same bf16 operand / activation quantization.
def _reference_forward(x, eps, params, matmul_dtype=MATMUL_DTYPE,
                       act_dtype=jnp.float32):
    (w1, b1, w2, b2, wmu, bmu, wls, bls,
     dw1, db1, dw2, db2, dw3, db3) = params

    def mm(a, w, b):
        return jnp.dot(a.astype(matmul_dtype), w.astype(matmul_dtype),
                       preferred_element_type=jnp.float32) + b

    h = jnp.tanh(mm(x, w1, b1).astype(act_dtype))
    h = jnp.tanh(mm(h, w2, b2).astype(act_dtype))
    mu = mm(h, wmu, bmu)
    sigma = jnp.exp(mm(h, wls, bls))
    h1 = mu + sigma * eps
    d = jnp.tanh(mm(h1, dw1, db1).astype(act_dtype))
    d = jnp.tanh(mm(d, dw2, db2).astype(act_dtype))
    p = jax.nn.sigmoid(mm(d, dw3, db3))
    return (h1, mu, sigma), p


if __name__ == "__main__":
    # IWAE-style usage: fold the k importance samples into the leading dim so
    # every matmul sees a large M.  512 rows -> auto tile_b = 256, grid = 2:
    # full 256-wide MXU tiles AND two grid steps for v7x's two TensorCores.
    k_samples = 16
    minibatch = 32
    batch = k_samples * minibatch          # 512
    dim_image_vars = 256                   # lane-aligned "image" size
    dim_h1 = 32                            # padded to 128 inside the wrapper
    hidden = 200                           # padded to 256 inside the wrapper

    key = jax.random.PRNGKey(0)
    k_x, k_eps, k_p = jax.random.split(key, 3)

    params = init_params(k_p, dim_image_vars, dim_h1, hidden)
    prepped, dims = prepare_params(params)
    iwae1_forward = make_iwae1_forward(dims)

    x = jax.random.uniform(k_x, (batch, dim_image_vars), jnp.float32)

    # TODO(synk): torch's in-place .normal_() draw has no in-kernel equivalent
    # here; the Gaussian noise is drawn with jax.random and passed in.  It is
    # drawn directly at the padded (B, Dh) shape so the wrapper never pads it;
    # only the logical [:batch, :dim_h1] slice influences real outputs.
    B_pad, Dh_pad = padded_eps_shape(dims, batch)
    eps_pad = jax.random.normal(k_eps, (B_pad, Dh_pad), jnp.float32)
    eps = eps_pad[:batch, :dim_h1]

    (h1, mu, sigma), p = iwae1_forward(x, eps_pad, prepped)
    jax.block_until_ready((h1, mu, sigma, p))

    # sanity check against pure-JAX reference (same quantization points)
    use_bf16_act = _default_elementwise_bf16()
    act_dtype = jnp.bfloat16 if use_bf16_act else jnp.float32
    (h1_r, mu_r, sigma_r), p_r = _reference_forward(x, eps, params,
                                                    act_dtype=act_dtype)
    tol = 2e-2 if use_bf16_act else 1e-3
    assert jnp.allclose(mu, mu_r, atol=tol, rtol=tol), "mu mismatch"
    assert jnp.allclose(sigma, sigma_r, atol=tol, rtol=tol), "sigma mismatch"
    assert jnp.allclose(h1, h1_r, atol=tol, rtol=tol), "h1 mismatch"
    assert jnp.allclose(p, p_r, atol=tol, rtol=tol), "p mismatch"

    print("KERNEL_OK")
</pallas_src>

<mosaic_0001>
module attributes {stable_mosaic.version = 11 : i64} {
  func.func @_iwae1_kernel(%arg0: i32, %arg1: memref<256x256xbf16, #tpu.memory_space<vmem>>, %arg2: memref<256x128xf32, #tpu.memory_space<vmem>>, %arg3: memref<256x256xbf16, #tpu.memory_space<vmem>>, %arg4: memref<1x256xf32, #tpu.memory_space<vmem>>, %arg5: memref<256x256xbf16, #tpu.memory_space<vmem>>, %arg6: memref<1x256xf32, #tpu.memory_space<vmem>>, %arg7: memref<256x256xbf16, #tpu.memory_space<vmem>>, %arg8: memref<1x256xf32, #tpu.memory_space<vmem>>, %arg9: memref<128x256xbf16, #tpu.memory_space<vmem>>, %arg10: memref<1x256xf32, #tpu.memory_space<vmem>>, %arg11: memref<256x256xbf16, #tpu.memory_space<vmem>>, %arg12: memref<1x256xf32, #tpu.memory_space<vmem>>, %arg13: memref<256x256xbf16, #tpu.memory_space<vmem>>, %arg14: memref<1x256xf32, #tpu.memory_space<vmem>>, %arg15: memref<256x128xf32, #tpu.memory_space<vmem>>, %arg16: memref<256x128xf32, #tpu.memory_space<vmem>>, %arg17: memref<256x256xf32, #tpu.memory_space<vmem>>) attributes {dimension_semantics = [#tpu.dimension_semantics<parallel>], iteration_bounds = array<i64: 2>, scalar_prefetch = 0 : i64, scratch_operands = 0 : i64, tpu.core_type = #tpu.core_type<tc>, window_params = [{transform_indices = @transform_0, window_bounds = array<i64: 256, 256>}, {transform_indices = @transform_1, window_bounds = array<i64: 256, 128>}, {pipeline_mode = #tpu.pipeline_mode<synchronous>, transform_indices = @transform_2, window_bounds = array<i64: 256, 256>}, {pipeline_mode = #tpu.pipeline_mode<synchronous>, transform_indices = @transform_3, window_bounds = array<i64: 1, 256>}, {pipeline_mode = #tpu.pipeline_mode<synchronous>, transform_indices = @transform_4, window_bounds = array<i64: 256, 256>}, {pipeline_mode = #tpu.pipeline_mode<synchronous>, transform_indices = @transform_5, window_bounds = array<i64: 1, 256>}, {pipeline_mode = #tpu.pipeline_mode<synchronous>, transform_indices = @transform_6, window_bounds = array<i64: 256, 256>}, {pipeline_mode = #tpu.pipeline_mode<synchronous>, transform_indices = @transform_7, window_bounds = array<i64: 1, 256>}, {pipeline_mode = #tpu.pipeline_mode<synchronous>, transform_indices = @transform_8, window_bounds = array<i64: 128, 256>}, {pipeline_mode = #tpu.pipeline_mode<synchronous>, transform_indices = @transform_9, window_bounds = array<i64: 1, 256>}, {pipeline_mode = #tpu.pipeline_mode<synchronous>, transform_indices = @transform_10, window_bounds = array<i64: 256, 256>}, {pipeline_mode = #tpu.pipeline_mode<synchronous>, transform_indices = @transform_11, window_bounds = array<i64: 1, 256>}, {pipeline_mode = #tpu.pipeline_mode<synchronous>, transform_indices = @transform_12, window_bounds = array<i64: 256, 256>}, {pipeline_mode = #tpu.pipeline_mode<synchronous>, transform_indices = @transform_13, window_bounds = array<i64: 1, 256>}, {transform_indices = @transform_14, window_bounds = array<i64: 256, 128>}, {transform_indices = @transform_15, window_bounds = array<i64: 256, 128>}, {transform_indices = @transform_16, window_bounds = array<i64: 256, 256>}]} {
    %c0 = arith.constant 0 : index
    %c0_0 = arith.constant 0 : index
    %0 = vector.load %arg1[%c0, %c0_0] : memref<256x256xbf16, #tpu.memory_space<vmem>>, vector<256x256xbf16>
    %c0_1 = arith.constant 0 : index
    %c0_2 = arith.constant 0 : index
    %1 = vector.load %arg3[%c0_1, %c0_2] : memref<256x256xbf16, #tpu.memory_space<vmem>>, vector<256x256xbf16>
    %cst = arith.constant dense<0.000000e+00> : vector<256x256xf32>
    %2 = tpu.matmul %0, %1, %cst {dimension_numbers = #tpu.dot_dimension_numbers<[1], [0], [0], [1], [0, 0, 1, 1], [], []>} : vector<256x256xbf16>, vector<256x256xbf16>, vector<256x256xf32> -> vector<256x256xf32>
    %c0_3 = arith.constant 0 : index
    %c0_4 = arith.constant 0 : index
    %3 = vector.load %arg4[%c0_3, %c0_4] : memref<1x256xf32, #tpu.memory_space<vmem>>, vector<1x256xf32>
    %4 = vector.broadcast %3 : vector<1x256xf32> to vector<256x256xf32>
    %5 = arith.addf %2, %4 : vector<256x256xf32>
    %6 = math.tanh %5 : vector<256x256xf32>
    %7 = arith.truncf %6 : vector<256x256xf32> to vector<256x256xbf16>
    %c0_5 = arith.constant 0 : index
    %c0_6 = arith.constant 0 : index
    %8 = vector.load %arg5[%c0_5, %c0_6] : memref<256x256xbf16, #tpu.memory_space<vmem>>, vector<256x256xbf16>
    %cst_7 = arith.constant dense<0.000000e+00> : vector<256x256xf32>
    %9 = tpu.matmul %7, %8, %cst_7 {dimension_numbers = #tpu.dot_dimension_numbers<[1], [0], [0], [1], [0, 0, 1, 1], [], []>} : vector<256x256xbf16>, vector<256x256xbf16>, vector<256x256xf32> -> vector<256x256xf32>
    %c0_8 = arith.constant 0 : index
    %c0_9 = arith.constant 0 : index
    %10 = vector.load %arg6[%c0_8, %c0_9] : memref<1x256xf32, #tpu.memory_space<vmem>>, vector<1x256xf32>
    %11 = vector.broadcast %10 : vector<1x256xf32> to vector<256x256xf32>
    %12 = arith.addf %9, %11 : vector<256x256xf32>
    %13 = math.tanh %12 : vector<256x256xf32>
    %14 = arith.truncf %13 : vector<256x256xf32> to vector<256x256xbf16>
    %c0_10 = arith.constant 0 : index
    %c0_11 = arith.constant 0 : index
    %15 = vector.load %arg7[%c0_10, %c0_11] : memref<256x256xbf16, #tpu.memory_space<vmem>>, vector<256x256xbf16>
    %cst_12 = arith.constant dense<0.000000e+00> : vector<256x256xf32>
    %16 = tpu.matmul %14, %15, %cst_12 {dimension_numbers = #tpu.dot_dimension_numbers<[1], [0], [0], [1], [0, 0, 1, 1], [], []>} : vector<256x256xbf16>, vector<256x256xbf16>, vector<256x256xf32> -> vector<256x256xf32>
    %c0_13 = arith.constant 0 : index
    %c0_14 = arith.constant 0 : index
    %17 = vector.load %arg8[%c0_13, %c0_14] : memref<1x256xf32, #tpu.memory_space<vmem>>, vector<1x256xf32>
    %18 = vector.broadcast %17 : vector<1x256xf32> to vector<256x256xf32>
    %19 = arith.addf %16, %18 : vector<256x256xf32>
    %20 = vector.extract_strided_slice %19 {offsets = [0, 0], sizes = [256, 128], strides = [1, 1]} : vector<256x256xf32> to vector<256x128xf32>
    %21 = vector.extract_strided_slice %19 {offsets = [0, 128], sizes = [256, 128], strides = [1, 1]} : vector<256x256xf32> to vector<256x128xf32>
    %22 = math.exp %21 : vector<256x128xf32>
    %c0_15 = arith.constant 0 : index
    %c0_16 = arith.constant 0 : index
    %23 = vector.load %arg15[%c0_15, %c0_16] : memref<256x128xf32, #tpu.memory_space<vmem>>, vector<256x128xf32>
    tpu.vector_store %arg15[%c0_15, %c0_16], %20 {strides = array<i32>} : memref<256x128xf32, #tpu.memory_space<vmem>>, vector<256x128xf32>,
    %c0_17 = arith.constant 0 : index
    %c0_18 = arith.constant 0 : index
    %24 = vector.load %arg16[%c0_17, %c0_18] : memref<256x128xf32, #tpu.memory_space<vmem>>, vector<256x128xf32>
    tpu.vector_store %arg16[%c0_17, %c0_18], %22 {strides = array<i32>} : memref<256x128xf32, #tpu.memory_space<vmem>>, vector<256x128xf32>,
    %c0_19 = arith.constant 0 : index
    %c0_20 = arith.constant 0 : index
    %25 = vector.load %arg2[%c0_19, %c0_20] : memref<256x128xf32, #tpu.memory_space<vmem>>, vector<256x128xf32>
    %26 = arith.mulf %22, %25 : vector<256x128xf32>
    %27 = arith.addf %20, %26 : vector<256x128xf32>
    %28 = arith.truncf %27 : vector<256x128xf32> to vector<256x128xbf16>
    %c0_21 = arith.constant 0 : index
    %c0_22 = arith.constant 0 : index
    %29 = vector.load %arg9[%c0_21, %c0_22] : memref<128x256xbf16, #tpu.memory_space<vmem>>, vector<128x256xbf16>
    %cst_23 = arith.constant dense<0.000000e+00> : vector<256x256xf32>
    %30 = tpu.matmul %28, %29, %cst_23 {dimension_numbers = #tpu.dot_dimension_numbers<[1], [0], [0], [1], [0, 0, 1, 1], [], []>} : vector<256x128xbf16>, vector<128x256xbf16>, vector<256x256xf32> -> vector<256x256xf32>
    %c0_24 = arith.constant 0 : index
    %c0_25 = arith.constant 0 : index
    %31 = vector.load %arg10[%c0_24, %c0_25] : memref<1x256xf32, #tpu.memory_space<vmem>>, vector<1x256xf32>
    %32 = vector.broadcast %31 : vector<1x256xf32> to vector<256x256xf32>
    %33 = arith.addf %30, %32 : vector<256x256xf32>
    %34 = math.tanh %33 : vector<256x256xf32>
    %35 = arith.truncf %34 : vector<256x256xf32> to vector<256x256xbf16>
    %c0_26 = arith.constant 0 : index
    %c0_27 = arith.constant 0 : index
    %36 = vector.load %arg11[%c0_26, %c0_27] : memref<256x256xbf16, #tpu.memory_space<vmem>>, vector<256x256xbf16>
    %cst_28 = arith.constant dense<0.000000e+00> : vector<256x256xf32>
    %37 = tpu.matmul %35, %36, %cst_28 {dimension_numbers = #tpu.dot_dimension_numbers<[1], [0], [0], [1], [0, 0, 1, 1], [], []>} : vector<256x256xbf16>, vector<256x256xbf16>, vector<256x256xf32> -> vector<256x256xf32>
    %c0_29 = arith.constant 0 : index
    %c0_30 = arith.constant 0 : index
    %38 = vector.load %arg12[%c0_29, %c0_30] : memref<1x256xf32, #tpu.memory_space<vmem>>, vector<1x256xf32>
    %39 = vector.broadcast %38 : vector<1x256xf32> to vector<256x256xf32>
    %40 = arith.addf %37, %39 : vector<256x256xf32>
    %41 = math.tanh %40 : vector<256x256xf32>
    %42 = arith.truncf %41 : vector<256x256xf32> to vector<256x256xbf16>
    %c0_31 = arith.constant 0 : index
    %c0_32 = arith.constant 0 : index
    %43 = vector.load %arg13[%c0_31, %c0_32] : memref<256x256xbf16, #tpu.memory_space<vmem>>, vector<256x256xbf16>
    %cst_33 = arith.constant dense<0.000000e+00> : vector<256x256xf32>
    %44 = tpu.matmul %42, %43, %cst_33 {dimension_numbers = #tpu.dot_dimension_numbers<[1], [0], [0], [1], [0, 0, 1, 1], [], []>} : vector<256x256xbf16>, vector<256x256xbf16>, vector<256x256xf32> -> vector<256x256xf32>
    %c0_34 = arith.constant 0 : index
    %c0_35 = arith.constant 0 : index
    %45 = vector.load %arg14[%c0_34, %c0_35] : memref<1x256xf32, #tpu.memory_space<vmem>>, vector<1x256xf32>
    %46 = vector.broadcast %45 : vector<1x256xf32> to vector<256x256xf32>
    %47 = arith.addf %44, %46 : vector<256x256xf32>
    %48 = arith.negf %47 : vector<256x256xf32>
    %49 = math.exp %48 : vector<256x256xf32>
    %cst_36 = arith.constant 1.000000e+00 : f32
    %50 = vector.broadcast %cst_36 : f32 to vector<256x256xf32>
    %51 = arith.addf %50, %49 : vector<256x256xf32>
    %52 = arith.divf %50, %51 : vector<256x256xf32>
    %c0_37 = arith.constant 0 : index
    %c0_38 = arith.constant 0 : index
    %53 = vector.load %arg17[%c0_37, %c0_38] : memref<256x256xf32, #tpu.memory_space<vmem>>, vector<256x256xf32>
    tpu.vector_store %arg17[%c0_37, %c0_38], %52 {strides = array<i32>} : memref<256x256xf32, #tpu.memory_space<vmem>>, vector<256x256xf32>,
    return
  }
  func.func @transform_0(%arg0: i32) -> (i32, i32) {
    %c0_i32 = arith.constant 0 : i32
    %c0_i32_0 = arith.constant 0 : i32
    return %arg0, %c0_i32 : i32, i32
  }
  func.func @transform_1(%arg0: i32) -> (i32, i32) {
    %c0_i32 = arith.constant 0 : i32
    %c0_i32_0 = arith.constant 0 : i32
    return %arg0, %c0_i32 : i32, i32
  }
  func.func @transform_2(%arg0: i32) -> (i32, i32) {
    %c0_i32 = arith.constant 0 : i32
    %c0_i32_0 = arith.constant 0 : i32
    %c0_i32_1 = arith.constant 0 : i32
    return %c0_i32, %c0_i32_0 : i32, i32
  }
  func.func @transform_3(%arg0: i32) -> (i32, i32) {
    %c0_i32 = arith.constant 0 : i32
    %c0_i32_0 = arith.constant 0 : i32
    %c0_i32_1 = arith.constant 0 : i32
    return %c0_i32, %c0_i32_0 : i32, i32
  }
  func.func @transform_4(%arg0: i32) -> (i32, i32) {
    %c0_i32 = arith.constant 0 : i32
    %c0_i32_0 = arith.constant 0 : i32
    %c0_i32_1 = arith.constant 0 : i32
    return %c0_i32, %c0_i32_0 : i32, i32
  }
  func.func @transform_5(%arg0: i32) -> (i32, i32) {
    %c0_i32 = arith.constant 0 : i32
    %c0_i32_0 = arith.constant 0 : i32
    %c0_i32_1 = arith.constant 0 : i32
    return %c0_i32, %c0_i32_0 : i32, i32
  }
  func.func @transform_6(%arg0: i32) -> (i32, i32) {
    %c0_i32 = arith.constant 0 : i32
    %c0_i32_0 = arith.constant 0 : i32
    %c0_i32_1 = arith.constant 0 : i32
    return %c0_i32, %c0_i32_0 : i32, i32
  }
  func.func @transform_7(%arg0: i32) -> (i32, i32) {
    %c0_i32 = arith.constant 0 : i32
    %c0_i32_0 = arith.constant 0 : i32
    %c0_i32_1 = arith.constant 0 : i32
    return %c0_i32, %c0_i32_0 : i32, i32
  }
  func.func @transform_8(%arg0: i32) -> (i32, i32) {
    %c0_i32 = arith.constant 0 : i32
    %c0_i32_0 = arith.constant 0 : i32
    %c0_i32_1 = arith.constant 0 : i32
    return %c0_i32, %c0_i32_0 : i32, i32
  }
  func.func @transform_9(%arg0: i32) -> (i32, i32) {
    %c0_i32 = arith.constant 0 : i32
    %c0_i32_0 = arith.constant 0 : i32
    %c0_i32_1 = arith.constant 0 : i32
    return %c0_i32, %c0_i32_0 : i32, i32
  }
  func.func @transform_10(%arg0: i32) -> (i32, i32) {
    %c0_i32 = arith.constant 0 : i32
    %c0_i32_0 = arith.constant 0 : i32
    %c0_i32_1 = arith.constant 0 : i32
    return %c0_i32, %c0_i32_0 : i32, i32
  }
  func.func @transform_11(%arg0: i32) -> (i32, i32) {
    %c0_i32 = arith.constant 0 : i32
    %c0_i32_0 = arith.constant 0 : i32
    %c0_i32_1 = arith.constant 0 : i32
    return %c0_i32, %c0_i32_0 : i32, i32
  }
  func.func @transform_12(%arg0: i32) -> (i32, i32) {
    %c0_i32 = arith.constant 0 : i32
    %c0_i32_0 = arith.constant 0 : i32
    %c0_i32_1 = arith.constant 0 : i32
    return %c0_i32, %c0_i32_0 : i32, i32
  }
  func.func @transform_13(%arg0: i32) -> (i32, i32) {
    %c0_i32 = arith.constant 0 : i32
    %c0_i32_0 = arith.constant 0 : i32
    %c0_i32_1 = arith.constant 0 : i32
    return %c0_i32, %c0_i32_0 : i32, i32
  }
  func.func @transform_14(%arg0: i32) -> (i32, i32) {
    %c0_i32 = arith.constant 0 : i32
    %c0_i32_0 = arith.constant 0 : i32
    return %arg0, %c0_i32 : i32, i32
  }
  func.func @transform_15(%arg0: i32) -> (i32, i32) {
    %c0_i32 = arith.constant 0 : i32
    %c0_i32_0 = arith.constant 0 : i32
    return %arg0, %c0_i32 : i32, i32
  }
  func.func @transform_16(%arg0: i32) -> (i32, i32) {
    %c0_i32 = arith.constant 0 : i32
    %c0_i32_0 = arith.constant 0 : i32
    return %arg0, %c0_i32 : i32, i32
  }
}

</mosaic_0001>

<llo_original>
// kernel: forward.1
$region0: #{forward.1}
  #allocation0 [shape = 'u32[]', space=smem, size = 0x4, offset = 0x4, fixed_abs, tag = 'smem constant byte address 0x4 - core index']
  #allocation1 [shape = 'u32[72,128]{1,0:T(1,128)}', space=vmem, size = 0x9000, scoped, tag = 'internal scratch']
  %s0 = inlined_call_operand.vmem [shape: bf16[512,256], index: 0, kind: input, shape index: {}]
  %s1 = inlined_call_operand.vmem [shape: f32[512,128], index: 1, kind: input, shape index: {}]
  %s2 = inlined_call_operand.vmem [shape: bf16[256,256], index: 2, kind: input, shape index: {}]
  %s3 = inlined_call_operand.hbm [shape: f32[1,256], index: 3, kind: input, shape index: {}]
  %s4 = inlined_call_operand.vmem [shape: bf16[256,256], index: 4, kind: input, shape index: {}]
  %s5 = inlined_call_operand.hbm [shape: f32[1,256], index: 5, kind: input, shape index: {}]
  %s6 = inlined_call_operand.vmem [shape: bf16[256,256], index: 6, kind: input, shape index: {}]
  %s7 = inlined_call_operand.hbm [shape: f32[1,256], index: 7, kind: input, shape index: {}]
  %s8 = inlined_call_operand.hbm [shape: bf16[128,256], index: 8, kind: input, shape index: {}]
  %s9 = inlined_call_operand.hbm [shape: f32[1,256], index: 9, kind: input, shape index: {}]
  %s10 = inlined_call_operand.vmem [shape: bf16[256,256], index: 10, kind: input, shape index: {}]
  %s11 = inlined_call_operand.hbm [shape: f32[1,256], index: 11, kind: input, shape index: {}]
  %s12 = inlined_call_operand.hbm [shape: bf16[256,256], index: 12, kind: input, shape index: {}]
  %s13 = inlined_call_operand.hbm [shape: f32[1,256], index: 13, kind: input, shape index: {}]
  %s14 = inlined_call_operand.vmem [shape: f32[512,128], index: 14, kind: output, shape index: {0}]
  %s15 = inlined_call_operand.vmem [shape: f32[512,128], index: 15, kind: output, shape index: {1}]
  %s16 = inlined_call_operand.hbm [shape: f32[512,256], index: 16, kind: output, shape index: {2}]
  %17 = xla_tuple %s14, %s15, %s16
  %s18 = sld [smem:[#allocation0]]
  $region137: #{forward.1} parent=0
    _
  %s20 = ssub.s32 1, %s18
  %s21 = scalar_select 0, %s20, %s18
  $region1: #{forward.1} parent=0
    #allocation2 [shape = 'u8[1024]{0}', space=vmem, size = 0x400, scoped, tag = 'input window, operand 3, single buffered']
    #allocation3 [shape = 's32[2]{0}', space=sflag, size = 0x8, scoped, tag = 'scoped memory for forward.1']
    #allocation4 [shape = 's32[2]{0}', space=sflag, size = 0x8, scoped, tag = 'scoped memory for forward.1']
    #allocation5 [shape = 'u8[1024]{0}', space=vmem, size = 0x400, scoped, tag = 'input window, operand 5, single buffered']
    #allocation6 [shape = 's32[1]{0}', space=sflag, size = 0x4, scoped, tag = 'scoped memory for forward.1']
    #allocation7 [shape = 'u8[1024]{0}', space=vmem, size = 0x400, scoped, tag = 'input window, operand 7, single buffered']
    #allocation8 [shape = 'u8[65536]{0}', space=vmem, size = 0x10000, scoped, tag = 'input window, operand 8, single buffered']
    #allocation9 [shape = 's32[1]{0}', space=sflag, size = 0x4, scoped, tag = 'scoped memory for forward.1']
    #allocation10 [shape = 'u8[1024]{0}', space=vmem, size = 0x400, scoped, tag = 'input window, operand 9, single buffered']
    #allocation11 [shape = 'u8[1024]{0}', space=vmem, size = 0x400, scoped, tag = 'input window, operand 11, single buffered']
    #allocation12 [shape = 's32[1]{0}', space=sflag, size = 0x4, scoped, tag = 'scoped memory for forward.1']
    #allocation13 [shape = 'u8[131072]{0}', space=vmem, size = 0x20000, scoped, tag = 'input window, operand 12, single buffered']
    #allocation14 [shape = 'u8[1024]{0}', space=vmem, size = 0x400, scoped, tag = 'input window, operand 13, single buffered']
    #allocation15 [shape = 's32[1]{0}', space=sflag, size = 0x4, scoped, tag = 'scoped memory for forward.1']
    #allocation16 [shape = 'u8[524288]{0}', space=vmem, size = 0x80000, scoped, tag = 'output window, operand 2']
    %22 = vsyncpa [#allocation3], 0
    %23 = vsyncpa [#allocation6], 0
    %24 = vsyncpa [#allocation9], 0
    %25 = vsyncpa [#allocation12], 0
    %26 = vsyncpa [#allocation15], 0
    %27 = vsyncpa [#allocation4], 0
    %s28 = scalar_lea.sflag [#allocation4], 1
    %29 = vsyncpa %s28, 0
    loop: start=0, step=1, limit=4
    $region2: #{forward.1} parent=1 // loop_pre_header
      _
    $region3: #{forward.1} parent=1 // loop_header
      %s31 = sphi 0, %s35
      %p32 = scmp.ge.s32.totalorder %s31, 4
      %s41 = sphi 0, %s43
      %s44 = sphi 0, %s41
      %s45 = sphi 0, %s44
      %s61 = sphi 0, %s45
      %s67 = sphi 0, %s69
      %s70 = sphi 0, %s67
      %s71 = sphi 0, %s70
      %s87 = sphi 0, %s71
      %s91 = sphi 0, %s91
      %s93 = sphi 0, %s91
      %s94 = sphi 0, %s93
      %s108 = sphi 0, %s94
      %s112 = sphi 0, %s112
      %s114 = sphi 0, %s112
      %s115 = sphi 0, %s114
      %s129 = sphi 0, %s115
      %s133 = sphi 0, %s133
      %s135 = sphi 0, %s133
      %s136 = sphi 0, %s135
      %s150 = sphi 0, %s136
      %s154 = sphi 0, %s154
      %s156 = sphi 0, %s154
      %s157 = sphi 0, %s156
      %s171 = sphi 0, %s157
      %s175 = sphi 0, %s175
      %s177 = sphi 0, %s175
      %s178 = sphi 0, %s177
      %s192 = sphi 0, %s178
      %s196 = sphi 0, %s196
      %s198 = sphi 0, %s196
      %s199 = sphi 0, %s198
      %s213 = sphi 0, %s199
      %s217 = sphi 0, %s217
      %s219 = sphi 0, %s217
      %s220 = sphi 0, %s219
      %s234 = sphi 0, %s220
      %s238 = sphi 0, %s238
      %s240 = sphi 0, %s238
      %s241 = sphi 0, %s240
      %s255 = sphi 0, %s241
      %s259 = sphi 0, %s259
      %s261 = sphi 0, %s259
      %s262 = sphi 0, %s261
      %s276 = sphi 0, %s262
      %s280 = sphi 0, %s280
      %s282 = sphi 0, %s280
      %s283 = sphi 0, %s282
      %s297 = sphi 0, %s283
      %s301 = sphi 0, %s301
      %s303 = sphi 0, %s301
      %s304 = sphi 0, %s303
      %s318 = sphi 0, %s304
      %s322 = sphi 0, %s322
      %s324 = sphi 0, %s322
      %s325 = sphi 0, %s324
      %s339 = sphi 0, %s325
      %s345 = sphi 0, %s347
      %s348 = sphi 0, %s345
      %s349 = sphi 0, %s348
      %s365 = sphi 0, %s349
      %s371 = sphi 0, %s373
      %s374 = sphi 0, %s371
      %s375 = sphi 0, %s374
      %s391 = sphi 0, %s375
      %s397 = sphi 0, %s399
      %s400 = sphi 0, %s397
      %s401 = sphi 0, %s400
      %s417 = sphi 0, %s401
    $region4: #{forward.1} parent=1 // loop_header_branch
      %34 = sbr.rel (%p32) target = $region8
    $region5: #{forward.1} parent=1 // loop_body
      %s36 = ssub.s32 %s31, 1
      %s37 = ssub.s32 %s31, 2
      %s38 = sadd.s32 %s31, 1
      %s39 = ssub.s32 %s31, %s38
      %p40 = scmp.eq.s32.totalorder %s39, 0
      %s42 = sadd.s32 %s41, 1
      %s43 = scalar_select %p40, %s41, %s42
      %p46 = pneg %p40
      %p47 = scmp.eq.s32.totalorder %s31, 1
      %p48 = por %p46, %p47
      %p49 = scmp.ne.s32.totalorder %s41, %s44
      %p50 = scmp.eq.s32.totalorder %s31, 0
      %p51 = por %p49, %p50
      %p52 = scmp.ne.s32.totalorder %s41, %s44
      %p53 = scmp.eq.s32.totalorder %s36, 1
      %p54 = por %p52, %p53
      %p55 = scmp.ne.s32.totalorder %s44, %s45
      %p56 = scmp.eq.s32.totalorder %s36, 0
      %p57 = por %p55, %p56
      %p58 = scmp.ne.s32.totalorder %s44, %s45
      %p59 = scmp.eq.s32.totalorder %s37, 1
      %p60 = por %p58, %p59
      %p62 = scmp.ne.s32.totalorder %s45, %s61
      %p63 = scmp.eq.s32.totalorder %s37, 0
      %p64 = por %p62, %p63
      %s65 = ssub.s32 %s31, %s38
      %p66 = scmp.eq.s32.totalorder %s65, 0
      %s68 = sadd.s32 %s67, 1
      %s69 = scalar_select %p66, %s67, %s68
      %p72 = pneg %p66
      %p73 = scmp.eq.s32.totalorder %s31, 1
      %p74 = por %p72, %p73
      %p75 = scmp.ne.s32.totalorder %s67, %s70
      %p76 = scmp.eq.s32.totalorder %s31, 0
      %p77 = por %p75, %p76
      %p78 = scmp.ne.s32.totalorder %s67, %s70
      %p79 = scmp.eq.s32.totalorder %s36, 1
      %p80 = por %p78, %p79
      %p81 = scmp.ne.s32.totalorder %s70, %s71
      %p82 = scmp.eq.s32.totalorder %s36, 0
      %p83 = por %p81, %p82
      %p84 = scmp.ne.s32.totalorder %s70, %s71
      %p85 = scmp.eq.s32.totalorder %s37, 1
      %p86 = por %p84, %p85
      %p88 = scmp.ne.s32.totalorder %s71, %s87
      %p89 = scmp.eq.s32.totalorder %s37, 0
      %p90 = por %p88, %p89
      %s92 = sadd.s32 %s91, 1
      %p95 = scmp.eq.s32.totalorder %s31, 1
      %p96 = scmp.ne.s32.totalorder %s91, %s93
      %p97 = scmp.eq.s32.totalorder %s31, 0
      %p98 = por %p96, %p97
      %p99 = scmp.ne.s32.totalorder %s91, %s93
      %p100 = scmp.eq.s32.totalorder %s36, 1
      %p101 = por %p99, %p100
      %p102 = scmp.ne.s32.totalorder %s93, %s94
      %p103 = scmp.eq.s32.totalorder %s36, 0
      %p104 = por %p102, %p103
      %p105 = scmp.ne.s32.totalorder %s93, %s94
      %p106 = scmp.eq.s32.totalorder %s37, 1
      %p107 = por %p105, %p106
      %p109 = scmp.ne.s32.totalorder %s94, %s108
      %p110 = scmp.eq.s32.totalorder %s37, 0
      %p111 = por %p109, %p110
      %s113 = sadd.s32 %s112, 1
      %p116 = scmp.eq.s32.totalorder %s31, 1
      %p117 = scmp.ne.s32.totalorder %s112, %s114
      %p118 = scmp.eq.s32.totalorder %s31, 0
      %p119 = por %p117, %p118
      %p120 = scmp.ne.s32.totalorder %s112, %s114
      %p121 = scmp.eq.s32.totalorder %s36, 1
      %p122 = por %p120, %p121
      %p123 = scmp.ne.s32.totalorder %s114, %s115
      %p124 = scmp.eq.s32.totalorder %s36, 0
      %p125 = por %p123, %p124
      %p126 = scmp.ne.s32.totalorder %s114, %s115
      %p127 = scmp.eq.s32.totalorder %s37, 1
      %p128 = por %p126, %p127
      %p130 = scmp.ne.s32.totalorder %s115, %s129
      %p131 = scmp.eq.s32.totalorder %s37, 0
      %p132 = por %p130, %p131
      %s134 = sadd.s32 %s133, 1
      %p137 = scmp.eq.s32.totalorder %s31, 1
      %p138 = scmp.ne.s32.totalorder %s133, %s135
      %p139 = scmp.eq.s32.totalorder %s31, 0
      %p140 = por %p138, %p139
      %p141 = scmp.ne.s32.totalorder %s133, %s135
      %p142 = scmp.eq.s32.totalorder %s36, 1
      %p143 = por %p141, %p142
      %p144 = scmp.ne.s32.totalorder %s135, %s136
      %p145 = scmp.eq.s32.totalorder %s36, 0
      %p146 = por %p144, %p145
      %p147 = scmp.ne.s32.totalorder %s135, %s136
      %p148 = scmp.eq.s32.totalorder %s37, 1
      %p149 = por %p147, %p148
      %p151 = scmp.ne.s32.totalorder %s136, %s150
      %p152 = scmp.eq.s32.totalorder %s37, 0
      %p153 = por %p151, %p152
      %s155 = sadd.s32 %s154, 1
      %p158 = scmp.eq.s32.totalorder %s31, 1
      %p159 = scmp.ne.s32.totalorder %s154, %s156
      %p160 = scmp.eq.s32.totalorder %s31, 0
      %p161 = por %p159, %p160
      %p162 = scmp.ne.s32.totalorder %s154, %s156
      %p163 = scmp.eq.s32.totalorder %s36, 1
      %p164 = por %p162, %p163
      %p165 = scmp.ne.s32.totalorder %s156, %s157
      %p166 = scmp.eq.s32.totalorder %s36, 0
      %p167 = por %p165, %p166
      %p168 = scmp.ne.s32.totalorder %s156, %s157
      %p169 = scmp.eq.s32.totalorder %s37, 1
      %p170 = por %p168, %p169
      %p172 = scmp.ne.s32.totalorder %s157, %s171
      %p173 = scmp.eq.s32.totalorder %s37, 0
      %p174 = por %p172, %p173
      %s176 = sadd.s32 %s175, 1
      %p179 = scmp.eq.s32.totalorder %s31, 1
      %p180 = scmp.ne.s32.totalorder %s175, %s177
      %p181 = scmp.eq.s32.totalorder %s31, 0
      %p182 = por %p180, %p181
      %p183 = scmp.ne.s32.totalorder %s175, %s177
      %p184 = scmp.eq.s32.totalorder %s36, 1
      %p185 = por %p183, %p184
      %p186 = scmp.ne.s32.totalorder %s177, %s178
      %p187 = scmp.eq.s32.totalorder %s36, 0
      %p188 = por %p186, %p187
      %p189 = scmp.ne.s32.totalorder %s177, %s178
      %p190 = scmp.eq.s32.totalorder %s37, 1
      %p191 = por %p189, %p190
      %p193 = scmp.ne.s32.totalorder %s178, %s192
      %p194 = scmp.eq.s32.totalorder %s37, 0
      %p195 = por %p193, %p194
      %s197 = sadd.s32 %s196, 1
      %p200 = scmp.eq.s32.totalorder %s31, 1
      %p201 = scmp.ne.s32.totalorder %s196, %s198
      %p202 = scmp.eq.s32.totalorder %s31, 0
      %p203 = por %p201, %p202
      %p204 = scmp.ne.s32.totalorder %s196, %s198
      %p205 = scmp.eq.s32.totalorder %s36, 1
      %p206 = por %p204, %p205
      %p207 = scmp.ne.s32.totalorder %s198, %s199
      %p208 = scmp.eq.s32.totalorder %s36, 0
      %p209 = por %p207, %p208
      %p210 = scmp.ne.s32.totalorder %s198, %s199
      %p211 = scmp.eq.s32.totalorder %s37, 1
      %p212 = por %p210, %p211
      %p214 = scmp.ne.s32.totalorder %s199, %s213
      %p215 = scmp.eq.s32.totalorder %s37, 0
      %p216 = por %p214, %p215
      %s218 = sadd.s32 %s217, 1
      %p221 = scmp.eq.s32.totalorder %s31, 1
      %p222 = scmp.ne.s32.totalorder %s217, %s219
      %p223 = scmp.eq.s32.totalorder %s31, 0
      %p224 = por %p222, %p223
      %p225 = scmp.ne.s32.totalorder %s217, %s219
      %p226 = scmp.eq.s32.totalorder %s36, 1
      %p227 = por %p225, %p226
      %p228 = scmp.ne.s32.totalorder %s219, %s220
      %p229 = scmp.eq.s32.totalorder %s36, 0
      %p230 = por %p228, %p229
      %p231 = scmp.ne.s32.totalorder %s219, %s220
      %p232 = scmp.eq.s32.totalorder %s37, 1
      %p233 = por %p231, %p232
      %p235 = scmp.ne.s32.totalorder %s220, %s234
      %p236 = scmp.eq.s32.totalorder %s37, 0
      %p237 = por %p235, %p236
      %s239 = sadd.s32 %s238, 1
      %p242 = scmp.eq.s32.totalorder %s31, 1
      %p243 = scmp.ne.s32.totalorder %s238, %s240
      %p244 = scmp.eq.s32.totalorder %s31, 0
      %p245 = por %p243, %p244
      %p246 = scmp.ne.s32.totalorder %s238, %s240
      %p247 = scmp.eq.s32.totalorder %s36, 1
      %p248 = por %p246, %p247
      %p249 = scmp.ne.s32.totalorder %s240, %s241
      %p250 = scmp.eq.s32.totalorder %s36, 0
      %p251 = por %p249, %p250
      %p252 = scmp.ne.s32.totalorder %s240, %s241
      %p253 = scmp.eq.s32.totalorder %s37, 1
      %p254 = por %p252, %p253
      %p256 = scmp.ne.s32.totalorder %s241, %s255
      %p257 = scmp.eq.s32.totalorder %s37, 0
      %p258 = por %p256, %p257
      %s260 = sadd.s32 %s259, 1
      %p263 = scmp.eq.s32.totalorder %s31, 1
      %p264 = scmp.ne.s32.totalorder %s259, %s261
      %p265 = scmp.eq.s32.totalorder %s31, 0
      %p266 = por %p264, %p265
      %p267 = scmp.ne.s32.totalorder %s259, %s261
      %p268 = scmp.eq.s32.totalorder %s36, 1
      %p269 = por %p267, %p268
      %p270 = scmp.ne.s32.totalorder %s261, %s262
      %p271 = scmp.eq.s32.totalorder %s36, 0
      %p272 = por %p270, %p271
      %p273 = scmp.ne.s32.totalorder %s261, %s262
      %p274 = scmp.eq.s32.totalorder %s37, 1
      %p275 = por %p273, %p274
      %p277 = scmp.ne.s32.totalorder %s262, %s276
      %p278 = scmp.eq.s32.totalorder %s37, 0
      %p279 = por %p277, %p278
      %s281 = sadd.s32 %s280, 1
      %p284 = scmp.eq.s32.totalorder %s31, 1
      %p285 = scmp.ne.s32.totalorder %s280, %s282
      %p286 = scmp.eq.s32.totalorder %s31, 0
      %p287 = por %p285, %p286
      %p288 = scmp.ne.s32.totalorder %s280, %s282
      %p289 = scmp.eq.s32.totalorder %s36, 1
      %p290 = por %p288, %p289
      %p291 = scmp.ne.s32.totalorder %s282, %s283
      %p292 = scmp.eq.s32.totalorder %s36, 0
      %p293 = por %p291, %p292
      %p294 = scmp.ne.s32.totalorder %s282, %s283
      %p295 = scmp.eq.s32.totalorder %s37, 1
      %p296 = por %p294, %p295
      %p298 = scmp.ne.s32.totalorder %s283, %s297
      %p299 = scmp.eq.s32.totalorder %s37, 0
      %p300 = por %p298, %p299
      %s302 = sadd.s32 %s301, 1
      %p305 = scmp.eq.s32.totalorder %s31, 1
      %p306 = scmp.ne.s32.totalorder %s301, %s303
      %p307 = scmp.eq.s32.totalorder %s31, 0
      %p308 = por %p306, %p307
      %p309 = scmp.ne.s32.totalorder %s301, %s303
      %p310 = scmp.eq.s32.totalorder %s36, 1
      %p311 = por %p309, %p310
      %p312 = scmp.ne.s32.totalorder %s303, %s304
      %p313 = scmp.eq.s32.totalorder %s36, 0
      %p314 = por %p312, %p313
      %p315 = scmp.ne.s32.totalorder %s303, %s304
      %p316 = scmp.eq.s32.totalorder %s37, 1
      %p317 = por %p315, %p316
      %p319 = scmp.ne.s32.totalorder %s304, %s318
      %p320 = scmp.eq.s32.totalorder %s37, 0
      %p321 = por %p319, %p320
      %s323 = sadd.s32 %s322, 1
      %p326 = scmp.eq.s32.totalorder %s31, 1
      %p327 = scmp.ne.s32.totalorder %s322, %s324
      %p328 = scmp.eq.s32.totalorder %s31, 0
      %p329 = por %p327, %p328
      %p330 = scmp.ne.s32.totalorder %s322, %s324
      %p331 = scmp.eq.s32.totalorder %s36, 1
      %p332 = por %p330, %p331
      %p333 = scmp.ne.s32.totalorder %s324, %s325
      %p334 = scmp.eq.s32.totalorder %s36, 0
      %p335 = por %p333, %p334
      %p336 = scmp.ne.s32.totalorder %s324, %s325
      %p337 = scmp.eq.s32.totalorder %s37, 1
      %p338 = por %p336, %p337
      %p340 = scmp.ne.s32.totalorder %s325, %s339
      %p341 = scmp.eq.s32.totalorder %s37, 0
      %p342 = por %p340, %p341
      %s343 = ssub.s32 %s31, %s38
      %p344 = scmp.eq.s32.totalorder %s343, 0
      %s346 = sadd.s32 %s345, 1
      %s347 = scalar_select %p344, %s345, %s346
      %p350 = pneg %p344
      %p351 = scmp.eq.s32.totalorder %s31, 1
      %p352 = por %p350, %p351
      %p353 = scmp.ne.s32.totalorder %s345, %s348
      %p354 = scmp.eq.s32.totalorder %s31, 0
      %p355 = por %p353, %p354
      %p356 = scmp.ne.s32.totalorder %s345, %s348
      %p357 = scmp.eq.s32.totalorder %s36, 1
      %p358 = por %p356, %p357
      %p359 = scmp.ne.s32.totalorder %s348, %s349
      %p360 = scmp.eq.s32.totalorder %s36, 0
      %p361 = por %p359, %p360
      %p362 = scmp.ne.s32.totalorder %s348, %s349
      %p363 = scmp.eq.s32.totalorder %s37, 1
      %p364 = por %p362, %p363
      %p366 = scmp.ne.s32.totalorder %s349, %s365
      %p367 = scmp.eq.s32.totalorder %s37, 0
      %p368 = por %p366, %p367
      %s369 = ssub.s32 %s31, %s38
      %p370 = scmp.eq.s32.totalorder %s369, 0
      %s372 = sadd.s32 %s371, 1
      %s373 = scalar_select %p370, %s371, %s372
      %p376 = pneg %p370
      %p377 = scmp.eq.s32.totalorder %s31, 1
      %p378 = por %p376, %p377
      %p379 = scmp.ne.s32.totalorder %s371, %s374
      %p380 = scmp.eq.s32.totalorder %s31, 0
      %p381 = por %p379, %p380
      %p382 = scmp.ne.s32.totalorder %s371, %s374
      %p383 = scmp.eq.s32.totalorder %s36, 1
      %p384 = por %p382, %p383
      %p385 = scmp.ne.s32.totalorder %s374, %s375
      %p386 = scmp.eq.s32.totalorder %s36, 0
      %p387 = por %p385, %p386
      %p388 = scmp.ne.s32.totalorder %s374, %s375
      %p389 = scmp.eq.s32.totalorder %s37, 1
      %p390 = por %p388, %p389
      %p392 = scmp.ne.s32.totalorder %s375, %s391
      %p393 = scmp.eq.s32.totalorder %s37, 0
      %p394 = por %p392, %p393
      %s395 = ssub.s32 %s31, %s38
      %p396 = scmp.eq.s32.totalorder %s395, 0
      %s398 = sadd.s32 %s397, 1
      %s399 = scalar_select %p396, %s397, %s398
      %p402 = pneg %p396
      %p403 = scmp.eq.s32.totalorder %s31, 1
      %p404 = por %p402, %p403
      %p405 = scmp.ne.s32.totalorder %s397, %s400
      %p406 = scmp.eq.s32.totalorder %s31, 0
      %p407 = por %p405, %p406
      %p408 = scmp.ne.s32.totalorder %s397, %s400
      %p409 = scmp.eq.s32.totalorder %s36, 1
      %p410 = por %p408, %p409
      %p411 = scmp.ne.s32.totalorder %s400, %s401
      %p412 = scmp.eq.s32.totalorder %s36, 0
      %p413 = por %p411, %p412
      %p414 = scmp.ne.s32.totalorder %s400, %s401
      %p415 = scmp.eq.s32.totalorder %s37, 1
      %p416 = por %p414, %p415
      %p418 = scmp.ne.s32.totalorder %s401, %s417
      %p419 = scmp.eq.s32.totalorder %s37, 0
      %p420 = por %p418, %p419
      %p421 = scmp.le.s32.totalorder 1, %s31
      %p422 = scmp.lt.s32.totalorder %s31, 3
      %p423 = pnand %p421, %p422
      %p424 = pneg %p423
      // Predicated region
      $region9: #{forward.1} parent=5 // pred_check
        _
      $region10: #{forward.1} parent=5 // pred_check_branch
        %426 = sbr.rel (%p423) target = $region12
      $region11: #{forward.1} parent=5 // pred_region
        %s427 = ssub.s32 %s31, 1
        // Predicated region
        $region13: #{forward.1} parent=11 // pred_check
          %p428 = pneg %p104
        $region14: #{forward.1} parent=11 // pred_check_branch
          %430 = sbr.rel (%p428) target = $region16
        $region15: #{forward.1} parent=11 // pred_region
          _
        $region16: #{forward.1} parent=11 // pred_fallthru
          _
        // Predicated region
        $region17: #{forward.1} parent=11 // pred_check
          %p431 = pneg %p125
        $region18: #{forward.1} parent=11 // pred_check_branch
          %433 = sbr.rel (%p431) target = $region20
        $region19: #{forward.1} parent=11 // pred_region
          %435 = vsyncadd [#allocation3], 0
          %s437 = sshll.u32 %s3, 4
          %s438 = int_to_ptr.hbm [resolvable:$true] %s437
          %s439 = sshll.u32 [#allocation2], 4
          %s440 = int_to_ptr.vmem [resolvable:$true] %s439
          %442 = dma.hbm_to_vmem [thread:$0]  %s438, 32, %s440, [#allocation3]
        $region20: #{forward.1} parent=11 // pred_fallthru
          _
        // Predicated region
        $region21: #{forward.1} parent=11 // pred_check
          %p443 = pneg %p146
        $region22: #{forward.1} parent=11 // pred_check_branch
          %445 = sbr.rel (%p443) target = $region24
        $region23: #{forward.1} parent=11 // pred_region
          _
        $region24: #{forward.1} parent=11 // pred_fallthru
          _
        // Predicated region
        $region25: #{forward.1} parent=11 // pred_check
          %p446 = pneg %p167
        $region26: #{forward.1} parent=11 // pred_check_branch
          %448 = sbr.rel (%p446) target = $region28
        $region27: #{forward.1} parent=11 // pred_region
          %450 = vsyncadd [#allocation6], 0
          %s452 = sshll.u32 %s5, 4
          %s453 = int_to_ptr.hbm [resolvable:$true] %s452
          %s454 = sshll.u32 [#allocation5], 4
          %s455 = int_to_ptr.vmem [resolvable:$true] %s454
          %457 = dma.hbm_to_vmem [thread:$0]  %s453, 32, %s455, [#allocation6]
        $region28: #{forward.1} parent=11 // pred_fallthru
          _
        // Predicated region
        $region29: #{forward.1} parent=11 // pred_check
          %p458 = pneg %p188
        $region30: #{forward.1} parent=11 // pred_check_branch
          %460 = sbr.rel (%p458) target = $region32
        $region31: #{forward.1} parent=11 // pred_region
          _
        $region32: #{forward.1} parent=11 // pred_fallthru
          _
        // Predicated region
        $region33: #{forward.1} parent=11 // pred_check
          %p461 = pneg %p209
        $region34: #{forward.1} parent=11 // pred_check_branch
          %463 = sbr.rel (%p461) target = $region36
        $region35: #{forward.1} parent=11 // pred_region
          %465 = vsyncadd [#allocation6], 0
          %s467 = sshll.u32 %s7, 4
          %s468 = int_to_ptr.hbm [resolvable:$true] %s467
          %s469 = sshll.u32 [#allocation7], 4
          %s470 = int_to_ptr.vmem [resolvable:$true] %s469
          %472 = dma.hbm_to_vmem [thread:$0]  %s468, 32, %s470, [#allocation6]
        $region36: #{forward.1} parent=11 // pred_fallthru
          _
        // Predicated region
        $region37: #{forward.1} parent=11 // pred_check
          %p473 = pneg %p230
        $region38: #{forward.1} parent=11 // pred_check_branch
          %475 = sbr.rel (%p473) target = $region40
        $region39: #{forward.1} parent=11 // pred_region
          %477 = vsyncadd [#allocation9], 0
          %s478 = sshll.u32 %s8, 4
          %s479 = int_to_ptr.hbm [resolvable:$true] %s478
          %s480 = sshll.u32 [#allocation8], 4
          %s481 = int_to_ptr.vmem [resolvable:$true] %s480
          %486 = dma.hbm_to_vmem [thread:$0]  %s479, 2048, %s481, [#allocation9], 128, 128, 8
        $region40: #{forward.1} parent=11 // pred_fallthru
          _
        // Predicated region
        $region41: #{forward.1} parent=11 // pred_check
          %p487 = pneg %p251
        $region42: #{forward.1} parent=11 // pred_check_branch
          %489 = sbr.rel (%p487) target = $region44
        $region43: #{forward.1} parent=11 // pred_region
          %491 = vsyncadd [#allocation9], 0
          %s493 = sshll.u32 %s9, 4
          %s494 = int_to_ptr.hbm [resolvable:$true] %s493
          %s495 = sshll.u32 [#allocation10], 4
          %s496 = int_to_ptr.vmem [resolvable:$true] %s495
          %498 = dma.hbm_to_vmem [thread:$0]  %s494, 32, %s496, [#allocation9]
        $region44: #{forward.1} parent=11 // pred_fallthru
          _
        // Predicated region
        $region45: #{forward.1} parent=11 // pred_check
          %p499 = pneg %p272
        $region46: #{forward.1} parent=11 // pred_check_branch
          %501 = sbr.rel (%p499) target = $region48
        $region47: #{forward.1} parent=11 // pred_region
          _
        $region48: #{forward.1} parent=11 // pred_fallthru
          _
        // Predicated region
        $region49: #{forward.1} parent=11 // pred_check
          %p502 = pneg %p293
        $region50: #{forward.1} parent=11 // pred_check_branch
          %504 = sbr.rel (%p502) target = $region52
        $region51: #{forward.1} parent=11 // pred_region
          %506 = vsyncadd [#allocation12], 0
          %s508 = sshll.u32 %s11, 4
          %s509 = int_to_ptr.hbm [resolvable:$true] %s508
          %s510 = sshll.u32 [#allocation11], 4
          %s511 = int_to_ptr.vmem [resolvable:$true] %s510
          %513 = dma.hbm_to_vmem [thread:$0]  %s509, 32, %s511, [#allocation12]
        $region52: #{forward.1} parent=11 // pred_fallthru
          _
        // Predicated region
        $region53: #{forward.1} parent=11 // pred_check
          %p514 = pneg %p314
        $region54: #{forward.1} parent=11 // pred_check_branch
          %516 = sbr.rel (%p514) target = $region56
        $region55: #{forward.1} parent=11 // pred_region
          %518 = vsyncadd [#allocation12], 0
          %s519 = sshll.u32 %s12, 4
          %s520 = int_to_ptr.hbm [resolvable:$true] %s519
          %s521 = sshll.u32 [#allocation13], 4
          %s522 = int_to_ptr.vmem [resolvable:$true] %s521
          %527 = dma.hbm_to_vmem [thread:$0]  %s520, 4096, %s522, [#allocation12], 128, 128, 8
        $region56: #{forward.1} parent=11 // pred_fallthru
          _
        // Predicated region
        $region57: #{forward.1} parent=11 // pred_check
          %p528 = pneg %p335
        $region58: #{forward.1} parent=11 // pred_check_branch
          %530 = sbr.rel (%p528) target = $region60
        $region59: #{forward.1} parent=11 // pred_region
          %532 = vsyncadd [#allocation15], 0
          %s534 = sshll.u32 %s13, 4
          %s535 = int_to_ptr.hbm [resolvable:$true] %s534
          %s536 = sshll.u32 [#allocation14], 4
          %s537 = int_to_ptr.vmem [resolvable:$true] %s536
          %539 = dma.hbm_to_vmem [thread:$0]  %s535, 32, %s537, [#allocation15]
        $region60: #{forward.1} parent=11 // pred_fallthru
          _
      $region12: #{forward.1} parent=5 // pred_fallthru
        _
      %p540 = scmp.lt.s32.totalorder %s31, 2
      // Predicated region
      $region61: #{forward.1} parent=5 // pred_check
        %p541 = pneg %p540
      $region62: #{forward.1} parent=5 // pred_check_branch
        %543 = sbr.rel (%p541) target = $region64
      $region63: #{forward.1} parent=5 // pred_region
        // Predicated region
        $region65: #{forward.1} parent=63 // pred_check
          %p544 = pneg %p51
        $region66: #{forward.1} parent=63 // pred_check_branch
          %546 = sbr.rel (%p544) target = $region68
        $region67: #{forward.1} parent=63 // pred_region
          %s547 = smul.u32 32, %s31
          %p548 = scmp.lt.s32.totalorder %s547, 63
          %s549 = scalar_select %p548, %s547, 63
          %s550 = smul.addr %s549, 2
          %s551 = smul.addr %s550, 4
          %s552 = scalar_lea.vmem %s0, %s551
          %s553 = smul.u32 32, %s31
        $region68: #{forward.1} parent=63 // pred_fallthru
          _
        // Predicated region
        $region69: #{forward.1} parent=63 // pred_check
          %p554 = pneg %p77
        $region70: #{forward.1} parent=63 // pred_check_branch
          %556 = sbr.rel (%p554) target = $region72
        $region71: #{forward.1} parent=63 // pred_region
          %s557 = smul.u32 32, %s31
          %p558 = scmp.lt.s32.totalorder %s557, 63
          %s559 = scalar_select %p558, %s557, 63
          %s560 = smul.addr %s559, 8
          %s561 = scalar_lea.vmem %s1, %s560
          %s562 = smul.u32 32, %s31
        $region72: #{forward.1} parent=63 // pred_fallthru
          _
      $region64: #{forward.1} parent=5 // pred_fallthru
        _
      %p563 = scmp.le.s32.totalorder 1, %s31
      %p564 = scmp.lt.s32.totalorder %s31, 3
      %p565 = pnand %p563, %p564
      %p566 = pneg %p565
      // Predicated region
      $region73: #{forward.1} parent=5 // pred_check
        _
      $region74: #{forward.1} parent=5 // pred_check_branch
        %568 = sbr.rel (%p565) target = $region76
      $region75: #{forward.1} parent=5 // pred_region
        %s569 = ssub.s32 %s31, 1
        // Predicated region
        $region77: #{forward.1} parent=75 // pred_check
          %p570 = pneg %p125
        $region78: #{forward.1} parent=75 // pred_check_branch
          %572 = sbr.rel (%p570) target = $region80
        $region79: #{forward.1} parent=75 // pred_region
          %574 = dma.done [#allocation3], 32
        $region80: #{forward.1} parent=75 // pred_fallthru
          _
        // Predicated region
        $region81: #{forward.1} parent=75 // pred_check
          %p575 = pneg %p167
        $region82: #{forward.1} parent=75 // pred_check_branch
          %577 = sbr.rel (%p575) target = $region84
        $region83: #{forward.1} parent=75 // pred_region
          %579 = dma.done [#allocation6], 32
        $region84: #{forward.1} parent=75 // pred_fallthru
          _
        // Predicated region
        $region85: #{forward.1} parent=75 // pred_check
          %p580 = pneg %p209
        $region86: #{forward.1} parent=75 // pred_check_branch
          %582 = sbr.rel (%p580) target = $region88
        $region87: #{forward.1} parent=75 // pred_region
          %584 = dma.done [#allocation6], 32
        $region88: #{forward.1} parent=75 // pred_fallthru
          _
        // Predicated region
        $region89: #{forward.1} parent=75 // pred_check
          %p585 = pneg %p230
        $region90: #{forward.1} parent=75 // pred_check_branch
          %587 = sbr.rel (%p585) target = $region92
        $region91: #{forward.1} parent=75 // pred_region
          %589 = dma.done [#allocation9], 2048
        $region92: #{forward.1} parent=75 // pred_fallthru
          _
        // Predicated region
        $region93: #{forward.1} parent=75 // pred_check
          %p590 = pneg %p251
        $region94: #{forward.1} parent=75 // pred_check_branch
          %592 = sbr.rel (%p590) target = $region96
        $region95: #{forward.1} parent=75 // pred_region
          %594 = dma.done [#allocation9], 32
        $region96: #{forward.1} parent=75 // pred_fallthru
          _
        // Predicated region
        $region97: #{forward.1} parent=75 // pred_check
          %p595 = pneg %p293
        $region98: #{forward.1} parent=75 // pred_check_branch
          %597 = sbr.rel (%p595) target = $region100
        $region99: #{forward.1} parent=75 // pred_region
          %599 = dma.done [#allocation12], 32
        $region100: #{forward.1} parent=75 // pred_fallthru
          _
        // Predicated region
        $region101: #{forward.1} parent=75 // pred_check
          %p600 = pneg %p314
        $region102: #{forward.1} parent=75 // pred_check_branch
          %602 = sbr.rel (%p600) target = $region104
        $region103: #{forward.1} parent=75 // pred_region
          %604 = dma.done [#allocation12], 4096
        $region104: #{forward.1} parent=75 // pred_fallthru
          _
        // Predicated region
        $region105: #{forward.1} parent=75 // pred_check
          %p605 = pneg %p335
        $region106: #{forward.1} parent=75 // pred_check_branch
          %607 = sbr.rel (%p605) target = $region108
        $region107: #{forward.1} parent=75 // pred_region
          %609 = dma.done [#allocation15], 32
        $region108: #{forward.1} parent=75 // pred_fallthru
          _
        %s610 = smul.u32 32, %s36
        %p611 = scmp.lt.s32.totalorder %s610, 63
        %s612 = scalar_select %p611, %s610, 63
        %s613 = smul.addr %s612, 2
        %s614 = smul.addr %s613, 4
        %s615 = scalar_lea.vmem %s0, %s614
        %p616 = pneg %p57
        %p617 = pneg %p54
        %s618 = smul.u32 32, %s36
        %p619 = scmp.lt.s32.totalorder %s618, 63
        %s620 = scalar_select %p619, %s618, 63
        %s621 = smul.addr %s620, 8
        %s622 = scalar_lea.vmem %s1, %s621
        %p623 = pneg %p83
        %p624 = pneg %p80
        %p625 = pneg %p104
        %p626 = pneg %p101
        %p627 = pneg %p125
        %p628 = pneg %p122
        %p629 = pneg %p146
        %p630 = pneg %p143
        %p631 = pneg %p167
        %p632 = pneg %p164
        %p633 = pneg %p188
        %p634 = pneg %p185
        %p635 = pneg %p209
        %p636 = pneg %p206
        %p637 = pneg %p230
        %p638 = pneg %p227
        %p639 = pneg %p251
        %p640 = pneg %p248
        %p641 = pneg %p272
        %p642 = pneg %p269
        %p643 = pneg %p293
        %p644 = pneg %p290
        %p645 = pneg %p314
        %p646 = pneg %p311
        %p647 = pneg %p335
        %p648 = pneg %p332
        %p649 = pneg %p361
        %p650 = pneg %p358
        %s651 = smul.u32 32, %s36
        %p652 = scmp.lt.s32.totalorder %s651, 63
        %s653 = scalar_select %p652, %s651, 63
        %s654 = smul.addr %s653, 8
        %s655 = scalar_lea.vmem %s14, %s654
        %p656 = pneg %p387
        %p657 = pneg %p384
        %s658 = smul.u32 32, %s36
        %p659 = scmp.lt.s32.totalorder %s658, 63
        %s660 = scalar_select %p659, %s658, 63
        %s661 = smul.addr %s660, 8
        %s662 = scalar_lea.vmem %s15, %s661
        %p663 = pneg %p413
        %p664 = pneg %p410
        %s665 = sand.u32 %s400, 1
        %s666 = scalar_lea.sflag [#allocation4], %s665
        %s667 = sand.u32 %s400, 1
        %s668 = smul.addr %s667, 512
        %s669 = scalar_lea.vmem [#allocation16], %s668
        %s670 = smul.u32 32, %s36
        %p671 = scmp.lt.s32.totalorder %s670, 63
        %s672 = scalar_select %p671, %s670, 63
        %s673 = smul.addr %s672, 2
        %s674 = smul.addr %s673, 4
        %s675 = scalar_lea.vmem %s0, %s674
        %s676 = smul.u32 32, %s36
        %s677 = smul.u32 32, %s36
        %p678 = scmp.lt.s32.totalorder %s677, 63
        %s679 = scalar_select %p678, %s677, 63
        %s680 = smul.addr %s679, 8
        %s681 = scalar_lea.vmem %s1, %s680
        %s682 = smul.u32 32, %s36
        %s683 = smul.u32 32, %s36
        %p684 = scmp.lt.s32.totalorder %s683, 63
        %s685 = scalar_select %p684, %s683, 63
        %s686 = smul.addr %s685, 8
        %s687 = scalar_lea.vmem %s14, %s686
        %s688 = smul.u32 32, %s36
        %s689 = smul.u32 32, %s36
        %p690 = scmp.lt.s32.totalorder %s689, 63
        %s691 = scalar_select %p690, %s689, 63
        %s692 = smul.addr %s691, 8
        %s693 = scalar_lea.vmem %s15, %s692
        %s694 = smul.u32 32, %s36
        %s695 = smul.u32 32, %s36
        %v696 = vld [vmem:[%s675] sm:$0xff]
        %v697 = vld [vmem:[%s675 + $0x8] sm:$0xff]
        %v698 = vld [vmem:[%s675 + $0x10] sm:$0xff]
        %v699 = vld [vmem:[%s675 + $0x18] sm:$0xff]
        %v700 = vld [vmem:[%s675 + $0x20] sm:$0xff]
        %v701 = vld [vmem:[%s675 + $0x28] sm:$0xff]
        %v702 = vld [vmem:[%s675 + $0x30] sm:$0xff]
        %v703 = vld [vmem:[%s675 + $0x38] sm:$0xff]
        %v704 = vld [vmem:[%s675 + $0x40] sm:$0xff]
        %v705 = vld [vmem:[%s675 + $0x48] sm:$0xff]
        %v706 = vld [vmem:[%s675 + $0x50] sm:$0xff]
        %v707 = vld [vmem:[%s675 + $0x58] sm:$0xff]
        %v708 = vld [vmem:[%s675 + $0x60] sm:$0xff]
        %v709 = vld [vmem:[%s675 + $0x68] sm:$0xff]
        %v710 = vld [vmem:[%s675 + $0x70] sm:$0xff]
        %v711 = vld [vmem:[%s675 + $0x78] sm:$0xff]
        %v712 = vld [vmem:[%s675 + $0x80] sm:$0xff]
        %v713 = vld [vmem:[%s675 + $0x88] sm:$0xff]
        %v714 = vld [vmem:[%s675 + $0x90] sm:$0xff]
        %v715 = vld [vmem:[%s675 + $0x98] sm:$0xff]
        %v716 = vld [vmem:[%s675 + $0xa0] sm:$0xff]
        %v717 = vld [vmem:[%s675 + $0xa8] sm:$0xff]
        %v718 = vld [vmem:[%s675 + $0xb0] sm:$0xff]
        %v719 = vld [vmem:[%s675 + $0xb8] sm:$0xff]
        %v720 = vld [vmem:[%s675 + $0xc0] sm:$0xff]
        %v721 = vld [vmem:[%s675 + $0xc8] sm:$0xff]
        %v722 = vld [vmem:[%s675 + $0xd0] sm:$0xff]
        %v723 = vld [vmem:[%s675 + $0xd8] sm:$0xff]
        %v724 = vld [vmem:[%s675 + $0xe0] sm:$0xff]
        %v725 = vld [vmem:[%s675 + $0xe8] sm:$0xff]
        %v726 = vld [vmem:[%s675 + $0xf0] sm:$0xff]
        %v727 = vld [vmem:[%s675 + $0xf8] sm:$0xff]
        %v728 = vld [vmem:[%s2] sm:$0xff]
        %v729 = vld [vmem:[%s2 + $0x8] sm:$0xff]
        %v730 = vld [vmem:[%s2 + $0x10] sm:$0xff]
        %v731 = vld [vmem:[%s2 + $0x18] sm:$0xff]
        %v732 = vld [vmem:[%s2 + $0x20] sm:$0xff]
        %v733 = vld [vmem:[%s2 + $0x28] sm:$0xff]
        %v734 = vld [vmem:[%s2 + $0x30] sm:$0xff]
        %v735 = vld [vmem:[%s2 + $0x38] sm:$0xff]
        %v736 = vld [vmem:[%s2 + $0x40] sm:$0xff]
        %v737 = vld [vmem:[%s2 + $0x48] sm:$0xff]
        %v738 = vld [vmem:[%s2 + $0x50] sm:$0xff]
        %v739 = vld [vmem:[%s2 + $0x58] sm:$0xff]
        %v740 = vld [vmem:[%s2 + $0x60] sm:$0xff]
        %v741 = vld [vmem:[%s2 + $0x68] sm:$0xff]
        %v742 = vld [vmem:[%s2 + $0x70] sm:$0xff]
        %v743 = vld [vmem:[%s2 + $0x78] sm:$0xff]
        %v744 = vld [vmem:[%s2 + $0x80] sm:$0xff]
        %v745 = vld [vmem:[%s2 + $0x88] sm:$0xff]
        %v746 = vld [vmem:[%s2 + $0x90] sm:$0xff]
        %v747 = vld [vmem:[%s2 + $0x98] sm:$0xff]
        %v748 = vld [vmem:[%s2 + $0xa0] sm:$0xff]
        %v749 = vld [vmem:[%s2 + $0xa8] sm:$0xff]
        %v750 = vld [vmem:[%s2 + $0xb0] sm:$0xff]
        %v751 = vld [vmem:[%s2 + $0xb8] sm:$0xff]
        %v752 = vld [vmem:[%s2 + $0xc0] sm:$0xff]
        %v753 = vld [vmem:[%s2 + $0xc8] sm:$0xff]
        %v754 = vld [vmem:[%s2 + $0xd0] sm:$0xff]
        %v755 = vld [vmem:[%s2 + $0xd8] sm:$0xff]
        %v756 = vld [vmem:[%s2 + $0xe0] sm:$0xff]
        %v757 = vld [vmem:[%s2 + $0xe8] sm:$0xff]
        %v758 = vld [vmem:[%s2 + $0xf0] sm:$0xff]
        %v759 = vld [vmem:[%s2 + $0xf8] sm:$0xff]
        %v760 = vld [vmem:[#allocation2] sm:$0x3]
        %v762 = vperm.slane %v760, 0
        %v763 = vperm.slane %v760, 1
        %v798 = vunpack.c.l.b16 %v696
        %v799 = vunpack.c.h.b16 %v696
        %v800 = vunpack.c.l.b16 %v697
        %v801 = vunpack.c.h.b16 %v697
        %v802 = vunpack.c.l.b16 %v698
        %v803 = vunpack.c.h.b16 %v698
        %v804 = vunpack.c.l.b16 %v699
        %v805 = vunpack.c.h.b16 %v699
        %v806 = vunpack.c.l.b16 %v700
        %v807 = vunpack.c.h.b16 %v700
        %v808 = vunpack.c.l.b16 %v701
        %v809 = vunpack.c.h.b16 %v701
        %v810 = vunpack.c.l.b16 %v702
        %v811 = vunpack.c.h.b16 %v702
        %v812 = vunpack.c.l.b16 %v703
        %v813 = vunpack.c.h.b16 %v703
        %v814 = vunpack.c.l.b16 %v704
        %v815 = vunpack.c.h.b16 %v704
        %v816 = vunpack.c.l.b16 %v705
        %v817 = vunpack.c.h.b16 %v705
        %v818 = vunpack.c.l.b16 %v706
        %v819 = vunpack.c.h.b16 %v706
        %v820 = vunpack.c.l.b16 %v707
        %v821 = vunpack.c.h.b16 %v707
        %v822 = vunpack.c.l.b16 %v708
        %v823 = vunpack.c.h.b16 %v708
        %v824 = vunpack.c.l.b16 %v709
        %v825 = vunpack.c.h.b16 %v709
        %v826 = vunpack.c.l.b16 %v710
        %v827 = vunpack.c.h.b16 %v710
        %v828 = vunpack.c.l.b16 %v711
        %v829 = vunpack.c.h.b16 %v711
        %v830 = vunpack.c.l.b16 %v712
        %v831 = vunpack.c.h.b16 %v712
        %v832 = vunpack.c.l.b16 %v713
        %v833 = vunpack.c.h.b16 %v713
        %v834 = vunpack.c.l.b16 %v714
        %v835 = vunpack.c.h.b16 %v714
        %v836 = vunpack.c.l.b16 %v715
        %v837 = vunpack.c.h.b16 %v715
        %v838 = vunpack.c.l.b16 %v716
        %v839 = vunpack.c.h.b16 %v716
        %v840 = vunpack.c.l.b16 %v717
        %v841 = vunpack.c.h.b16 %v717
        %v842 = vunpack.c.l.b16 %v718
        %v843 = vunpack.c.h.b16 %v718
        %v844 = vunpack.c.l.b16 %v719
        %v845 = vunpack.c.h.b16 %v719
        %v846 = vunpack.c.l.b16 %v720
        %v847 = vunpack.c.h.b16 %v720
        %v848 = vunpack.c.l.b16 %v721
        %v849 = vunpack.c.h.b16 %v721
        %v850 = vunpack.c.l.b16 %v722
        %v851 = vunpack.c.h.b16 %v722
        %v852 = vunpack.c.l.b16 %v723
        %v853 = vunpack.c.h.b16 %v723
        %v854 = vunpack.c.l.b16 %v724
        %v855 = vunpack.c.h.b16 %v724
        %v856 = vunpack.c.l.b16 %v725
        %v857 = vunpack.c.h.b16 %v725
        %v858 = vunpack.c.l.b16 %v726
        %v859 = vunpack.c.h.b16 %v726
        %v860 = vunpack.c.l.b16 %v727
        %v861 = vunpack.c.h.b16 %v727
        %v862 = vpack.c.b16 %v800, %v798
        %v863 = vpack.c.b16 %v801, %v799
        %v864 = vpack.c.b16 %v804, %v802
        %v865 = vpack.c.b16 %v805, %v803
        %v866 = vpack.c.b16 %v808, %v806
        %v867 = vpack.c.b16 %v809, %v807
        %v868 = vpack.c.b16 %v812, %v810
        %v869 = vpack.c.b16 %v813, %v811
        %v870 = vpack.c.b16 %v816, %v814
        %v871 = vpack.c.b16 %v817, %v815
        %v872 = vpack.c.b16 %v820, %v818
        %v873 = vpack.c.b16 %v821, %v819
        %v874 = vpack.c.b16 %v824, %v822
        %v875 = vpack.c.b16 %v825, %v823
        %v876 = vpack.c.b16 %v828, %v826
        %v877 = vpack.c.b16 %v829, %v827
        %v878 = vpack.c.b16 %v832, %v830
        %v879 = vpack.c.b16 %v833, %v831
        %v880 = vpack.c.b16 %v836, %v834
        %v881 = vpack.c.b16 %v837, %v835
        %v882 = vpack.c.b16 %v840, %v838
        %v883 = vpack.c.b16 %v841, %v839
        %v884 = vpack.c.b16 %v844, %v842
        %v885 = vpack.c.b16 %v845, %v843
        %v886 = vpack.c.b16 %v848, %v846
        %v887 = vpack.c.b16 %v849, %v847
        %v888 = vpack.c.b16 %v852, %v850
        %v889 = vpack.c.b16 %v853, %v851
        %v890 = vpack.c.b16 %v856, %v854
        %v891 = vpack.c.b16 %v857, %v855
        %v892 = vpack.c.b16 %v860, %v858
        %v893 = vpack.c.b16 %v861, %v859
        %v958 = vunpack.c.l.b16 %v728
        %v959 = vunpack.c.h.b16 %v728
        %v960 = vunpack.c.l.b16 %v729
        %v961 = vunpack.c.h.b16 %v729
        %v962 = vunpack.c.l.b16 %v730
        %v963 = vunpack.c.h.b16 %v730
        %v964 = vunpack.c.l.b16 %v731
        %v965 = vunpack.c.h.b16 %v731
        %v966 = vunpack.c.l.b16 %v732
        %v967 = vunpack.c.h.b16 %v732
        %v968 = vunpack.c.l.b16 %v733
        %v969 = vunpack.c.h.b16 %v733
        %v970 = vunpack.c.l.b16 %v734
        %v971 = vunpack.c.h.b16 %v734
        %v972 = vunpack.c.l.b16 %v735
        %v973 = vunpack.c.h.b16 %v735
        %v974 = vunpack.c.l.b16 %v736
        %v975 = vunpack.c.h.b16 %v736
        %v976 = vunpack.c.l.b16 %v737
        %v977 = vunpack.c.h.b16 %v737
        %v978 = vunpack.c.l.b16 %v738
        %v979 = vunpack.c.h.b16 %v738
        %v980 = vunpack.c.l.b16 %v739
        %v981 = vunpack.c.h.b16 %v739
        %v982 = vunpack.c.l.b16 %v740
        %v983 = vunpack.c.h.b16 %v740
        %v984 = vunpack.c.l.b16 %v741
        %v985 = vunpack.c.h.b16 %v741
        %v986 = vunpack.c.l.b16 %v742
        %v987 = vunpack.c.h.b16 %v742
        %v988 = vunpack.c.l.b16 %v743
        %v989 = vunpack.c.h.b16 %v743
        %v990 = vunpack.c.l.b16 %v744
        %v991 = vunpack.c.h.b16 %v744
        %v992 = vunpack.c.l.b16 %v745
        %v993 = vunpack.c.h.b16 %v745
        %v994 = vunpack.c.l.b16 %v746
        %v995 = vunpack.c.h.b16 %v746
        %v996 = vunpack.c.l.b16 %v747
        %v997 = vunpack.c.h.b16 %v747
        %v998 = vunpack.c.l.b16 %v748
        %v999 = vunpack.c.h.b16 %v748
        %v1000 = vunpack.c.l.b16 %v749
        %v1001 = vunpack.c.h.b16 %v749
        %v1002 = vunpack.c.l.b16 %v750
        %v1003 = vunpack.c.h.b16 %v750
        %v1004 = vunpack.c.l.b16 %v751
        %v1005 = vunpack.c.h.b16 %v751
        %v1006 = vunpack.c.l.b16 %v752
        %v1007 = vunpack.c.h.b16 %v752
        %v1008 = vunpack.c.l.b16 %v753
        %v1009 = vunpack.c.h.b16 %v753
        %v1010 = vunpack.c.l.b16 %v754
        %v1011 = vunpack.c.h.b16 %v754
        %v1012 = vunpack.c.l.b16 %v755
        %v1013 = vunpack.c.h.b16 %v755
        %v1014 = vunpack.c.l.b16 %v756
        %v1015 = vunpack.c.h.b16 %v756
        %v1016 = vunpack.c.l.b16 %v757
        %v1017 = vunpack.c.h.b16 %v757
        %v1018 = vunpack.c.l.b16 %v758
        %v1019 = vunpack.c.h.b16 %v758
        %v1020 = vunpack.c.l.b16 %v759
        %v1021 = vunpack.c.h.b16 %v759
        %v1022 = vpack.c.b16 %v960, %v958
        %v1023 = vpack.c.b16 %v961, %v959
        %v1024 = vpack.c.b16 %v964, %v962
        %v1025 = vpack.c.b16 %v965, %v963
        %v1026 = vpack.c.b16 %v968, %v966
        %v1027 = vpack.c.b16 %v969, %v967
        %v1028 = vpack.c.b16 %v972, %v970
        %v1029 = vpack.c.b16 %v973, %v971
        %v1030 = vpack.c.b16 %v976, %v974
        %v1031 = vpack.c.b16 %v977, %v975
        %v1032 = vpack.c.b16 %v980, %v978
        %v1033 = vpack.c.b16 %v981, %v979
        %v1034 = vpack.c.b16 %v984, %v982
        %v1035 = vpack.c.b16 %v985, %v983
        %v1036 = vpack.c.b16 %v988, %v986
        %v1037 = vpack.c.b16 %v989, %v987
        %v1038 = vpack.c.b16 %v992, %v990
        %v1039 = vpack.c.b16 %v993, %v991
        %v1040 = vpack.c.b16 %v996, %v994
        %v1041 = vpack.c.b16 %v997, %v995
        %v1042 = vpack.c.b16 %v1000, %v998
        %v1043 = vpack.c.b16 %v1001, %v999
        %v1044 = vpack.c.b16 %v1004, %v1002
        %v1045 = vpack.c.b16 %v1005, %v1003
        %v1046 = vpack.c.b16 %v1008, %v1006
        %v1047 = vpack.c.b16 %v1009, %v1007
        %v1048 = vpack.c.b16 %v1012, %v1010
        %v1049 = vpack.c.b16 %v1013, %v1011
        %v1050 = vpack.c.b16 %v1016, %v1014
        %v1051 = vpack.c.b16 %v1017, %v1015
        %v1052 = vpack.c.b16 %v1020, %v1018
        %v1053 = vpack.c.b16 %v1021, %v1019
        %1086 = vmatpush.bf16.msra.mxu0 %v1036
        %1087 = vmatpush.bf16.msra.mxu0 %v1034
        %1088 = vmatpush.bf16.msra.mxu0 %v1032
        %1089 = vmatpush.bf16.msra.mxu0 %v1030
        %1090 = vmatpush.bf16.msra.mxu0 %v1028
        %1091 = vmatpush.bf16.msra.mxu0 %v1026
        %1092 = vmatpush.bf16.msra.mxu0 %v1024
        %1093 = vmatpush.bf16.msra.mxu0 %v1022
        %1094 = vmatmul.bf16.gmra.mxu0 %v862
        %v1095 = vpop.f32.mrf.mxu0
        %v1096 = vadd.f32 %v762, %v1095
        %v1097 = vpop.f32.mrf.mxu0
        %v1098 = vadd.f32 %v762, %v1097
        %1099 = vmatmul.bf16.gmra.mxu0 %v864
        %v1100 = vpop.f32.mrf.mxu0
        %v1101 = vadd.f32 %v762, %v1100
        %v1102 = vpop.f32.mrf.mxu0
        %v1103 = vadd.f32 %v762, %v1102
        %1104 = vmatmul.bf16.gmra.mxu0 %v866
        %v1105 = vpop.f32.mrf.mxu0
        %v1106 = vadd.f32 %v762, %v1105
        %v1107 = vpop.f32.mrf.mxu0
        %v1108 = vadd.f32 %v762, %v1107
        %1109 = vmatmul.bf16.gmra.mxu0 %v868
        %v1110 = vpop.f32.mrf.mxu0
        %v1111 = vadd.f32 %v762, %v1110
        %v1112 = vpop.f32.mrf.mxu0
        %v1113 = vadd.f32 %v762, %v1112
        %1114 = vmatmul.bf16.gmra.mxu0 %v870
        %v1115 = vpop.f32.mrf.mxu0
        %v1116 = vadd.f32 %v762, %v1115
        %v1117 = vpop.f32.mrf.mxu0
        %v1118 = vadd.f32 %v762, %v1117
        %1119 = vmatmul.bf16.gmra.mxu0 %v872
        %v1120 = vpop.f32.mrf.mxu0
        %v1121 = vadd.f32 %v762, %v1120
        %v1122 = vpop.f32.mrf.mxu0
        %v1123 = vadd.f32 %v762, %v1122
        %1124 = vmatmul.bf16.gmra.mxu0 %v874
        %v1125 = vpop.f32.mrf.mxu0
        %v1126 = vadd.f32 %v762, %v1125
        %v1127 = vpop.f32.mrf.mxu0
        %v1128 = vadd.f32 %v762, %v1127
        %1129 = vmatmul.bf16.gmra.mxu0 %v876
        %v1130 = vpop.f32.mrf.mxu0
        %v1131 = vadd.f32 %v762, %v1130
        %v1132 = vpop.f32.mrf.mxu0
        %v1133 = vadd.f32 %v762, %v1132
        %1134 = vmatmul.bf16.gmra.mxu0 %v878
        %v1135 = vpop.f32.mrf.mxu0
        %v1136 = vadd.f32 %v762, %v1135
        %v1137 = vpop.f32.mrf.mxu0
        %v1138 = vadd.f32 %v762, %v1137
        %1139 = vmatmul.bf16.gmra.mxu0 %v880
        %v1140 = vpop.f32.mrf.mxu0
        %v1141 = vadd.f32 %v762, %v1140
        %v1142 = vpop.f32.mrf.mxu0
        %v1143 = vadd.f32 %v762, %v1142
        %1144 = vmatmul.bf16.gmra.mxu0 %v882
        %v1145 = vpop.f32.mrf.mxu0
        %v1146 = vadd.f32 %v762, %v1145
        %v1147 = vpop.f32.mrf.mxu0
        %v1148 = vadd.f32 %v762, %v1147
        %1149 = vmatmul.bf16.gmra.mxu0 %v884
        %v1150 = vpop.f32.mrf.mxu0
        %v1151 = vadd.f32 %v762, %v1150
        %v1152 = vpop.f32.mrf.mxu0
        %v1153 = vadd.f32 %v762, %v1152
        %1154 = vmatmul.bf16.gmra.mxu0 %v886
        %v1155 = vpop.f32.mrf.mxu0
        %v1156 = vadd.f32 %v762, %v1155
        %v1157 = vpop.f32.mrf.mxu0
        %v1158 = vadd.f32 %v762, %v1157
        %1159 = vmatmul.bf16.gmra.mxu0 %v888
        %v1160 = vpop.f32.mrf.mxu0
        %v1161 = vadd.f32 %v762, %v1160
        %v1162 = vpop.f32.mrf.mxu0
        %v1163 = vadd.f32 %v762, %v1162
        %1164 = vmatmul.bf16.gmra.mxu0 %v890
        %v1165 = vpop.f32.mrf.mxu0
        %v1166 = vadd.f32 %v762, %v1165
        %v1167 = vpop.f32.mrf.mxu0
        %v1168 = vadd.f32 %v762, %v1167
        %1169 = vmatmul.bf16.gmra.mxu0 %v892
        %v1170 = vpop.f32.mrf.mxu0
        %v1171 = vadd.f32 %v762, %v1170
        %v1172 = vpop.f32.mrf.mxu0
        %v1173 = vadd.f32 %v762, %v1172
        %1174 = vdwg.mxu0
        %1175 = vmatpush.bf16.msra.mxu0 %v1052
        %1176 = vmatpush.bf16.msra.mxu0 %v1050
        %1177 = vmatpush.bf16.msra.mxu0 %v1048
        %1178 = vmatpush.bf16.msra.mxu0 %v1046
        %1179 = vmatpush.bf16.msra.mxu0 %v1044
        %1180 = vmatpush.bf16.msra.mxu0 %v1042
        %1181 = vmatpush.bf16.msra.mxu0 %v1040
        %1182 = vmatpush.bf16.msra.mxu0 %v1038
        %1183 = vmatmul.bf16.gmra.mxu0 %v863
        %v1184 = vpop.f32.mrf.mxu0
        %v1185 = vadd.f32 %v1096, %v1184
        %v1186 = vpop.f32.mrf.mxu0
        %v1187 = vadd.f32 %v1098, %v1186
        %1188 = vmatmul.bf16.gmra.mxu0 %v865
        %v1189 = vpop.f32.mrf.mxu0
        %v1190 = vadd.f32 %v1101, %v1189
        %v1191 = vpop.f32.mrf.mxu0
        %v1192 = vadd.f32 %v1103, %v1191
        %1193 = vmatmul.bf16.gmra.mxu0 %v867
        %v1194 = vpop.f32.mrf.mxu0
        %v1195 = vadd.f32 %v1106, %v1194
        %v1196 = vpop.f32.mrf.mxu0
        %v1197 = vadd.f32 %v1108, %v1196
        %1198 = vmatmul.bf16.gmra.mxu0 %v869
        %v1199 = vpop.f32.mrf.mxu0
        %v1200 = vadd.f32 %v1111, %v1199
        %v1201 = vpop.f32.mrf.mxu0
        %v1202 = vadd.f32 %v1113, %v1201
        %1203 = vmatmul.bf16.gmra.mxu0 %v871
        %v1204 = vpop.f32.mrf.mxu0
        %v1205 = vadd.f32 %v1116, %v1204
        %v1206 = vpop.f32.mrf.mxu0
        %v1207 = vadd.f32 %v1118, %v1206
        %1208 = vmatmul.bf16.gmra.mxu0 %v873
        %v1209 = vpop.f32.mrf.mxu0
        %v1210 = vadd.f32 %v1121, %v1209
        %v1211 = vpop.f32.mrf.mxu0
        %v1212 = vadd.f32 %v1123, %v1211
        %1213 = vmatmul.bf16.gmra.mxu0 %v875
        %v1214 = vpop.f32.mrf.mxu0
        %v1215 = vadd.f32 %v1126, %v1214
        %v1216 = vpop.f32.mrf.mxu0
        %v1217 = vadd.f32 %v1128, %v1216
        %1218 = vmatmul.bf16.gmra.mxu0 %v877
        %v1219 = vpop.f32.mrf.mxu0
        %v1220 = vadd.f32 %v1131, %v1219
        %v1221 = vpop.f32.mrf.mxu0
        %v1222 = vadd.f32 %v1133, %v1221
        %1223 = vmatmul.bf16.gmra.mxu0 %v879
        %v1224 = vpop.f32.mrf.mxu0
        %v1225 = vadd.f32 %v1136, %v1224
        %v1226 = vpop.f32.mrf.mxu0
        %v1227 = vadd.f32 %v1138, %v1226
        %1228 = vmatmul.bf16.gmra.mxu0 %v881
        %v1229 = vpop.f32.mrf.mxu0
        %v1230 = vadd.f32 %v1141, %v1229
        %v1231 = vpop.f32.mrf.mxu0
        %v1232 = vadd.f32 %v1143, %v1231
        %1233 = vmatmul.bf16.gmra.mxu0 %v883
        %v1234 = vpop.f32.mrf.mxu0
        %v1235 = vadd.f32 %v1146, %v1234
        %v1236 = vpop.f32.mrf.mxu0
        %v1237 = vadd.f32 %v1148, %v1236
        %1238 = vmatmul.bf16.gmra.mxu0 %v885
        %v1239 = vpop.f32.mrf.mxu0
        %v1240 = vadd.f32 %v1151, %v1239
        %v1241 = vpop.f32.mrf.mxu0
        %v1242 = vadd.f32 %v1153, %v1241
        %1243 = vmatmul.bf16.gmra.mxu0 %v887
        %v1244 = vpop.f32.mrf.mxu0
        %v1245 = vadd.f32 %v1156, %v1244
        %v1246 = vpop.f32.mrf.mxu0
        %v1247 = vadd.f32 %v1158, %v1246
        %1248 = vmatmul.bf16.gmra.mxu0 %v889
        %v1249 = vpop.f32.mrf.mxu0
        %v1250 = vadd.f32 %v1161, %v1249
        %v1251 = vpop.f32.mrf.mxu0
        %v1252 = vadd.f32 %v1163, %v1251
        %1253 = vmatmul.bf16.gmra.mxu0 %v891
        %v1254 = vpop.f32.mrf.mxu0
        %v1255 = vadd.f32 %v1166, %v1254
        %v1256 = vpop.f32.mrf.mxu0
        %v1257 = vadd.f32 %v1168, %v1256
        %1258 = vmatmul.bf16.gmra.mxu0 %v893
        %v1259 = vpop.f32.mrf.mxu0
        %v1260 = vadd.f32 %v1171, %v1259
        %v1261 = vpop.f32.mrf.mxu0
        %v1262 = vadd.f32 %v1173, %v1261
        %1263 = vdwg.mxu0
        %1264 = vmatpush.bf16.msra.mxu0 %v1037
        %1265 = vmatpush.bf16.msra.mxu0 %v1035
        %1266 = vmatpush.bf16.msra.mxu0 %v1033
        %1267 = vmatpush.bf16.msra.mxu0 %v1031
        %1268 = vmatpush.bf16.msra.mxu0 %v1029
        %1269 = vmatpush.bf16.msra.mxu0 %v1027
        %1270 = vmatpush.bf16.msra.mxu0 %v1025
        %1271 = vmatpush.bf16.msra.mxu0 %v1023
        %1272 = vmatmul.bf16.gmra.mxu0 %v862
        %v1273 = vpop.f32.mrf.mxu0
        %v1274 = vadd.f32 %v763, %v1273
        %v1275 = vpop.f32.mrf.mxu0
        %v1276 = vadd.f32 %v763, %v1275
        %1277 = vmatmul.bf16.gmra.mxu0 %v864
        %v1278 = vpop.f32.mrf.mxu0
        %v1279 = vadd.f32 %v763, %v1278
        %v1280 = vpop.f32.mrf.mxu0
        %v1281 = vadd.f32 %v763, %v1280
        %1282 = vmatmul.bf16.gmra.mxu0 %v866
        %v1283 = vpop.f32.mrf.mxu0
        %v1284 = vadd.f32 %v763, %v1283
        %v1285 = vpop.f32.mrf.mxu0
        %v1286 = vadd.f32 %v763, %v1285
        %1287 = vmatmul.bf16.gmra.mxu0 %v868
        %v1288 = vpop.f32.mrf.mxu0
        %v1289 = vadd.f32 %v763, %v1288
        %v1290 = vpop.f32.mrf.mxu0
        %v1291 = vadd.f32 %v763, %v1290
        %1292 = vmatmul.bf16.gmra.mxu0 %v870
        %v1293 = vpop.f32.mrf.mxu0
        %v1294 = vadd.f32 %v763, %v1293
        %v1295 = vpop.f32.mrf.mxu0
        %v1296 = vadd.f32 %v763, %v1295
        %1297 = vmatmul.bf16.gmra.mxu0 %v872
        %v1298 = vpop.f32.mrf.mxu0
        %v1299 = vadd.f32 %v763, %v1298
        %v1300 = vpop.f32.mrf.mxu0
        %v1301 = vadd.f32 %v763, %v1300
        %1302 = vmatmul.bf16.gmra.mxu0 %v874
        %v1303 = vpop.f32.mrf.mxu0
        %v1304 = vadd.f32 %v763, %v1303
        %v1305 = vpop.f32.mrf.mxu0
        %v1306 = vadd.f32 %v763, %v1305
        %1307 = vmatmul.bf16.gmra.mxu0 %v876
        %v1308 = vpop.f32.mrf.mxu0
        %v1309 = vadd.f32 %v763, %v1308
        %v1310 = vpop.f32.mrf.mxu0
        %v1311 = vadd.f32 %v763, %v1310
        %1312 = vmatmul.bf16.gmra.mxu0 %v878
        %v1313 = vpop.f32.mrf.mxu0
        %v1314 = vadd.f32 %v763, %v1313
        %v1315 = vpop.f32.mrf.mxu0
        %v1316 = vadd.f32 %v763, %v1315
        %1317 = vmatmul.bf16.gmra.mxu0 %v880
        %v1318 = vpop.f32.mrf.mxu0
        %v1319 = vadd.f32 %v763, %v1318
        %v1320 = vpop.f32.mrf.mxu0
        %v1321 = vadd.f32 %v763, %v1320
        %1322 = vmatmul.bf16.gmra.mxu0 %v882
        %v1323 = vpop.f32.mrf.mxu0
        %v1324 = vadd.f32 %v763, %v1323
        %v1325 = vpop.f32.mrf.mxu0
        %v1326 = vadd.f32 %v763, %v1325
        %1327 = vmatmul.bf16.gmra.mxu0 %v884
        %v1328 = vpop.f32.mrf.mxu0
        %v1329 = vadd.f32 %v763, %v1328
        %v1330 = vpop.f32.mrf.mxu0
        %v1331 = vadd.f32 %v763, %v1330
        %1332 = vmatmul.bf16.gmra.mxu0 %v886
        %v1333 = vpop.f32.mrf.mxu0
        %v1334 = vadd.f32 %v763, %v1333
        %v1335 = vpop.f32.mrf.mxu0
        %v1336 = vadd.f32 %v763, %v1335
        %1337 = vmatmul.bf16.gmra.mxu0 %v888
        %v1338 = vpop.f32.mrf.mxu0
        %v1339 = vadd.f32 %v763, %v1338
        %v1340 = vpop.f32.mrf.mxu0
        %v1341 = vadd.f32 %v763, %v1340
        %1342 = vmatmul.bf16.gmra.mxu0 %v890
        %v1343 = vpop.f32.mrf.mxu0
        %v1344 = vadd.f32 %v763, %v1343
        %v1345 = vpop.f32.mrf.mxu0
        %v1346 = vadd.f32 %v763, %v1345
        %1347 = vmatmul.bf16.gmra.mxu0 %v892
        %v1348 = vpop.f32.mrf.mxu0
        %v1349 = vadd.f32 %v763, %v1348
        %v1350 = vpop.f32.mrf.mxu0
        %v1351 = vadd.f32 %v763, %v1350
        %1352 = vdwg.mxu0
        %1353 = vmatpush.bf16.msra.mxu0 %v1053
        %1354 = vmatpush.bf16.msra.mxu0 %v1051
        %1355 = vmatpush.bf16.msra.mxu0 %v1049
        %1356 = vmatpush.bf16.msra.mxu0 %v1047
        %1357 = vmatpush.bf16.msra.mxu0 %v1045
        %1358 = vmatpush.bf16.msra.mxu0 %v1043
        %1359 = vmatpush.bf16.msra.mxu0 %v1041
        %1360 = vmatpush.bf16.msra.mxu0 %v1039
        %1361 = vmatmul.bf16.gmra.mxu0 %v863
        %v1362 = vpop.f32.mrf.mxu0
        %v1363 = vadd.f32 %v1274, %v1362
        %v1364 = vpop.f32.mrf.mxu0
        %v1365 = vadd.f32 %v1276, %v1364
        %1366 = vmatmul.bf16.gmra.mxu0 %v865
        %v1367 = vpop.f32.mrf.mxu0
        %v1368 = vadd.f32 %v1279, %v1367
        %v1369 = vpop.f32.mrf.mxu0
        %v1370 = vadd.f32 %v1281, %v1369
        %1371 = vmatmul.bf16.gmra.mxu0 %v867
        %v1372 = vpop.f32.mrf.mxu0
        %v1373 = vadd.f32 %v1284, %v1372
        %v1374 = vpop.f32.mrf.mxu0
        %v1375 = vadd.f32 %v1286, %v1374
        %1376 = vmatmul.bf16.gmra.mxu0 %v869
        %v1377 = vpop.f32.mrf.mxu0
        %v1378 = vadd.f32 %v1289, %v1377
        %v1379 = vpop.f32.mrf.mxu0
        %v1380 = vadd.f32 %v1291, %v1379
        %1381 = vmatmul.bf16.gmra.mxu0 %v871
        %v1382 = vpop.f32.mrf.mxu0
        %v1383 = vadd.f32 %v1294, %v1382
        %v1384 = vpop.f32.mrf.mxu0
        %v1385 = vadd.f32 %v1296, %v1384
        %1386 = vmatmul.bf16.gmra.mxu0 %v873
        %v1387 = vpop.f32.mrf.mxu0
        %v1388 = vadd.f32 %v1299, %v1387
        %v1389 = vpop.f32.mrf.mxu0
        %v1390 = vadd.f32 %v1301, %v1389
        %1391 = vmatmul.bf16.gmra.mxu0 %v875
        %v1392 = vpop.f32.mrf.mxu0
        %v1393 = vadd.f32 %v1304, %v1392
        %v1394 = vpop.f32.mrf.mxu0
        %v1395 = vadd.f32 %v1306, %v1394
        %1396 = vmatmul.bf16.gmra.mxu0 %v877
        %v1397 = vpop.f32.mrf.mxu0
        %v1398 = vadd.f32 %v1309, %v1397
        %v1399 = vpop.f32.mrf.mxu0
        %v1400 = vadd.f32 %v1311, %v1399
        %1401 = vmatmul.bf16.gmra.mxu0 %v879
        %v1402 = vpop.f32.mrf.mxu0
        %v1403 = vadd.f32 %v1314, %v1402
        %v1404 = vpop.f32.mrf.mxu0
        %v1405 = vadd.f32 %v1316, %v1404
        %1406 = vmatmul.bf16.gmra.mxu0 %v881
        %v1407 = vpop.f32.mrf.mxu0
        %v1408 = vadd.f32 %v1319, %v1407
        %v1409 = vpop.f32.mrf.mxu0
        %v1410 = vadd.f32 %v1321, %v1409
        %1411 = vmatmul.bf16.gmra.mxu0 %v883
        %v1412 = vpop.f32.mrf.mxu0
        %v1413 = vadd.f32 %v1324, %v1412
        %v1414 = vpop.f32.mrf.mxu0
        %v1415 = vadd.f32 %v1326, %v1414
        %1416 = vmatmul.bf16.gmra.mxu0 %v885
        %v1417 = vpop.f32.mrf.mxu0
        %v1418 = vadd.f32 %v1329, %v1417
        %v1419 = vpop.f32.mrf.mxu0
        %v1420 = vadd.f32 %v1331, %v1419
        %1421 = vmatmul.bf16.gmra.mxu0 %v887
        %v1422 = vpop.f32.mrf.mxu0
        %v1423 = vadd.f32 %v1334, %v1422
        %v1424 = vpop.f32.mrf.mxu0
        %v1425 = vadd.f32 %v1336, %v1424
        %1426 = vmatmul.bf16.gmra.mxu0 %v889
        %v1427 = vpop.f32.mrf.mxu0
        %v1428 = vadd.f32 %v1339, %v1427
        %v1429 = vpop.f32.mrf.mxu0
        %v1430 = vadd.f32 %v1341, %v1429
        %1431 = vmatmul.bf16.gmra.mxu0 %v891
        %v1432 = vpop.f32.mrf.mxu0
        %v1433 = vadd.f32 %v1344, %v1432
        %v1434 = vpop.f32.mrf.mxu0
        %v1435 = vadd.f32 %v1346, %v1434
        %1436 = vmatmul.bf16.gmra.mxu0 %v893
        %v1437 = vpop.f32.mrf.mxu0
        %v1438 = vadd.f32 %v1349, %v1437
        %v1439 = vpop.f32.mrf.mxu0
        %v1440 = vadd.f32 %v1351, %v1439
        %1441 = vdwg.mxu0
        %v1442 = vtanh.pop %v1185
        %v1443 = vtanh.pop %v1363
        %v1444 = vtanh.pop %v1187
        %v1445 = vtanh.pop %v1365
        %v1446 = vtanh.pop %v1190
        %v1447 = vtanh.pop %v1368
        %v1448 = vtanh.pop %v1192
        %v1449 = vtanh.pop %v1370
        %v1450 = vtanh.pop %v1195
        %v1451 = vtanh.pop %v1373
        %v1452 = vtanh.pop %v1197
        %v1453 = vtanh.pop %v1375
        %v1454 = vtanh.pop %v1200
        %v1455 = vtanh.pop %v1378
        %v1456 = vtanh.pop %v1202
        %v1457 = vtanh.pop %v1380
        %v1458 = vtanh.pop %v1205
        %v1459 = vtanh.pop %v1383
        %v1460 = vtanh.pop %v1207
        %v1461 = vtanh.pop %v1385
        %v1462 = vtanh.pop %v1210
        %v1463 = vtanh.pop %v1388
        %v1464 = vtanh.pop %v1212
        %v1465 = vtanh.pop %v1390
        %v1466 = vtanh.pop %v1215
        %v1467 = vtanh.pop %v1393
        %v1468 = vtanh.pop %v1217
        %v1469 = vtanh.pop %v1395
        %v1470 = vtanh.pop %v1220
        %v1471 = vtanh.pop %v1398
        %v1472 = vtanh.pop %v1222
        %v1473 = vtanh.pop %v1400
        %v1474 = vtanh.pop %v1225
        %v1475 = vtanh.pop %v1403
        %v1476 = vtanh.pop %v1227
        %v1477 = vtanh.pop %v1405
        %v1478 = vtanh.pop %v1230
        %v1479 = vtanh.pop %v1408
        %v1480 = vtanh.pop %v1232
        %v1481 = vtanh.pop %v1410
        %v1482 = vtanh.pop %v1235
        %v1483 = vtanh.pop %v1413
        %v1484 = vtanh.pop %v1237
        %v1485 = vtanh.pop %v1415
        %v1486 = vtanh.pop %v1240
        %v1487 = vtanh.pop %v1418
        %v1488 = vtanh.pop %v1242
        %v1489 = vtanh.pop %v1420
        %v1490 = vtanh.pop %v1245
        %v1491 = vtanh.pop %v1423
        %v1492 = vtanh.pop %v1247
        %v1493 = vtanh.pop %v1425
        %v1494 = vtanh.pop %v1250
        %v1495 = vtanh.pop %v1428
        %v1496 = vtanh.pop %v1252
        %v1497 = vtanh.pop %v1430
        %v1498 = vtanh.pop %v1255
        %v1499 = vtanh.pop %v1433
        %v1500 = vtanh.pop %v1257
        %v1501 = vtanh.pop %v1435
        %v1502 = vtanh.pop %v1260
        %v1503 = vtanh.pop %v1438
        %v1504 = vtanh.pop %v1262
        %v1505 = vtanh.pop %v1440
        %v1506 = vpack.c.bf16 %v1444, %v1442
        %v1507 = vpack.c.bf16 %v1445, %v1443
        %v1508 = vpack.c.bf16 %v1448, %v1446
        %v1509 = vpack.c.bf16 %v1449, %v1447
        %v1510 = vpack.c.bf16 %v1452, %v1450
        %v1511 = vpack.c.bf16 %v1453, %v1451
        %v1512 = vpack.c.bf16 %v1456, %v1454
        %v1513 = vpack.c.bf16 %v1457, %v1455
        %v1514 = vpack.c.bf16 %v1460, %v1458
        %v1515 = vpack.c.bf16 %v1461, %v1459
        %v1516 = vpack.c.bf16 %v1464, %v1462
        %v1517 = vpack.c.bf16 %v1465, %v1463
        %v1518 = vpack.c.bf16 %v1468, %v1466
        %v1519 = vpack.c.bf16 %v1469, %v1467
        %v1520 = vpack.c.bf16 %v1472, %v1470
        %v1521 = vpack.c.bf16 %v1473, %v1471
        %v1522 = vpack.c.bf16 %v1476, %v1474
        %v1523 = vpack.c.bf16 %v1477, %v1475
        %v1524 = vpack.c.bf16 %v1480, %v1478
        %v1525 = vpack.c.bf16 %v1481, %v1479
        %v1526 = vpack.c.bf16 %v1484, %v1482
        %v1527 = vpack.c.bf16 %v1485, %v1483
        %v1528 = vpack.c.bf16 %v1488, %v1486
        %v1529 = vpack.c.bf16 %v1489, %v1487
        %v1530 = vpack.c.bf16 %v1492, %v1490
        %v1531 = vpack.c.bf16 %v1493, %v1491
        %v1532 = vpack.c.bf16 %v1496, %v1494
        %v1533 = vpack.c.bf16 %v1497, %v1495
        %v1534 = vpack.c.bf16 %v1500, %v1498
        %v1535 = vpack.c.bf16 %v1501, %v1499
        %v1536 = vpack.c.bf16 %v1504, %v1502
        %v1537 = vpack.c.bf16 %v1505, %v1503
        %v1538 = vld [vmem:[%s4] sm:$0xff]
        %v1539 = vld [vmem:[%s4 + $0x8] sm:$0xff]
        %v1540 = vld [vmem:[%s4 + $0x10] sm:$0xff]
        %v1541 = vld [vmem:[%s4 + $0x18] sm:$0xff]
        %v1542 = vld [vmem:[%s4 + $0x20] sm:$0xff]
        %v1543 = vld [vmem:[%s4 + $0x28] sm:$0xff]
        %v1544 = vld [vmem:[%s4 + $0x30] sm:$0xff]
        %v1545 = vld [vmem:[%s4 + $0x38] sm:$0xff]
        %v1546 = vld [vmem:[%s4 + $0x40] sm:$0xff]
        %v1547 = vld [vmem:[%s4 + $0x48] sm:$0xff]
        %v1548 = vld [vmem:[%s4 + $0x50] sm:$0xff]
        %v1549 = vld [vmem:[%s4 + $0x58] sm:$0xff]
        %v1550 = vld [vmem:[%s4 + $0x60] sm:$0xff]
        %v1551 = vld [vmem:[%s4 + $0x68] sm:$0xff]
        %v1552 = vld [vmem:[%s4 + $0x70] sm:$0xff]
        %v1553 = vld [vmem:[%s4 + $0x78] sm:$0xff]
        %v1554 = vld [vmem:[%s4 + $0x80] sm:$0xff]
        %v1555 = vld [vmem:[%s4 + $0x88] sm:$0xff]
        %v1556 = vld [vmem:[%s4 + $0x90] sm:$0xff]
        %v1557 = vld [vmem:[%s4 + $0x98] sm:$0xff]
        %v1558 = vld [vmem:[%s4 + $0xa0] sm:$0xff]
        %v1559 = vld [vmem:[%s4 + $0xa8] sm:$0xff]
        %v1560 = vld [vmem:[%s4 + $0xb0] sm:$0xff]
        %v1561 = vld [vmem:[%s4 + $0xb8] sm:$0xff]
        %v1562 = vld [vmem:[%s4 + $0xc0] sm:$0xff]
        %v1563 = vld [vmem:[%s4 + $0xc8] sm:$0xff]
        %v1564 = vld [vmem:[%s4 + $0xd0] sm:$0xff]
        %v1565 = vld [vmem:[%s4 + $0xd8] sm:$0xff]
        %v1566 = vld [vmem:[%s4 + $0xe0] sm:$0xff]
        %v1567 = vld [vmem:[%s4 + $0xe8] sm:$0xff]
        %v1568 = vld [vmem:[%s4 + $0xf0] sm:$0xff]
        %v1569 = vld [vmem:[%s4 + $0xf8] sm:$0xff]
        %v1570 = vld [vmem:[#allocation5] sm:$0x3]
        %v1572 = vperm.slane %v1570, 0
        %v1573 = vperm.slane %v1570, 1
        %v1608 = vunpack.c.l.b16 %v1538
        %v1609 = vunpack.c.h.b16 %v1538
        %v1610 = vunpack.c.l.b16 %v1539
        %v1611 = vunpack.c.h.b16 %v1539
        %v1612 = vunpack.c.l.b16 %v1540
        %v1613 = vunpack.c.h.b16 %v1540
        %v1614 = vunpack.c.l.b16 %v1541
        %v1615 = vunpack.c.h.b16 %v1541
        %v1616 = vunpack.c.l.b16 %v1542
        %v1617 = vunpack.c.h.b16 %v1542
        %v1618 = vunpack.c.l.b16 %v1543
        %v1619 = vunpack.c.h.b16 %v1543
        %v1620 = vunpack.c.l.b16 %v1544
        %v1621 = vunpack.c.h.b16 %v1544
        %v1622 = vunpack.c.l.b16 %v1545
        %v1623 = vunpack.c.h.b16 %v1545
        %v1624 = vunpack.c.l.b16 %v1546
        %v1625 = vunpack.c.h.b16 %v1546
        %v1626 = vunpack.c.l.b16 %v1547
        %v1627 = vunpack.c.h.b16 %v1547
        %v1628 = vunpack.c.l.b16 %v1548
        %v1629 = vunpack.c.h.b16 %v1548
        %v1630 = vunpack.c.l.b16 %v1549
        %v1631 = vunpack.c.h.b16 %v1549
        %v1632 = vunpack.c.l.b16 %v1550
        %v1633 = vunpack.c.h.b16 %v1550
        %v1634 = vunpack.c.l.b16 %v1551
        %v1635 = vunpack.c.h.b16 %v1551
        %v1636 = vunpack.c.l.b16 %v1552
        %v1637 = vunpack.c.h.b16 %v1552
        %v1638 = vunpack.c.l.b16 %v1553
        %v1639 = vunpack.c.h.b16 %v1553
        %v1640 = vunpack.c.l.b16 %v1554
        %v1641 = vunpack.c.h.b16 %v1554
        %v1642 = vunpack.c.l.b16 %v1555
        %v1643 = vunpack.c.h.b16 %v1555
        %v1644 = vunpack.c.l.b16 %v1556
        %v1645 = vunpack.c.h.b16 %v1556
        %v1646 = vunpack.c.l.b16 %v1557
        %v1647 = vunpack.c.h.b16 %v1557
        %v1648 = vunpack.c.l.b16 %v1558
        %v1649 = vunpack.c.h.b16 %v1558
        %v1650 = vunpack.c.l.b16 %v1559
        %v1651 = vunpack.c.h.b16 %v1559
        %v1652 = vunpack.c.l.b16 %v1560
        %v1653 = vunpack.c.h.b16 %v1560
        %v1654 = vunpack.c.l.b16 %v1561
        %v1655 = vunpack.c.h.b16 %v1561
        %v1656 = vunpack.c.l.b16 %v1562
        %v1657 = vunpack.c.h.b16 %v1562
        %v1658 = vunpack.c.l.b16 %v1563
        %v1659 = vunpack.c.h.b16 %v1563
        %v1660 = vunpack.c.l.b16 %v1564
        %v1661 = vunpack.c.h.b16 %v1564
        %v1662 = vunpack.c.l.b16 %v1565
        %v1663 = vunpack.c.h.b16 %v1565
        %v1664 = vunpack.c.l.b16 %v1566
        %v1665 = vunpack.c.h.b16 %v1566
        %v1666 = vunpack.c.l.b16 %v1567
        %v1667 = vunpack.c.h.b16 %v1567
        %v1668 = vunpack.c.l.b16 %v1568
        %v1669 = vunpack.c.h.b16 %v1568
        %v1670 = vunpack.c.l.b16 %v1569
        %v1671 = vunpack.c.h.b16 %v1569
        %v1672 = vpack.c.b16 %v1610, %v1608
        %v1673 = vpack.c.b16 %v1611, %v1609
        %v1674 = vpack.c.b16 %v1614, %v1612
        %v1675 = vpack.c.b16 %v1615, %v1613
        %v1676 = vpack.c.b16 %v1618, %v1616
        %v1677 = vpack.c.b16 %v1619, %v1617
        %v1678 = vpack.c.b16 %v1622, %v1620
        %v1679 = vpack.c.b16 %v1623, %v1621
        %v1680 = vpack.c.b16 %v1626, %v1624
        %v1681 = vpack.c.b16 %v1627, %v1625
        %v1682 = vpack.c.b16 %v1630, %v1628
        %v1683 = vpack.c.b16 %v1631, %v1629
        %v1684 = vpack.c.b16 %v1634, %v1632
        %v1685 = vpack.c.b16 %v1635, %v1633
        %v1686 = vpack.c.b16 %v1638, %v1636
        %v1687 = vpack.c.b16 %v1639, %v1637
        %v1688 = vpack.c.b16 %v1642, %v1640
        %v1689 = vpack.c.b16 %v1643, %v1641
        %v1690 = vpack.c.b16 %v1646, %v1644
        %v1691 = vpack.c.b16 %v1647, %v1645
        %v1692 = vpack.c.b16 %v1650, %v1648
        %v1693 = vpack.c.b16 %v1651, %v1649
        %v1694 = vpack.c.b16 %v1654, %v1652
        %v1695 = vpack.c.b16 %v1655, %v1653
        %v1696 = vpack.c.b16 %v1658, %v1656
        %v1697 = vpack.c.b16 %v1659, %v1657
        %v1698 = vpack.c.b16 %v1662, %v1660
        %v1699 = vpack.c.b16 %v1663, %v1661
        %v1700 = vpack.c.b16 %v1666, %v1664
        %v1701 = vpack.c.b16 %v1667, %v1665
        %v1702 = vpack.c.b16 %v1670, %v1668
        %v1703 = vpack.c.b16 %v1671, %v1669
        %1736 = vmatpush.bf16.msra.mxu0 %v1686
        %1737 = vmatpush.bf16.msra.mxu0 %v1684
        %1738 = vmatpush.bf16.msra.mxu0 %v1682
        %1739 = vmatpush.bf16.msra.mxu0 %v1680
        %1740 = vmatpush.bf16.msra.mxu0 %v1678
        %1741 = vmatpush.bf16.msra.mxu0 %v1676
        %1742 = vmatpush.bf16.msra.mxu0 %v1674
        %1743 = vmatpush.bf16.msra.mxu0 %v1672
        %1744 = vmatmul.bf16.gmra.mxu0 %v1506
        %v1745 = vpop.f32.mrf.mxu0
        %v1746 = vadd.f32 %v1572, %v1745
        %v1747 = vpop.f32.mrf.mxu0
        %v1748 = vadd.f32 %v1572, %v1747
        %1749 = vmatmul.bf16.gmra.mxu0 %v1508
        %v1750 = vpop.f32.mrf.mxu0
        %v1751 = vadd.f32 %v1572, %v1750
        %v1752 = vpop.f32.mrf.mxu0
        %v1753 = vadd.f32 %v1572, %v1752
        %1754 = vmatmul.bf16.gmra.mxu0 %v1510
        %v1755 = vpop.f32.mrf.mxu0
        %v1756 = vadd.f32 %v1572, %v1755
        %v1757 = vpop.f32.mrf.mxu0
        %v1758 = vadd.f32 %v1572, %v1757
        %1759 = vmatmul.bf16.gmra.mxu0 %v1512
        %v1760 = vpop.f32.mrf.mxu0
        %v1761 = vadd.f32 %v1572, %v1760
        %v1762 = vpop.f32.mrf.mxu0
        %v1763 = vadd.f32 %v1572, %v1762
        %1764 = vmatmul.bf16.gmra.mxu0 %v1514
        %v1765 = vpop.f32.mrf.mxu0
        %v1766 = vadd.f32 %v1572, %v1765
        %v1767 = vpop.f32.mrf.mxu0
        %v1768 = vadd.f32 %v1572, %v1767
        %1769 = vmatmul.bf16.gmra.mxu0 %v1516
        %v1770 = vpop.f32.mrf.mxu0
        %v1771 = vadd.f32 %v1572, %v1770
        %v1772 = vpop.f32.mrf.mxu0
        %v1773 = vadd.f32 %v1572, %v1772
        %1774 = vmatmul.bf16.gmra.mxu0 %v1518
        %v1775 = vpop.f32.mrf.mxu0
        %v1776 = vadd.f32 %v1572, %v1775
        %v1777 = vpop.f32.mrf.mxu0
        %v1778 = vadd.f32 %v1572, %v1777
        %1779 = vmatmul.bf16.gmra.mxu0 %v1520
        %v1780 = vpop.f32.mrf.mxu0
        %v1781 = vadd.f32 %v1572, %v1780
        %v1782 = vpop.f32.mrf.mxu0
        %v1783 = vadd.f32 %v1572, %v1782
        %1784 = vmatmul.bf16.gmra.mxu0 %v1522
        %v1785 = vpop.f32.mrf.mxu0
        %v1786 = vadd.f32 %v1572, %v1785
        %v1787 = vpop.f32.mrf.mxu0
        %v1788 = vadd.f32 %v1572, %v1787
        %1789 = vmatmul.bf16.gmra.mxu0 %v1524
        %v1790 = vpop.f32.mrf.mxu0
        %v1791 = vadd.f32 %v1572, %v1790
        %v1792 = vpop.f32.mrf.mxu0
        %v1793 = vadd.f32 %v1572, %v1792
        %1794 = vmatmul.bf16.gmra.mxu0 %v1526
        %v1795 = vpop.f32.mrf.mxu0
        %v1796 = vadd.f32 %v1572, %v1795
        %v1797 = vpop.f32.mrf.mxu0
        %v1798 = vadd.f32 %v1572, %v1797
        %1799 = vmatmul.bf16.gmra.mxu0 %v1528
        %v1800 = vpop.f32.mrf.mxu0
        %v1801 = vadd.f32 %v1572, %v1800
        %v1802 = vpop.f32.mrf.mxu0
        %v1803 = vadd.f32 %v1572, %v1802
        %1804 = vmatmul.bf16.gmra.mxu0 %v1530
        %v1805 = vpop.f32.mrf.mxu0
        %v1806 = vadd.f32 %v1572, %v1805
        %v1807 = vpop.f32.mrf.mxu0
        %v1808 = vadd.f32 %v1572, %v1807
        %1809 = vmatmul.bf16.gmra.mxu0 %v1532
        %v1810 = vpop.f32.mrf.mxu0
        %v1811 = vadd.f32 %v1572, %v1810
        %v1812 = vpop.f32.mrf.mxu0
        %v1813 = vadd.f32 %v1572, %v1812
        %1814 = vmatmul.bf16.gmra.mxu0 %v1534
        %v1815 = vpop.f32.mrf.mxu0
        %v1816 = vadd.f32 %v1572, %v1815
        %v1817 = vpop.f32.mrf.mxu0
        %v1818 = vadd.f32 %v1572, %v1817
        %1819 = vmatmul.bf16.gmra.mxu0 %v1536
        %v1820 = vpop.f32.mrf.mxu0
        %v1821 = vadd.f32 %v1572, %v1820
        %v1822 = vpop.f32.mrf.mxu0
        %v1823 = vadd.f32 %v1572, %v1822
        %1824 = vdwg.mxu0
        %1825 = vmatpush.bf16.msra.mxu0 %v1702
        %1826 = vmatpush.bf16.msra.mxu0 %v1700
        %1827 = vmatpush.bf16.msra.mxu0 %v1698
        %1828 = vmatpush.bf16.msra.mxu0 %v1696
        %1829 = vmatpush.bf16.msra.mxu0 %v1694
        %1830 = vmatpush.bf16.msra.mxu0 %v1692
        %1831 = vmatpush.bf16.msra.mxu0 %v1690
        %1832 = vmatpush.bf16.msra.mxu0 %v1688
        %1833 = vmatmul.bf16.gmra.mxu0 %v1507
        %v1834 = vpop.f32.mrf.mxu0
        %v1835 = vadd.f32 %v1746, %v1834
        %v1836 = vpop.f32.mrf.mxu0
        %v1837 = vadd.f32 %v1748, %v1836
        %1838 = vmatmul.bf16.gmra.mxu0 %v1509
        %v1839 = vpop.f32.mrf.mxu0
        %v1840 = vadd.f32 %v1751, %v1839
        %v1841 = vpop.f32.mrf.mxu0
        %v1842 = vadd.f32 %v1753, %v1841
        %1843 = vmatmul.bf16.gmra.mxu0 %v1511
        %v1844 = vpop.f32.mrf.mxu0
        %v1845 = vadd.f32 %v1756, %v1844
        %v1846 = vpop.f32.mrf.mxu0
        %v1847 = vadd.f32 %v1758, %v1846
        %1848 = vmatmul.bf16.gmra.mxu0 %v1513
        %v1849 = vpop.f32.mrf.mxu0
        %v1850 = vadd.f32 %v1761, %v1849
        %v1851 = vpop.f32.mrf.mxu0
        %v1852 = vadd.f32 %v1763, %v1851
        %1853 = vmatmul.bf16.gmra.mxu0 %v1515
        %v1854 = vpop.f32.mrf.mxu0
        %v1855 = vadd.f32 %v1766, %v1854
        %v1856 = vpop.f32.mrf.mxu0
        %v1857 = vadd.f32 %v1768, %v1856
        %1858 = vmatmul.bf16.gmra.mxu0 %v1517
        %v1859 = vpop.f32.mrf.mxu0
        %v1860 = vadd.f32 %v1771, %v1859
        %v1861 = vpop.f32.mrf.mxu0
        %v1862 = vadd.f32 %v1773, %v1861
        %1863 = vmatmul.bf16.gmra.mxu0 %v1519
        %v1864 = vpop.f32.mrf.mxu0
        %v1865 = vadd.f32 %v1776, %v1864
        %v1866 = vpop.f32.mrf.mxu0
        %v1867 = vadd.f32 %v1778, %v1866
        %1868 = vmatmul.bf16.gmra.mxu0 %v1521
        %v1869 = vpop.f32.mrf.mxu0
        %v1870 = vadd.f32 %v1781, %v1869
        %v1871 = vpop.f32.mrf.mxu0
        %v1872 = vadd.f32 %v1783, %v1871
        %1873 = vmatmul.bf16.gmra.mxu0 %v1523
        %v1874 = vpop.f32.mrf.mxu0
        %v1875 = vadd.f32 %v1786, %v1874
        %v1876 = vpop.f32.mrf.mxu0
        %v1877 = vadd.f32 %v1788, %v1876
        %1878 = vmatmul.bf16.gmra.mxu0 %v1525
        %v1879 = vpop.f32.mrf.mxu0
        %v1880 = vadd.f32 %v1791, %v1879
        %v1881 = vpop.f32.mrf.mxu0
        %v1882 = vadd.f32 %v1793, %v1881
        %1883 = vmatmul.bf16.gmra.mxu0 %v1527
        %v1884 = vpop.f32.mrf.mxu0
        %v1885 = vadd.f32 %v1796, %v1884
        %v1886 = vpop.f32.mrf.mxu0
        %v1887 = vadd.f32 %v1798, %v1886
        %1888 = vmatmul.bf16.gmra.mxu0 %v1529
        %v1889 = vpop.f32.mrf.mxu0
        %v1890 = vadd.f32 %v1801, %v1889
        %v1891 = vpop.f32.mrf.mxu0
        %v1892 = vadd.f32 %v1803, %v1891
        %1893 = vmatmul.bf16.gmra.mxu0 %v1531
        %v1894 = vpop.f32.mrf.mxu0
        %v1895 = vadd.f32 %v1806, %v1894
        %v1896 = vpop.f32.mrf.mxu0
        %v1897 = vadd.f32 %v1808, %v1896
        %1898 = vmatmul.bf16.gmra.mxu0 %v1533
        %v1899 = vpop.f32.mrf.mxu0
        %v1900 = vadd.f32 %v1811, %v1899
        %v1901 = vpop.f32.mrf.mxu0
        %v1902 = vadd.f32 %v1813, %v1901
        %1903 = vmatmul.bf16.gmra.mxu0 %v1535
        %v1904 = vpop.f32.mrf.mxu0
        %v1905 = vadd.f32 %v1816, %v1904
        %v1906 = vpop.f32.mrf.mxu0
        %v1907 = vadd.f32 %v1818, %v1906
        %1908 = vmatmul.bf16.gmra.mxu0 %v1537
        %v1909 = vpop.f32.mrf.mxu0
        %v1910 = vadd.f32 %v1821, %v1909
        %v1911 = vpop.f32.mrf.mxu0
        %v1912 = vadd.f32 %v1823, %v1911
        %1913 = vdwg.mxu0
        %1914 = vmatpush.bf16.msra.mxu0 %v1687
        %1915 = vmatpush.bf16.msra.mxu0 %v1685
        %1916 = vmatpush.bf16.msra.mxu0 %v1683
        %1917 = vmatpush.bf16.msra.mxu0 %v1681
        %1918 = vmatpush.bf16.msra.mxu0 %v1679
        %1919 = vmatpush.bf16.msra.mxu0 %v1677
        %1920 = vmatpush.bf16.msra.mxu0 %v1675
        %1921 = vmatpush.bf16.msra.mxu0 %v1673
        %1922 = vmatmul.bf16.gmra.mxu0 %v1506
        %v1923 = vpop.f32.mrf.mxu0
        %v1924 = vadd.f32 %v1573, %v1923
        %v1925 = vpop.f32.mrf.mxu0
        %v1926 = vadd.f32 %v1573, %v1925
        %1927 = vmatmul.bf16.gmra.mxu0 %v1508
        %v1928 = vpop.f32.mrf.mxu0
        %v1929 = vadd.f32 %v1573, %v1928
        %v1930 = vpop.f32.mrf.mxu0
        %v1931 = vadd.f32 %v1573, %v1930
        %1932 = vmatmul.bf16.gmra.mxu0 %v1510
        %v1933 = vpop.f32.mrf.mxu0
        %v1934 = vadd.f32 %v1573, %v1933
        %v1935 = vpop.f32.mrf.mxu0
        %v1936 = vadd.f32 %v1573, %v1935
        %1937 = vmatmul.bf16.gmra.mxu0 %v1512
        %v1938 = vpop.f32.mrf.mxu0
        %v1939 = vadd.f32 %v1573, %v1938
        %v1940 = vpop.f32.mrf.mxu0
        %v1941 = vadd.f32 %v1573, %v1940
        %1942 = vmatmul.bf16.gmra.mxu0 %v1514
        %v1943 = vpop.f32.mrf.mxu0
        %v1944 = vadd.f32 %v1573, %v1943
        %v1945 = vpop.f32.mrf.mxu0
        %v1946 = vadd.f32 %v1573, %v1945
        %1947 = vmatmul.bf16.gmra.mxu0 %v1516
        %v1948 = vpop.f32.mrf.mxu0
        %v1949 = vadd.f32 %v1573, %v1948
        %v1950 = vpop.f32.mrf.mxu0
        %v1951 = vadd.f32 %v1573, %v1950
        %1952 = vmatmul.bf16.gmra.mxu0 %v1518
        %v1953 = vpop.f32.mrf.mxu0
        %v1954 = vadd.f32 %v1573, %v1953
        %v1955 = vpop.f32.mrf.mxu0
        %v1956 = vadd.f32 %v1573, %v1955
        %1957 = vmatmul.bf16.gmra.mxu0 %v1520
        %v1958 = vpop.f32.mrf.mxu0
        %v1959 = vadd.f32 %v1573, %v1958
        %v1960 = vpop.f32.mrf.mxu0
        %v1961 = vadd.f32 %v1573, %v1960
        %1962 = vmatmul.bf16.gmra.mxu0 %v1522
        %v1963 = vpop.f32.mrf.mxu0
        %v1964 = vadd.f32 %v1573, %v1963
        %v1965 = vpop.f32.mrf.mxu0
        %v1966 = vadd.f32 %v1573, %v1965
        %1967 = vmatmul.bf16.gmra.mxu0 %v1524
        %v1968 = vpop.f32.mrf.mxu0
        %v1969 = vadd.f32 %v1573, %v1968
        %v1970 = vpop.f32.mrf.mxu0
        %v1971 = vadd.f32 %v1573, %v1970
        %1972 = vmatmul.bf16.gmra.mxu0 %v1526
        %v1973 = vpop.f32.mrf.mxu0
        %v1974 = vadd.f32 %v1573, %v1973
        %v1975 = vpop.f32.mrf.mxu0
        %v1976 = vadd.f32 %v1573, %v1975
        %1977 = vmatmul.bf16.gmra.mxu0 %v1528
        %v1978 = vpop.f32.mrf.mxu0
        %v1979 = vadd.f32 %v1573, %v1978
        %v1980 = vpop.f32.mrf.mxu0
        %v1981 = vadd.f32 %v1573, %v1980
        %1982 = vmatmul.bf16.gmra.mxu0 %v1530
        %v1983 = vpop.f32.mrf.mxu0
        %v1984 = vadd.f32 %v1573, %v1983
        %v1985 = vpop.f32.mrf.mxu0
        %v1986 = vadd.f32 %v1573, %v1985
        %1987 = vmatmul.bf16.gmra.mxu0 %v1532
        %v1988 = vpop.f32.mrf.mxu0
        %v1989 = vadd.f32 %v1573, %v1988
        %v1990 = vpop.f32.mrf.mxu0
        %v1991 = vadd.f32 %v1573, %v1990
        %1992 = vmatmul.bf16.gmra.mxu0 %v1534
        %v1993 = vpop.f32.mrf.mxu0
        %v1994 = vadd.f32 %v1573, %v1993
        %v1995 = vpop.f32.mrf.mxu0
        %v1996 = vadd.f32 %v1573, %v1995
        %1997 = vmatmul.bf16.gmra.mxu0 %v1536
        %v1998 = vpop.f32.mrf.mxu0
        %v1999 = vadd.f32 %v1573, %v1998
        %v2000 = vpop.f32.mrf.mxu0
        %v2001 = vadd.f32 %v1573, %v2000
        %2002 = vdwg.mxu0
        %2003 = vmatpush.bf16.msra.mxu0 %v1703
        %2004 = vmatpush.bf16.msra.mxu0 %v1701
        %2005 = vmatpush.bf16.msra.mxu0 %v1699
        %2006 = vmatpush.bf16.msra.mxu0 %v1697
        %2007 = vmatpush.bf16.msra.mxu0 %v1695
        %2008 = vmatpush.bf16.msra.mxu0 %v1693
        %2009 = vmatpush.bf16.msra.mxu0 %v1691
        %2010 = vmatpush.bf16.msra.mxu0 %v1689
        %2011 = vmatmul.bf16.gmra.mxu0 %v1507
        %v2012 = vpop.f32.mrf.mxu0
        %v2013 = vadd.f32 %v1924, %v2012
        %v2014 = vpop.f32.mrf.mxu0
        %v2015 = vadd.f32 %v1926, %v2014
        %2016 = vmatmul.bf16.gmra.mxu0 %v1509
        %v2017 = vpop.f32.mrf.mxu0
        %v2018 = vadd.f32 %v1929, %v2017
        %v2019 = vpop.f32.mrf.mxu0
        %v2020 = vadd.f32 %v1931, %v2019
        %2021 = vmatmul.bf16.gmra.mxu0 %v1511
        %v2022 = vpop.f32.mrf.mxu0
        %v2023 = vadd.f32 %v1934, %v2022
        %v2024 = vpop.f32.mrf.mxu0
        %v2025 = vadd.f32 %v1936, %v2024
        %2026 = vmatmul.bf16.gmra.mxu0 %v1513
        %v2027 = vpop.f32.mrf.mxu0
        %v2028 = vadd.f32 %v1939, %v2027
        %v2029 = vpop.f32.mrf.mxu0
        %v2030 = vadd.f32 %v1941, %v2029
        %2031 = vmatmul.bf16.gmra.mxu0 %v1515
        %v2032 = vpop.f32.mrf.mxu0
        %v2033 = vadd.f32 %v1944, %v2032
        %v2034 = vpop.f32.mrf.mxu0
        %v2035 = vadd.f32 %v1946, %v2034
        %2036 = vmatmul.bf16.gmra.mxu0 %v1517
        %v2037 = vpop.f32.mrf.mxu0
        %v2038 = vadd.f32 %v1949, %v2037
        %v2039 = vpop.f32.mrf.mxu0
        %v2040 = vadd.f32 %v1951, %v2039
        %2041 = vmatmul.bf16.gmra.mxu0 %v1519
        %v2042 = vpop.f32.mrf.mxu0
        %v2043 = vadd.f32 %v1954, %v2042
        %v2044 = vpop.f32.mrf.mxu0
        %v2045 = vadd.f32 %v1956, %v2044
        %2046 = vmatmul.bf16.gmra.mxu0 %v1521
        %v2047 = vpop.f32.mrf.mxu0
        %v2048 = vadd.f32 %v1959, %v2047
        %v2049 = vpop.f32.mrf.mxu0
        %v2050 = vadd.f32 %v1961, %v2049
        %2051 = vmatmul.bf16.gmra.mxu0 %v1523
        %v2052 = vpop.f32.mrf.mxu0
        %v2053 = vadd.f32 %v1964, %v2052
        %v2054 = vpop.f32.mrf.mxu0
        %v2055 = vadd.f32 %v1966, %v2054
        %2056 = vmatmul.bf16.gmra.mxu0 %v1525
        %v2057 = vpop.f32.mrf.mxu0
        %v2058 = vadd.f32 %v1969, %v2057
        %v2059 = vpop.f32.mrf.mxu0
        %v2060 = vadd.f32 %v1971, %v2059
        %2061 = vmatmul.bf16.gmra.mxu0 %v1527
        %v2062 = vpop.f32.mrf.mxu0
        %v2063 = vadd.f32 %v1974, %v2062
        %v2064 = vpop.f32.mrf.mxu0
        %v2065 = vadd.f32 %v1976, %v2064
        %2066 = vmatmul.bf16.gmra.mxu0 %v1529
        %v2067 = vpop.f32.mrf.mxu0
        %v2068 = vadd.f32 %v1979, %v2067
        %v2069 = vpop.f32.mrf.mxu0
        %v2070 = vadd.f32 %v1981, %v2069
        %2071 = vmatmul.bf16.gmra.mxu0 %v1531
        %v2072 = vpop.f32.mrf.mxu0
        %v2073 = vadd.f32 %v1984, %v2072
        %v2074 = vpop.f32.mrf.mxu0
        %v2075 = vadd.f32 %v1986, %v2074
        %2076 = vmatmul.bf16.gmra.mxu0 %v1533
        %v2077 = vpop.f32.mrf.mxu0
        %v2078 = vadd.f32 %v1989, %v2077
        %v2079 = vpop.f32.mrf.mxu0
        %v2080 = vadd.f32 %v1991, %v2079
        %2081 = vmatmul.bf16.gmra.mxu0 %v1535
        %v2082 = vpop.f32.mrf.mxu0
        %v2083 = vadd.f32 %v1994, %v2082
        %v2084 = vpop.f32.mrf.mxu0
        %v2085 = vadd.f32 %v1996, %v2084
        %2086 = vmatmul.bf16.gmra.mxu0 %v1537
        %v2087 = vpop.f32.mrf.mxu0
        %v2088 = vadd.f32 %v1999, %v2087
        %v2089 = vpop.f32.mrf.mxu0
        %v2090 = vadd.f32 %v2001, %v2089
        %2091 = vdwg.mxu0
        %v2092 = vtanh.pop %v1835
        %v2093 = vtanh.pop %v2013
        %v2094 = vtanh.pop %v1837
        %v2095 = vtanh.pop %v2015
        %v2096 = vtanh.pop %v1840
        %v2097 = vtanh.pop %v2018
        %v2098 = vtanh.pop %v1842
        %v2099 = vtanh.pop %v2020
        %v2100 = vtanh.pop %v1845
        %v2101 = vtanh.pop %v2023
        %v2102 = vtanh.pop %v1847
        %v2103 = vtanh.pop %v2025
        %v2104 = vtanh.pop %v1850
        %v2105 = vtanh.pop %v2028
        %v2106 = vtanh.pop %v1852
        %v2107 = vtanh.pop %v2030
        %v2108 = vtanh.pop %v1855
        %v2109 = vtanh.pop %v2033
        %v2110 = vtanh.pop %v1857
        %v2111 = vtanh.pop %v2035
        %v2112 = vtanh.pop %v1860
        %v2113 = vtanh.pop %v2038
        %v2114 = vtanh.pop %v1862
        %v2115 = vtanh.pop %v2040
        %v2116 = vtanh.pop %v1865
        %v2117 = vtanh.pop %v2043
        %v2118 = vtanh.pop %v1867
        %v2119 = vtanh.pop %v2045
        %v2120 = vtanh.pop %v1870
        %v2121 = vtanh.pop %v2048
        %v2122 = vtanh.pop %v1872
        %v2123 = vtanh.pop %v2050
        %v2124 = vtanh.pop %v1875
        %v2125 = vtanh.pop %v2053
        %v2126 = vtanh.pop %v1877
        %v2127 = vtanh.pop %v2055
        %v2128 = vtanh.pop %v1880
        %v2129 = vtanh.pop %v2058
        %v2130 = vtanh.pop %v1882
        %v2131 = vtanh.pop %v2060
        %v2132 = vtanh.pop %v1885
        %v2133 = vtanh.pop %v2063
        %v2134 = vtanh.pop %v1887
        %v2135 = vtanh.pop %v2065
        %v2136 = vtanh.pop %v1890
        %v2137 = vtanh.pop %v2068
        %v2138 = vtanh.pop %v1892
        %v2139 = vtanh.pop %v2070
        %v2140 = vtanh.pop %v1895
        %v2141 = vtanh.pop %v2073
        %v2142 = vtanh.pop %v1897
        %v2143 = vtanh.pop %v2075
        %v2144 = vtanh.pop %v1900
        %v2145 = vtanh.pop %v2078
        %v2146 = vtanh.pop %v1902
        %v2147 = vtanh.pop %v2080
        %v2148 = vtanh.pop %v1905
        %v2149 = vtanh.pop %v2083
        %v2150 = vtanh.pop %v1907
        %v2151 = vtanh.pop %v2085
        %v2152 = vtanh.pop %v1910
        %v2153 = vtanh.pop %v2088
        %v2154 = vtanh.pop %v1912
        %v2155 = vtanh.pop %v2090
        %v2156 = vpack.c.bf16 %v2094, %v2092
        %v2157 = vpack.c.bf16 %v2095, %v2093
        %v2158 = vpack.c.bf16 %v2098, %v2096
        %v2159 = vpack.c.bf16 %v2099, %v2097
        %v2160 = vpack.c.bf16 %v2102, %v2100
        %v2161 = vpack.c.bf16 %v2103, %v2101
        %v2162 = vpack.c.bf16 %v2106, %v2104
        %v2163 = vpack.c.bf16 %v2107, %v2105
        %v2164 = vpack.c.bf16 %v2110, %v2108
        %v2165 = vpack.c.bf16 %v2111, %v2109
        %v2166 = vpack.c.bf16 %v2114, %v2112
        %v2167 = vpack.c.bf16 %v2115, %v2113
        %v2168 = vpack.c.bf16 %v2118, %v2116
        %v2169 = vpack.c.bf16 %v2119, %v2117
        %v2170 = vpack.c.bf16 %v2122, %v2120
        %v2171 = vpack.c.bf16 %v2123, %v2121
        %v2172 = vpack.c.bf16 %v2126, %v2124
        %v2173 = vpack.c.bf16 %v2127, %v2125
        %v2174 = vpack.c.bf16 %v2130, %v2128
        %v2175 = vpack.c.bf16 %v2131, %v2129
        %v2176 = vpack.c.bf16 %v2134, %v2132
        %v2177 = vpack.c.bf16 %v2135, %v2133
        %v2178 = vpack.c.bf16 %v2138, %v2136
        %v2179 = vpack.c.bf16 %v2139, %v2137
        %v2180 = vpack.c.bf16 %v2142, %v2140
        %v2181 = vpack.c.bf16 %v2143, %v2141
        %v2182 = vpack.c.bf16 %v2146, %v2144
        %v2183 = vpack.c.bf16 %v2147, %v2145
        %v2184 = vpack.c.bf16 %v2150, %v2148
        %v2185 = vpack.c.bf16 %v2151, %v2149
        %v2186 = vpack.c.bf16 %v2154, %v2152
        %v2187 = vpack.c.bf16 %v2155, %v2153
        %v2188 = vld [vmem:[%s6] sm:$0xff]
        %v2189 = vld [vmem:[%s6 + $0x8] sm:$0xff]
        %v2190 = vld [vmem:[%s6 + $0x10] sm:$0xff]
        %v2191 = vld [vmem:[%s6 + $0x18] sm:$0xff]
        %v2192 = vld [vmem:[%s6 + $0x20] sm:$0xff]
        %v2193 = vld [vmem:[%s6 + $0x28] sm:$0xff]
        %v2194 = vld [vmem:[%s6 + $0x30] sm:$0xff]
        %v2195 = vld [vmem:[%s6 + $0x38] sm:$0xff]
        %v2196 = vld [vmem:[%s6 + $0x40] sm:$0xff]
        %v2197 = vld [vmem:[%s6 + $0x48] sm:$0xff]
        %v2198 = vld [vmem:[%s6 + $0x50] sm:$0xff]
        %v2199 = vld [vmem:[%s6 + $0x58] sm:$0xff]
        %v2200 = vld [vmem:[%s6 + $0x60] sm:$0xff]
        %v2201 = vld [vmem:[%s6 + $0x68] sm:$0xff]
        %v2202 = vld [vmem:[%s6 + $0x70] sm:$0xff]
        %v2203 = vld [vmem:[%s6 + $0x78] sm:$0xff]
        %v2204 = vld [vmem:[%s6 + $0x80] sm:$0xff]
        %v2205 = vld [vmem:[%s6 + $0x88] sm:$0xff]
        %v2206 = vld [vmem:[%s6 + $0x90] sm:$0xff]
        %v2207 = vld [vmem:[%s6 + $0x98] sm:$0xff]
        %v2208 = vld [vmem:[%s6 + $0xa0] sm:$0xff]
        %v2209 = vld [vmem:[%s6 + $0xa8] sm:$0xff]
        %v2210 = vld [vmem:[%s6 + $0xb0] sm:$0xff]
        %v2211 = vld [vmem:[%s6 + $0xb8] sm:$0xff]
        %v2212 = vld [vmem:[%s6 + $0xc0] sm:$0xff]
        %v2213 = vld [vmem:[%s6 + $0xc8] sm:$0xff]
        %v2214 = vld [vmem:[%s6 + $0xd0] sm:$0xff]
        %v2215 = vld [vmem:[%s6 + $0xd8] sm:$0xff]
        %v2216 = vld [vmem:[%s6 + $0xe0] sm:$0xff]
        %v2217 = vld [vmem:[%s6 + $0xe8] sm:$0xff]
        %v2218 = vld [vmem:[%s6 + $0xf0] sm:$0xff]
        %v2219 = vld [vmem:[%s6 + $0xf8] sm:$0xff]
        %v2220 = vld [vmem:[#allocation7] sm:$0x3]
        %v2222 = vperm.slane %v2220, 0
        %v2223 = vperm.slane %v2220, 1
        %v2258 = vunpack.c.l.b16 %v2188
        %v2259 = vunpack.c.h.b16 %v2188
        %v2260 = vunpack.c.l.b16 %v2189
        %v2261 = vunpack.c.h.b16 %v2189
        %v2262 = vunpack.c.l.b16 %v2190
        %v2263 = vunpack.c.h.b16 %v2190
        %v2264 = vunpack.c.l.b16 %v2191
        %v2265 = vunpack.c.h.b16 %v2191
        %v2266 = vunpack.c.l.b16 %v2192
        %v2267 = vunpack.c.h.b16 %v2192
        %v2268 = vunpack.c.l.b16 %v2193
        %v2269 = vunpack.c.h.b16 %v2193
        %v2270 = vunpack.c.l.b16 %v2194
        %v2271 = vunpack.c.h.b16 %v2194
        %v2272 = vunpack.c.l.b16 %v2195
        %v2273 = vunpack.c.h.b16 %v2195
        %v2274 = vunpack.c.l.b16 %v2196
        %v2275 = vunpack.c.h.b16 %v2196
        %v2276 = vunpack.c.l.b16 %v2197
        %v2277 = vunpack.c.h.b16 %v2197
        %v2278 = vunpack.c.l.b16 %v2198
        %v2279 = vunpack.c.h.b16 %v2198
        %v2280 = vunpack.c.l.b16 %v2199
        %v2281 = vunpack.c.h.b16 %v2199
        %v2282 = vunpack.c.l.b16 %v2200
        %v2283 = vunpack.c.h.b16 %v2200
        %v2284 = vunpack.c.l.b16 %v2201
        %v2285 = vunpack.c.h.b16 %v2201
        %v2286 = vunpack.c.l.b16 %v2202
        %v2287 = vunpack.c.h.b16 %v2202
        %v2288 = vunpack.c.l.b16 %v2203
        %v2289 = vunpack.c.h.b16 %v2203
        %v2290 = vunpack.c.l.b16 %v2204
        %v2291 = vunpack.c.h.b16 %v2204
        %v2292 = vunpack.c.l.b16 %v2205
        %v2293 = vunpack.c.h.b16 %v2205
        %v2294 = vunpack.c.l.b16 %v2206
        %v2295 = vunpack.c.h.b16 %v2206
        %v2296 = vunpack.c.l.b16 %v2207
        %v2297 = vunpack.c.h.b16 %v2207
        %v2298 = vunpack.c.l.b16 %v2208
        %v2299 = vunpack.c.h.b16 %v2208
        %v2300 = vunpack.c.l.b16 %v2209
        %v2301 = vunpack.c.h.b16 %v2209
        %v2302 = vunpack.c.l.b16 %v2210
        %v2303 = vunpack.c.h.b16 %v2210
        %v2304 = vunpack.c.l.b16 %v2211
        %v2305 = vunpack.c.h.b16 %v2211
        %v2306 = vunpack.c.l.b16 %v2212
        %v2307 = vunpack.c.h.b16 %v2212
        %v2308 = vunpack.c.l.b16 %v2213
        %v2309 = vunpack.c.h.b16 %v2213
        %v2310 = vunpack.c.l.b16 %v2214
        %v2311 = vunpack.c.h.b16 %v2214
        %v2312 = vunpack.c.l.b16 %v2215
        %v2313 = vunpack.c.h.b16 %v2215
        %v2314 = vunpack.c.l.b16 %v2216
        %v2315 = vunpack.c.h.b16 %v2216
        %v2316 = vunpack.c.l.b16 %v2217
        %v2317 = vunpack.c.h.b16 %v2217
        %v2318 = vunpack.c.l.b16 %v2218
        %v2319 = vunpack.c.h.b16 %v2218
        %v2320 = vunpack.c.l.b16 %v2219
        %v2321 = vunpack.c.h.b16 %v2219
        %v2322 = vpack.c.b16 %v2260, %v2258
        %v2323 = vpack.c.b16 %v2261, %v2259
        %v2324 = vpack.c.b16 %v2264, %v2262
        %v2325 = vpack.c.b16 %v2265, %v2263
        %v2326 = vpack.c.b16 %v2268, %v2266
        %v2327 = vpack.c.b16 %v2269, %v2267
        %v2328 = vpack.c.b16 %v2272, %v2270
        %v2329 = vpack.c.b16 %v2273, %v2271
        %v2330 = vpack.c.b16 %v2276, %v2274
        %v2331 = vpack.c.b16 %v2277, %v2275
        %v2332 = vpack.c.b16 %v2280, %v2278
        %v2333 = vpack.c.b16 %v2281, %v2279
        %v2334 = vpack.c.b16 %v2284, %v2282
        %v2335 = vpack.c.b16 %v2285, %v2283
        %v2336 = vpack.c.b16 %v2288, %v2286
        %v2337 = vpack.c.b16 %v2289, %v2287
        %v2338 = vpack.c.b16 %v2292, %v2290
        %v2339 = vpack.c.b16 %v2293, %v2291
        %v2340 = vpack.c.b16 %v2296, %v2294
        %v2341 = vpack.c.b16 %v2297, %v2295
        %v2342 = vpack.c.b16 %v2300, %v2298
        %v2343 = vpack.c.b16 %v2301, %v2299
        %v2344 = vpack.c.b16 %v2304, %v2302
        %v2345 = vpack.c.b16 %v2305, %v2303
        %v2346 = vpack.c.b16 %v2308, %v2306
        %v2347 = vpack.c.b16 %v2309, %v2307
        %v2348 = vpack.c.b16 %v2312, %v2310
        %v2349 = vpack.c.b16 %v2313, %v2311
        %v2350 = vpack.c.b16 %v2316, %v2314
        %v2351 = vpack.c.b16 %v2317, %v2315
        %v2352 = vpack.c.b16 %v2320, %v2318
        %v2353 = vpack.c.b16 %v2321, %v2319
        %2386 = vmatpush.bf16.msra.mxu0 %v2336
        %2387 = vmatpush.bf16.msra.mxu0 %v2334
        %2388 = vmatpush.bf16.msra.mxu0 %v2332
        %2389 = vmatpush.bf16.msra.mxu0 %v2330
        %2390 = vmatpush.bf16.msra.mxu0 %v2328
        %2391 = vmatpush.bf16.msra.mxu0 %v2326
        %2392 = vmatpush.bf16.msra.mxu0 %v2324
        %2393 = vmatpush.bf16.msra.mxu0 %v2322
        %2394 = vmatmul.bf16.gmra.mxu0 %v2156
        %v2395 = vpop.f32.mrf.mxu0
        %v2396 = vadd.f32 %v2222, %v2395
        %v2397 = vpop.f32.mrf.mxu0
        %v2398 = vadd.f32 %v2222, %v2397
        %2399 = vmatmul.bf16.gmra.mxu0 %v2158
        %v2400 = vpop.f32.mrf.mxu0
        %v2401 = vadd.f32 %v2222, %v2400
        %v2402 = vpop.f32.mrf.mxu0
        %v2403 = vadd.f32 %v2222, %v2402
        %2404 = vmatmul.bf16.gmra.mxu0 %v2160
        %v2405 = vpop.f32.mrf.mxu0
        %v2406 = vadd.f32 %v2222, %v2405
        %v2407 = vpop.f32.mrf.mxu0
        %v2408 = vadd.f32 %v2222, %v2407
        %2409 = vmatmul.bf16.gmra.mxu0 %v2162
        %v2410 = vpop.f32.mrf.mxu0
        %v2411 = vadd.f32 %v2222, %v2410
        %v2412 = vpop.f32.mrf.mxu0
        %v2413 = vadd.f32 %v2222, %v2412
        %2414 = vmatmul.bf16.gmra.mxu0 %v2164
        %v2415 = vpop.f32.mrf.mxu0
        %v2416 = vadd.f32 %v2222, %v2415
        %v2417 = vpop.f32.mrf.mxu0
        %v2418 = vadd.f32 %v2222, %v2417
        %2419 = vmatmul.bf16.gmra.mxu0 %v2166
        %v2420 = vpop.f32.mrf.mxu0
        %v2421 = vadd.f32 %v2222, %v2420
        %v2422 = vpop.f32.mrf.mxu0
        %v2423 = vadd.f32 %v2222, %v2422
        %2424 = vmatmul.bf16.gmra.mxu0 %v2168
        %v2425 = vpop.f32.mrf.mxu0
        %v2426 = vadd.f32 %v2222, %v2425
        %v2427 = vpop.f32.mrf.mxu0
        %v2428 = vadd.f32 %v2222, %v2427
        %2429 = vmatmul.bf16.gmra.mxu0 %v2170
        %v2430 = vpop.f32.mrf.mxu0
        %v2431 = vadd.f32 %v2222, %v2430
        %v2432 = vpop.f32.mrf.mxu0
        %v2433 = vadd.f32 %v2222, %v2432
        %2434 = vmatmul.bf16.gmra.mxu0 %v2172
        %v2435 = vpop.f32.mrf.mxu0
        %v2436 = vadd.f32 %v2222, %v2435
        %v2437 = vpop.f32.mrf.mxu0
        %v2438 = vadd.f32 %v2222, %v2437
        %2439 = vmatmul.bf16.gmra.mxu0 %v2174
        %v2440 = vpop.f32.mrf.mxu0
        %v2441 = vadd.f32 %v2222, %v2440
        %v2442 = vpop.f32.mrf.mxu0
        %v2443 = vadd.f32 %v2222, %v2442
        %2444 = vmatmul.bf16.gmra.mxu0 %v2176
        %v2445 = vpop.f32.mrf.mxu0
        %v2446 = vadd.f32 %v2222, %v2445
        %v2447 = vpop.f32.mrf.mxu0
        %v2448 = vadd.f32 %v2222, %v2447
        %2449 = vmatmul.bf16.gmra.mxu0 %v2178
        %v2450 = vpop.f32.mrf.mxu0
        %v2451 = vadd.f32 %v2222, %v2450
        %v2452 = vpop.f32.mrf.mxu0
        %v2453 = vadd.f32 %v2222, %v2452
        %2454 = vmatmul.bf16.gmra.mxu0 %v2180
        %v2455 = vpop.f32.mrf.mxu0
        %v2456 = vadd.f32 %v2222, %v2455
        %v2457 = vpop.f32.mrf.mxu0
        %v2458 = vadd.f32 %v2222, %v2457
        %2459 = vmatmul.bf16.gmra.mxu0 %v2182
        %v2460 = vpop.f32.mrf.mxu0
        %v2461 = vadd.f32 %v2222, %v2460
        %v2462 = vpop.f32.mrf.mxu0
        %v2463 = vadd.f32 %v2222, %v2462
        %2464 = vmatmul.bf16.gmra.mxu0 %v2184
        %v2465 = vpop.f32.mrf.mxu0
        %v2466 = vadd.f32 %v2222, %v2465
        %v2467 = vpop.f32.mrf.mxu0
        %v2468 = vadd.f32 %v2222, %v2467
        %2469 = vmatmul.bf16.gmra.mxu0 %v2186
        %v2470 = vpop.f32.mrf.mxu0
        %v2471 = vadd.f32 %v2222, %v2470
        %v2472 = vpop.f32.mrf.mxu0
        %v2473 = vadd.f32 %v2222, %v2472
        %2474 = vdwg.mxu0
        %2475 = vmatpush.bf16.msra.mxu0 %v2352
        %2476 = vmatpush.bf16.msra.mxu0 %v2350
        %2477 = vmatpush.bf16.msra.mxu0 %v2348
        %2478 = vmatpush.bf16.msra.mxu0 %v2346
        %2479 = vmatpush.bf16.msra.mxu0 %v2344
        %2480 = vmatpush.bf16.msra.mxu0 %v2342
        %2481 = vmatpush.bf16.msra.mxu0 %v2340
        %2482 = vmatpush.bf16.msra.mxu0 %v2338
        %2483 = vmatmul.bf16.gmra.mxu0 %v2157
        %v2484 = vpop.f32.mrf.mxu0
        %v2485 = vadd.f32 %v2396, %v2484
        %v2486 = vpop.f32.mrf.mxu0
        %v2487 = vadd.f32 %v2398, %v2486
        %2488 = vmatmul.bf16.gmra.mxu0 %v2159
        %v2489 = vpop.f32.mrf.mxu0
        %v2490 = vadd.f32 %v2401, %v2489
        %v2491 = vpop.f32.mrf.mxu0
        %v2492 = vadd.f32 %v2403, %v2491
        %2493 = vmatmul.bf16.gmra.mxu0 %v2161
        %v2494 = vpop.f32.mrf.mxu0
        %v2495 = vadd.f32 %v2406, %v2494
        %v2496 = vpop.f32.mrf.mxu0
        %v2497 = vadd.f32 %v2408, %v2496
        %2498 = vmatmul.bf16.gmra.mxu0 %v2163
        %v2499 = vpop.f32.mrf.mxu0
        %v2500 = vadd.f32 %v2411, %v2499
        %v2501 = vpop.f32.mrf.mxu0
        %v2502 = vadd.f32 %v2413, %v2501
        %2503 = vmatmul.bf16.gmra.mxu0 %v2165
        %v2504 = vpop.f32.mrf.mxu0
        %v2505 = vadd.f32 %v2416, %v2504
        %v2506 = vpop.f32.mrf.mxu0
        %v2507 = vadd.f32 %v2418, %v2506
        %2508 = vmatmul.bf16.gmra.mxu0 %v2167
        %v2509 = vpop.f32.mrf.mxu0
        %v2510 = vadd.f32 %v2421, %v2509
        %v2511 = vpop.f32.mrf.mxu0
        %v2512 = vadd.f32 %v2423, %v2511
        %2513 = vmatmul.bf16.gmra.mxu0 %v2169
        %v2514 = vpop.f32.mrf.mxu0
        %v2515 = vadd.f32 %v2426, %v2514
        %v2516 = vpop.f32.mrf.mxu0
        %v2517 = vadd.f32 %v2428, %v2516
        %2518 = vmatmul.bf16.gmra.mxu0 %v2171
        %v2519 = vpop.f32.mrf.mxu0
        %v2520 = vadd.f32 %v2431, %v2519
        %v2521 = vpop.f32.mrf.mxu0
        %v2522 = vadd.f32 %v2433, %v2521
        %2523 = vmatmul.bf16.gmra.mxu0 %v2173
        %v2524 = vpop.f32.mrf.mxu0
        %v2525 = vadd.f32 %v2436, %v2524
        %v2526 = vpop.f32.mrf.mxu0
        %v2527 = vadd.f32 %v2438, %v2526
        %2528 = vmatmul.bf16.gmra.mxu0 %v2175
        %v2529 = vpop.f32.mrf.mxu0
        %v2530 = vadd.f32 %v2441, %v2529
        %v2531 = vpop.f32.mrf.mxu0
        %v2532 = vadd.f32 %v2443, %v2531
        %2533 = vmatmul.bf16.gmra.mxu0 %v2177
        %v2534 = vpop.f32.mrf.mxu0
        %v2535 = vadd.f32 %v2446, %v2534
        %v2536 = vpop.f32.mrf.mxu0
        %v2537 = vadd.f32 %v2448, %v2536
        %2538 = vmatmul.bf16.gmra.mxu0 %v2179
        %v2539 = vpop.f32.mrf.mxu0
        %v2540 = vadd.f32 %v2451, %v2539
        %v2541 = vpop.f32.mrf.mxu0
        %v2542 = vadd.f32 %v2453, %v2541
        %2543 = vmatmul.bf16.gmra.mxu0 %v2181
        %v2544 = vpop.f32.mrf.mxu0
        %v2545 = vadd.f32 %v2456, %v2544
        %v2546 = vpop.f32.mrf.mxu0
        %v2547 = vadd.f32 %v2458, %v2546
        %2548 = vmatmul.bf16.gmra.mxu0 %v2183
        %v2549 = vpop.f32.mrf.mxu0
        %v2550 = vadd.f32 %v2461, %v2549
        %v2551 = vpop.f32.mrf.mxu0
        %v2552 = vadd.f32 %v2463, %v2551
        %2553 = vmatmul.bf16.gmra.mxu0 %v2185
        %v2554 = vpop.f32.mrf.mxu0
        %v2555 = vadd.f32 %v2466, %v2554
        %v2556 = vpop.f32.mrf.mxu0
        %v2557 = vadd.f32 %v2468, %v2556
        %2558 = vmatmul.bf16.gmra.mxu0 %v2187
        %v2559 = vpop.f32.mrf.mxu0
        %v2560 = vadd.f32 %v2471, %v2559
        %v2561 = vpop.f32.mrf.mxu0
        %v2562 = vadd.f32 %v2473, %v2561
        %2563 = vdwg.mxu0
        %2564 = vmatpush.bf16.msra.mxu0 %v2337
        %2565 = vmatpush.bf16.msra.mxu0 %v2335
        %2566 = vmatpush.bf16.msra.mxu0 %v2333
        %2567 = vmatpush.bf16.msra.mxu0 %v2331
        %2568 = vmatpush.bf16.msra.mxu0 %v2329
        %2569 = vmatpush.bf16.msra.mxu0 %v2327
        %2570 = vmatpush.bf16.msra.mxu0 %v2325
        %2571 = vmatpush.bf16.msra.mxu0 %v2323
        %2572 = vmatmul.bf16.gmra.mxu0 %v2156
        %v2573 = vpop.f32.mrf.mxu0
        %v2574 = vadd.f32 %v2223, %v2573
        %v2575 = vpop.f32.mrf.mxu0
        %v2576 = vadd.f32 %v2223, %v2575
        %2577 = vmatmul.bf16.gmra.mxu0 %v2158
        %v2578 = vpop.f32.mrf.mxu0
        %v2579 = vadd.f32 %v2223, %v2578
        %v2580 = vpop.f32.mrf.mxu0
        %v2581 = vadd.f32 %v2223, %v2580
        %2582 = vmatmul.bf16.gmra.mxu0 %v2160
        %v2583 = vpop.f32.mrf.mxu0
        %v2584 = vadd.f32 %v2223, %v2583
        %v2585 = vpop.f32.mrf.mxu0
        %v2586 = vadd.f32 %v2223, %v2585
        %2587 = vmatmul.bf16.gmra.mxu0 %v2162
        %v2588 = vpop.f32.mrf.mxu0
        %v2589 = vadd.f32 %v2223, %v2588
        %v2590 = vpop.f32.mrf.mxu0
        %v2591 = vadd.f32 %v2223, %v2590
        %2592 = vmatmul.bf16.gmra.mxu0 %v2164
        %v2593 = vpop.f32.mrf.mxu0
        %v2594 = vadd.f32 %v2223, %v2593
        %v2595 = vpop.f32.mrf.mxu0
        %v2596 = vadd.f32 %v2223, %v2595
        %2597 = vmatmul.bf16.gmra.mxu0 %v2166
        %v2598 = vpop.f32.mrf.mxu0
        %v2599 = vadd.f32 %v2223, %v2598
        %v2600 = vpop.f32.mrf.mxu0
        %v2601 = vadd.f32 %v2223, %v2600
        %2602 = vmatmul.bf16.gmra.mxu0 %v2168
        %v2603 = vpop.f32.mrf.mxu0
        %v2604 = vadd.f32 %v2223, %v2603
        %v2605 = vpop.f32.mrf.mxu0
        %v2606 = vadd.f32 %v2223, %v2605
        %2607 = vmatmul.bf16.gmra.mxu0 %v2170
        %v2608 = vpop.f32.mrf.mxu0
        %v2609 = vadd.f32 %v2223, %v2608
        %v2610 = vpop.f32.mrf.mxu0
        %v2611 = vadd.f32 %v2223, %v2610
        %2612 = vmatmul.bf16.gmra.mxu0 %v2172
        %v2613 = vpop.f32.mrf.mxu0
        %v2614 = vadd.f32 %v2223, %v2613
        %v2615 = vpop.f32.mrf.mxu0
        %v2616 = vadd.f32 %v2223, %v2615
        %2617 = vmatmul.bf16.gmra.mxu0 %v2174
        %v2618 = vpop.f32.mrf.mxu0
        %v2619 = vadd.f32 %v2223, %v2618
        %v2620 = vpop.f32.mrf.mxu0
        %v2621 = vadd.f32 %v2223, %v2620
        %2622 = vmatmul.bf16.gmra.mxu0 %v2176
        %v2623 = vpop.f32.mrf.mxu0
        %v2624 = vadd.f32 %v2223, %v2623
        %v2625 = vpop.f32.mrf.mxu0
        %v2626 = vadd.f32 %v2223, %v2625
        %2627 = vmatmul.bf16.gmra.mxu0 %v2178
        %v2628 = vpop.f32.mrf.mxu0
        %v2629 = vadd.f32 %v2223, %v2628
        %v2630 = vpop.f32.mrf.mxu0
        %v2631 = vadd.f32 %v2223, %v2630
        %2632 = vmatmul.bf16.gmra.mxu0 %v2180
        %v2633 = vpop.f32.mrf.mxu0
        %v2634 = vadd.f32 %v2223, %v2633
        %v2635 = vpop.f32.mrf.mxu0
        %v2636 = vadd.f32 %v2223, %v2635
        %2637 = vmatmul.bf16.gmra.mxu0 %v2182
        %v2638 = vpop.f32.mrf.mxu0
        %v2639 = vadd.f32 %v2223, %v2638
        %v2640 = vpop.f32.mrf.mxu0
        %v2641 = vadd.f32 %v2223, %v2640
        %2642 = vmatmul.bf16.gmra.mxu0 %v2184
        %v2643 = vpop.f32.mrf.mxu0
        %v2644 = vadd.f32 %v2223, %v2643
        %v2645 = vpop.f32.mrf.mxu0
        %v2646 = vadd.f32 %v2223, %v2645
        %2647 = vmatmul.bf16.gmra.mxu0 %v2186
        %v2648 = vpop.f32.mrf.mxu0
        %v2649 = vadd.f32 %v2223, %v2648
        %v2650 = vpop.f32.mrf.mxu0
        %v2651 = vadd.f32 %v2223, %v2650
        %2652 = vdwg.mxu0
        %2653 = vmatpush.bf16.msra.mxu0 %v2353
        %2654 = vmatpush.bf16.msra.mxu0 %v2351
        %2655 = vmatpush.bf16.msra.mxu0 %v2349
        %2656 = vmatpush.bf16.msra.mxu0 %v2347
        %2657 = vmatpush.bf16.msra.mxu0 %v2345
        %2658 = vmatpush.bf16.msra.mxu0 %v2343
        %2659 = vmatpush.bf16.msra.mxu0 %v2341
        %2660 = vmatpush.bf16.msra.mxu0 %v2339
        %2661 = vmatmul.bf16.gmra.mxu0 %v2157
        %v2662 = vpop.f32.mrf.mxu0
        %v2663 = vadd.f32 %v2574, %v2662
        %v2664 = vpop.f32.mrf.mxu0
        %v2665 = vadd.f32 %v2576, %v2664
        %2666 = vmatmul.bf16.gmra.mxu0 %v2159
        %v2667 = vpop.f32.mrf.mxu0
        %v2668 = vadd.f32 %v2579, %v2667
        %v2669 = vpop.f32.mrf.mxu0
        %v2670 = vadd.f32 %v2581, %v2669
        %2671 = vmatmul.bf16.gmra.mxu0 %v2161
        %v2672 = vpop.f32.mrf.mxu0
        %v2673 = vadd.f32 %v2584, %v2672
        %v2674 = vpop.f32.mrf.mxu0
        %v2675 = vadd.f32 %v2586, %v2674
        %2676 = vmatmul.bf16.gmra.mxu0 %v2163
        %v2677 = vpop.f32.mrf.mxu0
        %v2678 = vadd.f32 %v2589, %v2677
        %v2679 = vpop.f32.mrf.mxu0
        %v2680 = vadd.f32 %v2591, %v2679
        %2681 = vmatmul.bf16.gmra.mxu0 %v2165
        %v2682 = vpop.f32.mrf.mxu0
        %v2683 = vadd.f32 %v2594, %v2682
        %v2684 = vpop.f32.mrf.mxu0
        %v2685 = vadd.f32 %v2596, %v2684
        %2686 = vmatmul.bf16.gmra.mxu0 %v2167
        %v2687 = vpop.f32.mrf.mxu0
        %v2688 = vadd.f32 %v2599, %v2687
        %v2689 = vpop.f32.mrf.mxu0
        %v2690 = vadd.f32 %v2601, %v2689
        %2691 = vmatmul.bf16.gmra.mxu0 %v2169
        %v2692 = vpop.f32.mrf.mxu0
        %v2693 = vadd.f32 %v2604, %v2692
        %v2694 = vpop.f32.mrf.mxu0
        %v2695 = vadd.f32 %v2606, %v2694
        %2696 = vmatmul.bf16.gmra.mxu0 %v2171
        %v2697 = vpop.f32.mrf.mxu0
        %v2698 = vadd.f32 %v2609, %v2697
        %v2699 = vpop.f32.mrf.mxu0
        %v2700 = vadd.f32 %v2611, %v2699
        %2701 = vmatmul.bf16.gmra.mxu0 %v2173
        %v2702 = vpop.f32.mrf.mxu0
        %v2703 = vadd.f32 %v2614, %v2702
        %v2704 = vpop.f32.mrf.mxu0
        %v2705 = vadd.f32 %v2616, %v2704
        %2706 = vmatmul.bf16.gmra.mxu0 %v2175
        %v2707 = vpop.f32.mrf.mxu0
        %v2708 = vadd.f32 %v2619, %v2707
        %v2709 = vpop.f32.mrf.mxu0
        %v2710 = vadd.f32 %v2621, %v2709
        %2711 = vmatmul.bf16.gmra.mxu0 %v2177
        %v2712 = vpop.f32.mrf.mxu0
        %v2713 = vadd.f32 %v2624, %v2712
        %v2714 = vpop.f32.mrf.mxu0
        %v2715 = vadd.f32 %v2626, %v2714
        %2716 = vmatmul.bf16.gmra.mxu0 %v2179
        %v2717 = vpop.f32.mrf.mxu0
        %v2718 = vadd.f32 %v2629, %v2717
        %v2719 = vpop.f32.mrf.mxu0
        %v2720 = vadd.f32 %v2631, %v2719
        %2721 = vmatmul.bf16.gmra.mxu0 %v2181
        %v2722 = vpop.f32.mrf.mxu0
        %v2723 = vadd.f32 %v2634, %v2722
        %v2724 = vpop.f32.mrf.mxu0
        %v2725 = vadd.f32 %v2636, %v2724
        %2726 = vmatmul.bf16.gmra.mxu0 %v2183
        %v2727 = vpop.f32.mrf.mxu0
        %v2728 = vadd.f32 %v2639, %v2727
        %v2729 = vpop.f32.mrf.mxu0
        %v2730 = vadd.f32 %v2641, %v2729
        %2731 = vmatmul.bf16.gmra.mxu0 %v2185
        %v2732 = vpop.f32.mrf.mxu0
        %v2733 = vadd.f32 %v2644, %v2732
        %v2734 = vpop.f32.mrf.mxu0
        %v2735 = vadd.f32 %v2646, %v2734
        %2736 = vmatmul.bf16.gmra.mxu0 %v2187
        %v2737 = vpop.f32.mrf.mxu0
        %v2738 = vadd.f32 %v2649, %v2737
        %v2739 = vpop.f32.mrf.mxu0
        %v2740 = vadd.f32 %v2651, %v2739
        %2741 = vdwg.mxu0
        %v2742 = vmul.f32 %v2663, 1.442695
        %v2743 = vpow.pop %v2742
        %v2744 = vmul.f32 %v2665, 1.442695
        %v2745 = vpow.pop %v2744
        %v2746 = vmul.f32 %v2668, 1.442695
        %v2747 = vpow.pop %v2746
        %v2748 = vmul.f32 %v2670, 1.442695
        %v2749 = vpow.pop %v2748
        %v2750 = vmul.f32 %v2673, 1.442695
        %v2751 = vpow.pop %v2750
        %v2752 = vmul.f32 %v2675, 1.442695
        %v2753 = vpow.pop %v2752
        %v2754 = vmul.f32 %v2678, 1.442695
        %v2755 = vpow.pop %v2754
        %v2756 = vmul.f32 %v2680, 1.442695
        %v2757 = vpow.pop %v2756
        %v2758 = vmul.f32 %v2683, 1.442695
        %v2759 = vpow.pop %v2758
        %v2760 = vmul.f32 %v2685, 1.442695
        %v2761 = vpow.pop %v2760
        %v2762 = vmul.f32 %v2688, 1.442695
        %v2763 = vpow.pop %v2762
        %v2764 = vmul.f32 %v2690, 1.442695
        %v2765 = vpow.pop %v2764
        %v2766 = vmul.f32 %v2693, 1.442695
        %v2767 = vpow.pop %v2766
        %v2768 = vmul.f32 %v2695, 1.442695
        %v2769 = vpow.pop %v2768
        %v2770 = vmul.f32 %v2698, 1.442695
        %v2771 = vpow.pop %v2770
        %v2772 = vmul.f32 %v2700, 1.442695
        %v2773 = vpow.pop %v2772
        %v2774 = vmul.f32 %v2703, 1.442695
        %v2775 = vpow.pop %v2774
        %v2776 = vmul.f32 %v2705, 1.442695
        %v2777 = vpow.pop %v2776
        %v2778 = vmul.f32 %v2708, 1.442695
        %v2779 = vpow.pop %v2778
        %v2780 = vmul.f32 %v2710, 1.442695
        %v2781 = vpow.pop %v2780
        %v2782 = vmul.f32 %v2713, 1.442695
        %v2783 = vpow.pop %v2782
        %v2784 = vmul.f32 %v2715, 1.442695
        %v2785 = vpow.pop %v2784
        %v2786 = vmul.f32 %v2718, 1.442695
        %v2787 = vpow.pop %v2786
        %v2788 = vmul.f32 %v2720, 1.442695
        %v2789 = vpow.pop %v2788
        %v2790 = vmul.f32 %v2723, 1.442695
        %v2791 = vpow.pop %v2790
        %v2792 = vmul.f32 %v2725, 1.442695
        %v2793 = vpow.pop %v2792
        %v2794 = vmul.f32 %v2728, 1.442695
        %v2795 = vpow.pop %v2794
        %v2796 = vmul.f32 %v2730, 1.442695
        %v2797 = vpow.pop %v2796
        %v2798 = vmul.f32 %v2733, 1.442695
        %v2799 = vpow.pop %v2798
        %v2800 = vmul.f32 %v2735, 1.442695
        %v2801 = vpow.pop %v2800
        %v2802 = vmul.f32 %v2738, 1.442695
        %v2803 = vpow.pop %v2802
        %v2804 = vmul.f32 %v2740, 1.442695
        %v2805 = vpow.pop %v2804
        %2806 = vst [vmem:[%s687] sm:$0xff] %v2485
        %2807 = vst [vmem:[%s687 + $0x8] sm:$0xff] %v2487
        %2808 = vst [vmem:[%s687 + $0x10] sm:$0xff] %v2490
        %2809 = vst [vmem:[%s687 + $0x18] sm:$0xff] %v2492
        %2810 = vst [vmem:[%s687 + $0x20] sm:$0xff] %v2495
        %2811 = vst [vmem:[%s687 + $0x28] sm:$0xff] %v2497
        %2812 = vst [vmem:[%s687 + $0x30] sm:$0xff] %v2500
        %2813 = vst [vmem:[%s687 + $0x38] sm:$0xff] %v2502
        %2814 = vst [vmem:[%s687 + $0x40] sm:$0xff] %v2505
        %2815 = vst [vmem:[%s687 + $0x48] sm:$0xff] %v2507
        %2816 = vst [vmem:[%s687 + $0x50] sm:$0xff] %v2510
        %2817 = vst [vmem:[%s687 + $0x58] sm:$0xff] %v2512
        %2818 = vst [vmem:[%s687 + $0x60] sm:$0xff] %v2515
        %2819 = vst [vmem:[%s687 + $0x68] sm:$0xff] %v2517
        %2820 = vst [vmem:[%s687 + $0x70] sm:$0xff] %v2520
        %2821 = vst [vmem:[%s687 + $0x78] sm:$0xff] %v2522
        %2822 = vst [vmem:[%s687 + $0x80] sm:$0xff] %v2525
        %2823 = vst [vmem:[%s687 + $0x88] sm:$0xff] %v2527
        %2824 = vst [vmem:[%s687 + $0x90] sm:$0xff] %v2530
        %2825 = vst [vmem:[%s687 + $0x98] sm:$0xff] %v2532
        %2826 = vst [vmem:[%s687 + $0xa0] sm:$0xff] %v2535
        %2827 = vst [vmem:[%s687 + $0xa8] sm:$0xff] %v2537
        %2828 = vst [vmem:[%s687 + $0xb0] sm:$0xff] %v2540
        %2829 = vst [vmem:[%s687 + $0xb8] sm:$0xff] %v2542
        %2830 = vst [vmem:[%s687 + $0xc0] sm:$0xff] %v2545
        %2831 = vst [vmem:[%s687 + $0xc8] sm:$0xff] %v2547
        %2832 = vst [vmem:[%s687 + $0xd0] sm:$0xff] %v2550
        %2833 = vst [vmem:[%s687 + $0xd8] sm:$0xff] %v2552
        %2834 = vst [vmem:[%s687 + $0xe0] sm:$0xff] %v2555
        %2835 = vst [vmem:[%s687 + $0xe8] sm:$0xff] %v2557
        %2836 = vst [vmem:[%s687 + $0xf0] sm:$0xff] %v2560
        %2837 = vst [vmem:[%s687 + $0xf8] sm:$0xff] %v2562
        %2838 = vst [vmem:[%s693] sm:$0xff] %v2743
        %2839 = vst [vmem:[%s693 + $0x8] sm:$0xff] %v2745
        %2840 = vst [vmem:[%s693 + $0x10] sm:$0xff] %v2747
        %2841 = vst [vmem:[%s693 + $0x18] sm:$0xff] %v2749
        %2842 = vst [vmem:[%s693 + $0x20] sm:$0xff] %v2751
        %2843 = vst [vmem:[%s693 + $0x28] sm:$0xff] %v2753
        %2844 = vst [vmem:[%s693 + $0x30] sm:$0xff] %v2755
        %2845 = vst [vmem:[%s693 + $0x38] sm:$0xff] %v2757
        %2846 = vst [vmem:[%s693 + $0x40] sm:$0xff] %v2759
        %2847 = vst [vmem:[%s693 + $0x48] sm:$0xff] %v2761
        %2848 = vst [vmem:[%s693 + $0x50] sm:$0xff] %v2763
        %2849 = vst [vmem:[%s693 + $0x58] sm:$0xff] %v2765
        %2850 = vst [vmem:[%s693 + $0x60] sm:$0xff] %v2767
        %2851 = vst [vmem:[%s693 + $0x68] sm:$0xff] %v2769
        %2852 = vst [vmem:[%s693 + $0x70] sm:$0xff] %v2771
        %2853 = vst [vmem:[%s693 + $0x78] sm:$0xff] %v2773
        %2854 = vst [vmem:[%s693 + $0x80] sm:$0xff] %v2775
        %2855 = vst [vmem:[%s693 + $0x88] sm:$0xff] %v2777
        %2856 = vst [vmem:[%s693 + $0x90] sm:$0xff] %v2779
        %2857 = vst [vmem:[%s693 + $0x98] sm:$0xff] %v2781
        %2858 = vst [vmem:[%s693 + $0xa0] sm:$0xff] %v2783
        %2859 = vst [vmem:[%s693 + $0xa8] sm:$0xff] %v2785
        %2860 = vst [vmem:[%s693 + $0xb0] sm:$0xff] %v2787
        %2861 = vst [vmem:[%s693 + $0xb8] sm:$0xff] %v2789
        %2862 = vst [vmem:[%s693 + $0xc0] sm:$0xff] %v2791
        %2863 = vst [vmem:[%s693 + $0xc8] sm:$0xff] %v2793
        %2864 = vst [vmem:[%s693 + $0xd0] sm:$0xff] %v2795
        %2865 = vst [vmem:[%s693 + $0xd8] sm:$0xff] %v2797
        %2866 = vst [vmem:[%s693 + $0xe0] sm:$0xff] %v2799
        %2867 = vst [vmem:[%s693 + $0xe8] sm:$0xff] %v2801
        %2868 = vst [vmem:[%s693 + $0xf0] sm:$0xff] %v2803
        %2869 = vst [vmem:[%s693 + $0xf8] sm:$0xff] %v2805
        %v2870 = vld [vmem:[%s681] sm:$0xff]
        %v2871 = vld [vmem:[%s681 + $0x8] sm:$0xff]
        %v2872 = vld [vmem:[%s681 + $0x10] sm:$0xff]
        %v2873 = vld [vmem:[%s681 + $0x18] sm:$0xff]
        %v2874 = vld [vmem:[%s681 + $0x20] sm:$0xff]
        %v2875 = vld [vmem:[%s681 + $0x28] sm:$0xff]
        %v2876 = vld [vmem:[%s681 + $0x30] sm:$0xff]
        %v2877 = vld [vmem:[%s681 + $0x38] sm:$0xff]
        %v2878 = vld [vmem:[%s681 + $0x40] sm:$0xff]
        %v2879 = vld [vmem:[%s681 + $0x48] sm:$0xff]
        %v2880 = vld [vmem:[%s681 + $0x50] sm:$0xff]
        %v2881 = vld [vmem:[%s681 + $0x58] sm:$0xff]
        %v2882 = vld [vmem:[%s681 + $0x60] sm:$0xff]
        %v2883 = vld [vmem:[%s681 + $0x68] sm:$0xff]
        %v2884 = vld [vmem:[%s681 + $0x70] sm:$0xff]
        %v2885 = vld [vmem:[%s681 + $0x78] sm:$0xff]
        %v2886 = vld [vmem:[%s681 + $0x80] sm:$0xff]
        %v2887 = vld [vmem:[%s681 + $0x88] sm:$0xff]
        %v2888 = vld [vmem:[%s681 + $0x90] sm:$0xff]
        %v2889 = vld [vmem:[%s681 + $0x98] sm:$0xff]
        %v2890 = vld [vmem:[%s681 + $0xa0] sm:$0xff]
        %v2891 = vld [vmem:[%s681 + $0xa8] sm:$0xff]
        %v2892 = vld [vmem:[%s681 + $0xb0] sm:$0xff]
        %v2893 = vld [vmem:[%s681 + $0xb8] sm:$0xff]
        %v2894 = vld [vmem:[%s681 + $0xc0] sm:$0xff]
        %v2895 = vld [vmem:[%s681 + $0xc8] sm:$0xff]
        %v2896 = vld [vmem:[%s681 + $0xd0] sm:$0xff]
        %v2897 = vld [vmem:[%s681 + $0xd8] sm:$0xff]
        %v2898 = vld [vmem:[%s681 + $0xe0] sm:$0xff]
        %v2899 = vld [vmem:[%s681 + $0xe8] sm:$0xff]
        %v2900 = vld [vmem:[%s681 + $0xf0] sm:$0xff]
        %v2901 = vld [vmem:[%s681 + $0xf8] sm:$0xff]
        %v2902 = vmul.f32 %v2743, %v2870
        %v2903 = vmul.f32 %v2745, %v2871
        %v2904 = vmul.f32 %v2747, %v2872
        %v2905 = vmul.f32 %v2749, %v2873
        %v2906 = vmul.f32 %v2751, %v2874
        %v2907 = vmul.f32 %v2753, %v2875
        %v2908 = vmul.f32 %v2755, %v2876
        %v2909 = vmul.f32 %v2757, %v2877
        %v2910 = vmul.f32 %v2759, %v2878
        %v2911 = vmul.f32 %v2761, %v2879
        %v2912 = vmul.f32 %v2763, %v2880
        %v2913 = vmul.f32 %v2765, %v2881
        %v2914 = vmul.f32 %v2767, %v2882
        %v2915 = vmul.f32 %v2769, %v2883
        %v2916 = vmul.f32 %v2771, %v2884
        %v2917 = vmul.f32 %v2773, %v2885
        %v2918 = vmul.f32 %v2775, %v2886
        %v2919 = vmul.f32 %v2777, %v2887
        %v2920 = vmul.f32 %v2779, %v2888
        %v2921 = vmul.f32 %v2781, %v2889
        %v2922 = vmul.f32 %v2783, %v2890
        %v2923 = vmul.f32 %v2785, %v2891
        %v2924 = vmul.f32 %v2787, %v2892
        %v2925 = vmul.f32 %v2789, %v2893
        %v2926 = vmul.f32 %v2791, %v2894
        %v2927 = vmul.f32 %v2793, %v2895
        %v2928 = vmul.f32 %v2795, %v2896
        %v2929 = vmul.f32 %v2797, %v2897
        %v2930 = vmul.f32 %v2799, %v2898
        %v2931 = vmul.f32 %v2801, %v2899
        %v2932 = vmul.f32 %v2803, %v2900
        %v2933 = vmul.f32 %v2805, %v2901
        %v2934 = vadd.f32 %v2485, %v2902
        %v2935 = vadd.f32 %v2487, %v2903
        %v2936 = vadd.f32 %v2490, %v2904
        %v2937 = vadd.f32 %v2492, %v2905
        %v2938 = vadd.f32 %v2495, %v2906
        %v2939 = vadd.f32 %v2497, %v2907
        %v2940 = vadd.f32 %v2500, %v2908
        %v2941 = vadd.f32 %v2502, %v2909
        %v2942 = vadd.f32 %v2505, %v2910
        %v2943 = vadd.f32 %v2507, %v2911
        %v2944 = vadd.f32 %v2510, %v2912
        %v2945 = vadd.f32 %v2512, %v2913
        %v2946 = vadd.f32 %v2515, %v2914
        %v2947 = vadd.f32 %v2517, %v2915
        %v2948 = vadd.f32 %v2520, %v2916
        %v2949 = vadd.f32 %v2522, %v2917
        %v2950 = vadd.f32 %v2525, %v2918
        %v2951 = vadd.f32 %v2527, %v2919
        %v2952 = vadd.f32 %v2530, %v2920
        %v2953 = vadd.f32 %v2532, %v2921
        %v2954 = vadd.f32 %v2535, %v2922
        %v2955 = vadd.f32 %v2537, %v2923
        %v2956 = vadd.f32 %v2540, %v2924
        %v2957 = vadd.f32 %v2542, %v2925
        %v2958 = vadd.f32 %v2545, %v2926
        %v2959 = vadd.f32 %v2547, %v2927
        %v2960 = vadd.f32 %v2550, %v2928
        %v2961 = vadd.f32 %v2552, %v2929
        %v2962 = vadd.f32 %v2555, %v2930
        %v2963 = vadd.f32 %v2557, %v2931
        %v2964 = vadd.f32 %v2560, %v2932
        %v2965 = vadd.f32 %v2562, %v2933
        %v2966 = vpack.c.bf16 %v2935, %v2934
        %v2967 = vpack.c.bf16 %v2937, %v2936
        %v2968 = vpack.c.bf16 %v2939, %v2938
        %v2969 = vpack.c.bf16 %v2941, %v2940
        %v2970 = vpack.c.bf16 %v2943, %v2942
        %v2971 = vpack.c.bf16 %v2945, %v2944
        %v2972 = vpack.c.bf16 %v2947, %v2946
        %v2973 = vpack.c.bf16 %v2949, %v2948
        %v2974 = vpack.c.bf16 %v2951, %v2950
        %v2975 = vpack.c.bf16 %v2953, %v2952
        %v2976 = vpack.c.bf16 %v2955, %v2954
        %v2977 = vpack.c.bf16 %v2957, %v2956
        %v2978 = vpack.c.bf16 %v2959, %v2958
        %v2979 = vpack.c.bf16 %v2961, %v2960
        %v2980 = vpack.c.bf16 %v2963, %v2962
        %v2981 = vpack.c.bf16 %v2965, %v2964
        %v2982 = vld [vmem:[#allocation8] sm:$0xff]
        %v2983 = vld [vmem:[#allocation8 + $0x8] sm:$0xff]
        %v2984 = vld [vmem:[#allocation8 + $0x10] sm:$0xff]
        %v2985 = vld [vmem:[#allocation8 + $0x18] sm:$0xff]
        %v2986 = vld [vmem:[#allocation8 + $0x20] sm:$0xff]
        %v2987 = vld [vmem:[#allocation8 + $0x28] sm:$0xff]
        %v2988 = vld [vmem:[#allocation8 + $0x30] sm:$0xff]
        %v2989 = vld [vmem:[#allocation8 + $0x38] sm:$0xff]
        %v2990 = vld [vmem:[#allocation8 + $0x40] sm:$0xff]
        %v2991 = vld [vmem:[#allocation8 + $0x48] sm:$0xff]
        %v2992 = vld [vmem:[#allocation8 + $0x50] sm:$0xff]
        %v2993 = vld [vmem:[#allocation8 + $0x58] sm:$0xff]
        %v2994 = vld [vmem:[#allocation8 + $0x60] sm:$0xff]
        %v2995 = vld [vmem:[#allocation8 + $0x68] sm:$0xff]
        %v2996 = vld [vmem:[#allocation8 + $0x70] sm:$0xff]
        %v2997 = vld [vmem:[#allocation8 + $0x78] sm:$0xff]
        %v2998 = vld [vmem:[#allocation10] sm:$0x3]
        %v3000 = vperm.slane %v2998, 0
        %v3001 = vperm.slane %v2998, 1
        %v3020 = vunpack.c.l.b16 %v2982
        %v3021 = vunpack.c.h.b16 %v2982
        %v3022 = vunpack.c.l.b16 %v2983
        %v3023 = vunpack.c.h.b16 %v2983
        %v3024 = vunpack.c.l.b16 %v2984
        %v3025 = vunpack.c.h.b16 %v2984
        %v3026 = vunpack.c.l.b16 %v2985
        %v3027 = vunpack.c.h.b16 %v2985
        %v3028 = vunpack.c.l.b16 %v2986
        %v3029 = vunpack.c.h.b16 %v2986
        %v3030 = vunpack.c.l.b16 %v2987
        %v3031 = vunpack.c.h.b16 %v2987
        %v3032 = vunpack.c.l.b16 %v2988
        %v3033 = vunpack.c.h.b16 %v2988
        %v3034 = vunpack.c.l.b16 %v2989
        %v3035 = vunpack.c.h.b16 %v2989
        %v3036 = vunpack.c.l.b16 %v2990
        %v3037 = vunpack.c.h.b16 %v2990
        %v3038 = vunpack.c.l.b16 %v2991
        %v3039 = vunpack.c.h.b16 %v2991
        %v3040 = vunpack.c.l.b16 %v2992
        %v3041 = vunpack.c.h.b16 %v2992
        %v3042 = vunpack.c.l.b16 %v2993
        %v3043 = vunpack.c.h.b16 %v2993
        %v3044 = vunpack.c.l.b16 %v2994
        %v3045 = vunpack.c.h.b16 %v2994
        %v3046 = vunpack.c.l.b16 %v2995
        %v3047 = vunpack.c.h.b16 %v2995
        %v3048 = vunpack.c.l.b16 %v2996
        %v3049 = vunpack.c.h.b16 %v2996
        %v3050 = vunpack.c.l.b16 %v2997
        %v3051 = vunpack.c.h.b16 %v2997
        %v3052 = vpack.c.b16 %v3022, %v3020
        %v3053 = vpack.c.b16 %v3023, %v3021
        %v3054 = vpack.c.b16 %v3026, %v3024
        %v3055 = vpack.c.b16 %v3027, %v3025
        %v3056 = vpack.c.b16 %v3030, %v3028
        %v3057 = vpack.c.b16 %v3031, %v3029
        %v3058 = vpack.c.b16 %v3034, %v3032
        %v3059 = vpack.c.b16 %v3035, %v3033
        %v3060 = vpack.c.b16 %v3038, %v3036
        %v3061 = vpack.c.b16 %v3039, %v3037
        %v3062 = vpack.c.b16 %v3042, %v3040
        %v3063 = vpack.c.b16 %v3043, %v3041
        %v3064 = vpack.c.b16 %v3046, %v3044
        %v3065 = vpack.c.b16 %v3047, %v3045
        %v3066 = vpack.c.b16 %v3050, %v3048
        %v3067 = vpack.c.b16 %v3051, %v3049
        %3084 = vmatpush.bf16.msra.mxu0 %v3066
        %3085 = vmatpush.bf16.msra.mxu0 %v3064
        %3086 = vmatpush.bf16.msra.mxu0 %v3062
        %3087 = vmatpush.bf16.msra.mxu0 %v3060
        %3088 = vmatpush.bf16.msra.mxu0 %v3058
        %3089 = vmatpush.bf16.msra.mxu0 %v3056
        %3090 = vmatpush.bf16.msra.mxu0 %v3054
        %3091 = vmatpush.bf16.msra.mxu0 %v3052
        %3092 = vmatmul.bf16.gmra.mxu0 %v2966
        %v3093 = vpop.f32.mrf.mxu0
        %v3094 = vadd.f32 %v3000, %v3093
        %v3095 = vpop.f32.mrf.mxu0
        %v3096 = vadd.f32 %v3000, %v3095
        %3097 = vmatmul.bf16.gmra.mxu0 %v2967
        %v3098 = vpop.f32.mrf.mxu0
        %v3099 = vadd.f32 %v3000, %v3098
        %v3100 = vpop.f32.mrf.mxu0
        %v3101 = vadd.f32 %v3000, %v3100
        %3102 = vmatmul.bf16.gmra.mxu0 %v2968
        %v3103 = vpop.f32.mrf.mxu0
        %v3104 = vadd.f32 %v3000, %v3103
        %v3105 = vpop.f32.mrf.mxu0
        %v3106 = vadd.f32 %v3000, %v3105
        %3107 = vmatmul.bf16.gmra.mxu0 %v2969
        %v3108 = vpop.f32.mrf.mxu0
        %v3109 = vadd.f32 %v3000, %v3108
        %v3110 = vpop.f32.mrf.mxu0
        %v3111 = vadd.f32 %v3000, %v3110
        %3112 = vmatmul.bf16.gmra.mxu0 %v2970
        %v3113 = vpop.f32.mrf.mxu0
        %v3114 = vadd.f32 %v3000, %v3113
        %v3115 = vpop.f32.mrf.mxu0
        %v3116 = vadd.f32 %v3000, %v3115
        %3117 = vmatmul.bf16.gmra.mxu0 %v2971
        %v3118 = vpop.f32.mrf.mxu0
        %v3119 = vadd.f32 %v3000, %v3118
        %v3120 = vpop.f32.mrf.mxu0
        %v3121 = vadd.f32 %v3000, %v3120
        %3122 = vmatmul.bf16.gmra.mxu0 %v2972
        %v3123 = vpop.f32.mrf.mxu0
        %v3124 = vadd.f32 %v3000, %v3123
        %v3125 = vpop.f32.mrf.mxu0
        %v3126 = vadd.f32 %v3000, %v3125
        %3127 = vmatmul.bf16.gmra.mxu0 %v2973
        %v3128 = vpop.f32.mrf.mxu0
        %v3129 = vadd.f32 %v3000, %v3128
        %v3130 = vpop.f32.mrf.mxu0
        %v3131 = vadd.f32 %v3000, %v3130
        %3132 = vmatmul.bf16.gmra.mxu0 %v2974
        %v3133 = vpop.f32.mrf.mxu0
        %v3134 = vadd.f32 %v3000, %v3133
        %v3135 = vpop.f32.mrf.mxu0
        %v3136 = vadd.f32 %v3000, %v3135
        %3137 = vmatmul.bf16.gmra.mxu0 %v2975
        %v3138 = vpop.f32.mrf.mxu0
        %v3139 = vadd.f32 %v3000, %v3138
        %v3140 = vpop.f32.mrf.mxu0
        %v3141 = vadd.f32 %v3000, %v3140
        %3142 = vmatmul.bf16.gmra.mxu0 %v2976
        %v3143 = vpop.f32.mrf.mxu0
        %v3144 = vadd.f32 %v3000, %v3143
        %v3145 = vpop.f32.mrf.mxu0
        %v3146 = vadd.f32 %v3000, %v3145
        %3147 = vmatmul.bf16.gmra.mxu0 %v2977
        %v3148 = vpop.f32.mrf.mxu0
        %v3149 = vadd.f32 %v3000, %v3148
        %v3150 = vpop.f32.mrf.mxu0
        %v3151 = vadd.f32 %v3000, %v3150
        %3152 = vmatmul.bf16.gmra.mxu0 %v2978
        %v3153 = vpop.f32.mrf.mxu0
        %v3154 = vadd.f32 %v3000, %v3153
        %v3155 = vpop.f32.mrf.mxu0
        %v3156 = vadd.f32 %v3000, %v3155
        %3157 = vmatmul.bf16.gmra.mxu0 %v2979
        %v3158 = vpop.f32.mrf.mxu0
        %v3159 = vadd.f32 %v3000, %v3158
        %v3160 = vpop.f32.mrf.mxu0
        %v3161 = vadd.f32 %v3000, %v3160
        %3162 = vmatmul.bf16.gmra.mxu0 %v2980
        %v3163 = vpop.f32.mrf.mxu0
        %v3164 = vadd.f32 %v3000, %v3163
        %v3165 = vpop.f32.mrf.mxu0
        %v3166 = vadd.f32 %v3000, %v3165
        %3167 = vmatmul.bf16.gmra.mxu0 %v2981
        %v3168 = vpop.f32.mrf.mxu0
        %v3169 = vadd.f32 %v3000, %v3168
        %v3170 = vpop.f32.mrf.mxu0
        %v3171 = vadd.f32 %v3000, %v3170
        %3172 = vdwg.mxu0
        %3173 = vmatpush.bf16.msra.mxu0 %v3067
        %3174 = vmatpush.bf16.msra.mxu0 %v3065
        %3175 = vmatpush.bf16.msra.mxu0 %v3063
        %3176 = vmatpush.bf16.msra.mxu0 %v3061
        %3177 = vmatpush.bf16.msra.mxu0 %v3059
        %3178 = vmatpush.bf16.msra.mxu0 %v3057
        %3179 = vmatpush.bf16.msra.mxu0 %v3055
        %3180 = vmatpush.bf16.msra.mxu0 %v3053
        %3181 = vmatmul.bf16.gmra.mxu0 %v2966
        %v3182 = vpop.f32.mrf.mxu0
        %v3183 = vadd.f32 %v3001, %v3182
        %v3184 = vpop.f32.mrf.mxu0
        %v3185 = vadd.f32 %v3001, %v3184
        %3186 = vmatmul.bf16.gmra.mxu0 %v2967
        %v3187 = vpop.f32.mrf.mxu0
        %v3188 = vadd.f32 %v3001, %v3187
        %v3189 = vpop.f32.mrf.mxu0
        %v3190 = vadd.f32 %v3001, %v3189
        %3191 = vmatmul.bf16.gmra.mxu0 %v2968
        %v3192 = vpop.f32.mrf.mxu0
        %v3193 = vadd.f32 %v3001, %v3192
        %v3194 = vpop.f32.mrf.mxu0
        %v3195 = vadd.f32 %v3001, %v3194
        %3196 = vmatmul.bf16.gmra.mxu0 %v2969
        %v3197 = vpop.f32.mrf.mxu0
        %v3198 = vadd.f32 %v3001, %v3197
        %v3199 = vpop.f32.mrf.mxu0
        %v3200 = vadd.f32 %v3001, %v3199
        %3201 = vmatmul.bf16.gmra.mxu0 %v2970
        %v3202 = vpop.f32.mrf.mxu0
        %v3203 = vadd.f32 %v3001, %v3202
        %v3204 = vpop.f32.mrf.mxu0
        %v3205 = vadd.f32 %v3001, %v3204
        %3206 = vmatmul.bf16.gmra.mxu0 %v2971
        %v3207 = vpop.f32.mrf.mxu0
        %v3208 = vadd.f32 %v3001, %v3207
        %v3209 = vpop.f32.mrf.mxu0
        %v3210 = vadd.f32 %v3001, %v3209
        %3211 = vmatmul.bf16.gmra.mxu0 %v2972
        %v3212 = vpop.f32.mrf.mxu0
        %v3213 = vadd.f32 %v3001, %v3212
        %v3214 = vpop.f32.mrf.mxu0
        %v3215 = vadd.f32 %v3001, %v3214
        %3216 = vmatmul.bf16.gmra.mxu0 %v2973
        %v3217 = vpop.f32.mrf.mxu0
        %v3218 = vadd.f32 %v3001, %v3217
        %v3219 = vpop.f32.mrf.mxu0
        %v3220 = vadd.f32 %v3001, %v3219
        %3221 = vmatmul.bf16.gmra.mxu0 %v2974
        %v3222 = vpop.f32.mrf.mxu0
        %v3223 = vadd.f32 %v3001, %v3222
        %v3224 = vpop.f32.mrf.mxu0
        %v3225 = vadd.f32 %v3001, %v3224
        %3226 = vmatmul.bf16.gmra.mxu0 %v2975
        %v3227 = vpop.f32.mrf.mxu0
        %v3228 = vadd.f32 %v3001, %v3227
        %v3229 = vpop.f32.mrf.mxu0
        %v3230 = vadd.f32 %v3001, %v3229
        %3231 = vmatmul.bf16.gmra.mxu0 %v2976
        %v3232 = vpop.f32.mrf.mxu0
        %v3233 = vadd.f32 %v3001, %v3232
        %v3234 = vpop.f32.mrf.mxu0
        %v3235 = vadd.f32 %v3001, %v3234
        %3236 = vmatmul.bf16.gmra.mxu0 %v2977
        %v3237 = vpop.f32.mrf.mxu0
        %v3238 = vadd.f32 %v3001, %v3237
        %v3239 = vpop.f32.mrf.mxu0
        %v3240 = vadd.f32 %v3001, %v3239
        %3241 = vmatmul.bf16.gmra.mxu0 %v2978
        %v3242 = vpop.f32.mrf.mxu0
        %v3243 = vadd.f32 %v3001, %v3242
        %v3244 = vpop.f32.mrf.mxu0
        %v3245 = vadd.f32 %v3001, %v3244
        %3246 = vmatmul.bf16.gmra.mxu0 %v2979
        %v3247 = vpop.f32.mrf.mxu0
        %v3248 = vadd.f32 %v3001, %v3247
        %v3249 = vpop.f32.mrf.mxu0
        %v3250 = vadd.f32 %v3001, %v3249
        %3251 = vmatmul.bf16.gmra.mxu0 %v2980
        %v3252 = vpop.f32.mrf.mxu0
        %v3253 = vadd.f32 %v3001, %v3252
        %v3254 = vpop.f32.mrf.mxu0
        %v3255 = vadd.f32 %v3001, %v3254
        %3256 = vmatmul.bf16.gmra.mxu0 %v2981
        %v3257 = vpop.f32.mrf.mxu0
        %v3258 = vadd.f32 %v3001, %v3257
        %v3259 = vpop.f32.mrf.mxu0
        %v3260 = vadd.f32 %v3001, %v3259
        %3261 = vdwg.mxu0
        %v3262 = vtanh.pop %v3094
        %v3263 = vtanh.pop %v3183
        %v3264 = vtanh.pop %v3096
        %v3265 = vtanh.pop %v3185
        %v3266 = vtanh.pop %v3099
        %v3267 = vtanh.pop %v3188
        %v3268 = vtanh.pop %v3101
        %v3269 = vtanh.pop %v3190
        %v3270 = vtanh.pop %v3104
        %v3271 = vtanh.pop %v3193
        %v3272 = vtanh.pop %v3106
        %v3273 = vtanh.pop %v3195
        %v3274 = vtanh.pop %v3109
        %v3275 = vtanh.pop %v3198
        %v3276 = vtanh.pop %v3111
        %v3277 = vtanh.pop %v3200
        %v3278 = vtanh.pop %v3114
        %v3279 = vtanh.pop %v3203
        %v3280 = vtanh.pop %v3116
        %v3281 = vtanh.pop %v3205
        %v3282 = vtanh.pop %v3119
        %v3283 = vtanh.pop %v3208
        %v3284 = vtanh.pop %v3121
        %v3285 = vtanh.pop %v3210
        %v3286 = vtanh.pop %v3124
        %v3287 = vtanh.pop %v3213
        %v3288 = vtanh.pop %v3126
        %v3289 = vtanh.pop %v3215
        %v3290 = vtanh.pop %v3129
        %v3291 = vtanh.pop %v3218
        %v3292 = vtanh.pop %v3131
        %v3293 = vtanh.pop %v3220
        %v3294 = vtanh.pop %v3134
        %v3295 = vtanh.pop %v3223
        %v3296 = vtanh.pop %v3136
        %v3297 = vtanh.pop %v3225
        %v3298 = vtanh.pop %v3139
        %v3299 = vtanh.pop %v3228
        %v3300 = vtanh.pop %v3141
        %v3301 = vtanh.pop %v3230
        %v3302 = vtanh.pop %v3144
        %v3303 = vtanh.pop %v3233
        %v3304 = vtanh.pop %v3146
        %v3305 = vtanh.pop %v3235
        %v3306 = vtanh.pop %v3149
        %v3307 = vtanh.pop %v3238
        %v3308 = vtanh.pop %v3151
        %v3309 = vtanh.pop %v3240
        %v3310 = vtanh.pop %v3154
        %v3311 = vtanh.pop %v3243
        %v3312 = vtanh.pop %v3156
        %v3313 = vtanh.pop %v3245
        %v3314 = vtanh.pop %v3159
        %v3315 = vtanh.pop %v3248
        %v3316 = vtanh.pop %v3161
        %v3317 = vtanh.pop %v3250
        %v3318 = vtanh.pop %v3164
        %v3319 = vtanh.pop %v3253
        %v3320 = vtanh.pop %v3166
        %v3321 = vtanh.pop %v3255
        %v3322 = vtanh.pop %v3169
        %v3323 = vtanh.pop %v3258
        %v3324 = vtanh.pop %v3171
        %v3325 = vtanh.pop %v3260
        %v3326 = vpack.c.bf16 %v3264, %v3262
        %v3327 = vpack.c.bf16 %v3265, %v3263
        %v3328 = vpack.c.bf16 %v3268, %v3266
        %v3329 = vpack.c.bf16 %v3269, %v3267
        %v3330 = vpack.c.bf16 %v3272, %v3270
        %v3331 = vpack.c.bf16 %v3273, %v3271
        %v3332 = vpack.c.bf16 %v3276, %v3274
        %v3333 = vpack.c.bf16 %v3277, %v3275
        %v3334 = vpack.c.bf16 %v3280, %v3278
        %v3335 = vpack.c.bf16 %v3281, %v3279
        %v3336 = vpack.c.bf16 %v3284, %v3282
        %v3337 = vpack.c.bf16 %v3285, %v3283
        %v3338 = vpack.c.bf16 %v3288, %v3286
        %v3339 = vpack.c.bf16 %v3289, %v3287
        %v3340 = vpack.c.bf16 %v3292, %v3290
        %v3341 = vpack.c.bf16 %v3293, %v3291
        %v3342 = vpack.c.bf16 %v3296, %v3294
        %v3343 = vpack.c.bf16 %v3297, %v3295
        %v3344 = vpack.c.bf16 %v3300, %v3298
        %v3345 = vpack.c.bf16 %v3301, %v3299
        %v3346 = vpack.c.bf16 %v3304, %v3302
        %v3347 = vpack.c.bf16 %v3305, %v3303
        %v3348 = vpack.c.bf16 %v3308, %v3306
        %v3349 = vpack.c.bf16 %v3309, %v3307
        %v3350 = vpack.c.bf16 %v3312, %v3310
        %v3351 = vpack.c.bf16 %v3313, %v3311
        %v3352 = vpack.c.bf16 %v3316, %v3314
        %v3353 = vpack.c.bf16 %v3317, %v3315
        %v3354 = vpack.c.bf16 %v3320, %v3318
        %v3355 = vpack.c.bf16 %v3321, %v3319
        %v3356 = vpack.c.bf16 %v3324, %v3322
        %v3357 = vpack.c.bf16 %v3325, %v3323
        %v3358 = vld [vmem:[%s10] sm:$0xff]
        %v3359 = vld [vmem:[%s10 + $0x8] sm:$0xff]
        %v3360 = vld [vmem:[%s10 + $0x10] sm:$0xff]
        %v3361 = vld [vmem:[%s10 + $0x18] sm:$0xff]
        %v3362 = vld [vmem:[%s10 + $0x20] sm:$0xff]
        %v3363 = vld [vmem:[%s10 + $0x28] sm:$0xff]
        %v3364 = vld [vmem:[%s10 + $0x30] sm:$0xff]
        %v3365 = vld [vmem:[%s10 + $0x38] sm:$0xff]
        %v3366 = vld [vmem:[%s10 + $0x40] sm:$0xff]
        %v3367 = vld [vmem:[%s10 + $0x48] sm:$0xff]
        %v3368 = vld [vmem:[%s10 + $0x50] sm:$0xff]
        %v3369 = vld [vmem:[%s10 + $0x58] sm:$0xff]
        %v3370 = vld [vmem:[%s10 + $0x60] sm:$0xff]
        %v3371 = vld [vmem:[%s10 + $0x68] sm:$0xff]
        %v3372 = vld [vmem:[%s10 + $0x70] sm:$0xff]
        %v3373 = vld [vmem:[%s10 + $0x78] sm:$0xff]
        %v3374 = vld [vmem:[%s10 + $0x80] sm:$0xff]
        %v3375 = vld [vmem:[%s10 + $0x88] sm:$0xff]
        %v3376 = vld [vmem:[%s10 + $0x90] sm:$0xff]
        %v3377 = vld [vmem:[%s10 + $0x98] sm:$0xff]
        %v3378 = vld [vmem:[%s10 + $0xa0] sm:$0xff]
        %v3379 = vld [vmem:[%s10 + $0xa8] sm:$0xff]
        %v3380 = vld [vmem:[%s10 + $0xb0] sm:$0xff]
        %v3381 = vld [vmem:[%s10 + $0xb8] sm:$0xff]
        %v3382 = vld [vmem:[%s10 + $0xc0] sm:$0xff]
        %v3383 = vld [vmem:[%s10 + $0xc8] sm:$0xff]
        %v3384 = vld [vmem:[%s10 + $0xd0] sm:$0xff]
        %v3385 = vld [vmem:[%s10 + $0xd8] sm:$0xff]
        %v3386 = vld [vmem:[%s10 + $0xe0] sm:$0xff]
        %v3387 = vld [vmem:[%s10 + $0xe8] sm:$0xff]
        %v3388 = vld [vmem:[%s10 + $0xf0] sm:$0xff]
        %v3389 = vld [vmem:[%s10 + $0xf8] sm:$0xff]
        %v3390 = vld [vmem:[#allocation11] sm:$0x3]
        %v3392 = vperm.slane %v3390, 0
        %v3393 = vperm.slane %v3390, 1
        %v3428 = vunpack.c.l.b16 %v3358
        %v3429 = vunpack.c.h.b16 %v3358
        %v3430 = vunpack.c.l.b16 %v3359
        %v3431 = vunpack.c.h.b16 %v3359
        %v3432 = vunpack.c.l.b16 %v3360
        %v3433 = vunpack.c.h.b16 %v3360
        %v3434 = vunpack.c.l.b16 %v3361
        %v3435 = vunpack.c.h.b16 %v3361
        %v3436 = vunpack.c.l.b16 %v3362
        %v3437 = vunpack.c.h.b16 %v3362
        %v3438 = vunpack.c.l.b16 %v3363
        %v3439 = vunpack.c.h.b16 %v3363
        %v3440 = vunpack.c.l.b16 %v3364
        %v3441 = vunpack.c.h.b16 %v3364
        %v3442 = vunpack.c.l.b16 %v3365
        %v3443 = vunpack.c.h.b16 %v3365
        %v3444 = vunpack.c.l.b16 %v3366
        %v3445 = vunpack.c.h.b16 %v3366
        %v3446 = vunpack.c.l.b16 %v3367
        %v3447 = vunpack.c.h.b16 %v3367
        %v3448 = vunpack.c.l.b16 %v3368
        %v3449 = vunpack.c.h.b16 %v3368
        %v3450 = vunpack.c.l.b16 %v3369
        %v3451 = vunpack.c.h.b16 %v3369
        %v3452 = vunpack.c.l.b16 %v3370
        %v3453 = vunpack.c.h.b16 %v3370
        %v3454 = vunpack.c.l.b16 %v3371
        %v3455 = vunpack.c.h.b16 %v3371
        %v3456 = vunpack.c.l.b16 %v3372
        %v3457 = vunpack.c.h.b16 %v3372
        %v3458 = vunpack.c.l.b16 %v3373
        %v3459 = vunpack.c.h.b16 %v3373
        %v3460 = vunpack.c.l.b16 %v3374
        %v3461 = vunpack.c.h.b16 %v3374
        %v3462 = vunpack.c.l.b16 %v3375
        %v3463 = vunpack.c.h.b16 %v3375
        %v3464 = vunpack.c.l.b16 %v3376
        %v3465 = vunpack.c.h.b16 %v3376
        %v3466 = vunpack.c.l.b16 %v3377
        %v3467 = vunpack.c.h.b16 %v3377
        %v3468 = vunpack.c.l.b16 %v3378
        %v3469 = vunpack.c.h.b16 %v3378
        %v3470 = vunpack.c.l.b16 %v3379
        %v3471 = vunpack.c.h.b16 %v3379
        %v3472 = vunpack.c.l.b16 %v3380
        %v3473 = vunpack.c.h.b16 %v3380
        %v3474 = vunpack.c.l.b16 %v3381
        %v3475 = vunpack.c.h.b16 %v3381
        %v3476 = vunpack.c.l.b16 %v3382
        %v3477 = vunpack.c.h.b16 %v3382
        %v3478 = vunpack.c.l.b16 %v3383
        %v3479 = vunpack.c.h.b16 %v3383
        %v3480 = vunpack.c.l.b16 %v3384
        %v3481 = vunpack.c.h.b16 %v3384
        %v3482 = vunpack.c.l.b16 %v3385
        %v3483 = vunpack.c.h.b16 %v3385
        %v3484 = vunpack.c.l.b16 %v3386
        %v3485 = vunpack.c.h.b16 %v3386
        %v3486 = vunpack.c.l.b16 %v3387
        %v3487 = vunpack.c.h.b16 %v3387
        %v3488 = vunpack.c.l.b16 %v3388
        %v3489 = vunpack.c.h.b16 %v3388
        %v3490 = vunpack.c.l.b16 %v3389
        %v3491 = vunpack.c.h.b16 %v3389
        %v3492 = vpack.c.b16 %v3430, %v3428
        %v3493 = vpack.c.b16 %v3431, %v3429
        %v3494 = vpack.c.b16 %v3434, %v3432
        %v3495 = vpack.c.b16 %v3435, %v3433
        %v3496 = vpack.c.b16 %v3438, %v3436
        %v3497 = vpack.c.b16 %v3439, %v3437
        %v3498 = vpack.c.b16 %v3442, %v3440
        %v3499 = vpack.c.b16 %v3443, %v3441
        %v3500 = vpack.c.b16 %v3446, %v3444
        %v3501 = vpack.c.b16 %v3447, %v3445
        %v3502 = vpack.c.b16 %v3450, %v3448
        %v3503 = vpack.c.b16 %v3451, %v3449
        %v3504 = vpack.c.b16 %v3454, %v3452
        %v3505 = vpack.c.b16 %v3455, %v3453
        %v3506 = vpack.c.b16 %v3458, %v3456
        %v3507 = vpack.c.b16 %v3459, %v3457
        %v3508 = vpack.c.b16 %v3462, %v3460
        %v3509 = vpack.c.b16 %v3463, %v3461
        %v3510 = vpack.c.b16 %v3466, %v3464
        %v3511 = vpack.c.b16 %v3467, %v3465
        %v3512 = vpack.c.b16 %v3470, %v3468
        %v3513 = vpack.c.b16 %v3471, %v3469
        %v3514 = vpack.c.b16 %v3474, %v3472
        %v3515 = vpack.c.b16 %v3475, %v3473
        %v3516 = vpack.c.b16 %v3478, %v3476
        %v3517 = vpack.c.b16 %v3479, %v3477
        %v3518 = vpack.c.b16 %v3482, %v3480
        %v3519 = vpack.c.b16 %v3483, %v3481
        %v3520 = vpack.c.b16 %v3486, %v3484
        %v3521 = vpack.c.b16 %v3487, %v3485
        %v3522 = vpack.c.b16 %v3490, %v3488
        %v3523 = vpack.c.b16 %v3491, %v3489
        %3556 = vmatpush.bf16.msra.mxu0 %v3506
        %3557 = vmatpush.bf16.msra.mxu0 %v3504
        %3558 = vmatpush.bf16.msra.mxu0 %v3502
        %3559 = vmatpush.bf16.msra.mxu0 %v3500
        %3560 = vmatpush.bf16.msra.mxu0 %v3498
        %3561 = vmatpush.bf16.msra.mxu0 %v3496
        %3562 = vmatpush.bf16.msra.mxu0 %v3494
        %3563 = vmatpush.bf16.msra.mxu0 %v3492
        %3564 = vmatmul.bf16.gmra.mxu0 %v3326
        %v3565 = vpop.f32.mrf.mxu0
        %v3566 = vadd.f32 %v3392, %v3565
        %v3567 = vpop.f32.mrf.mxu0
        %v3568 = vadd.f32 %v3392, %v3567
        %3569 = vmatmul.bf16.gmra.mxu0 %v3328
        %v3570 = vpop.f32.mrf.mxu0
        %v3571 = vadd.f32 %v3392, %v3570
        %v3572 = vpop.f32.mrf.mxu0
        %v3573 = vadd.f32 %v3392, %v3572
        %3574 = vmatmul.bf16.gmra.mxu0 %v3330
        %v3575 = vpop.f32.mrf.mxu0
        %v3576 = vadd.f32 %v3392, %v3575
        %v3577 = vpop.f32.mrf.mxu0
        %v3578 = vadd.f32 %v3392, %v3577
        %3579 = vmatmul.bf16.gmra.mxu0 %v3332
        %v3580 = vpop.f32.mrf.mxu0
        %v3581 = vadd.f32 %v3392, %v3580
        %v3582 = vpop.f32.mrf.mxu0
        %v3583 = vadd.f32 %v3392, %v3582
        %3584 = vmatmul.bf16.gmra.mxu0 %v3334
        %v3585 = vpop.f32.mrf.mxu0
        %v3586 = vadd.f32 %v3392, %v3585
        %v3587 = vpop.f32.mrf.mxu0
        %v3588 = vadd.f32 %v3392, %v3587
        %3589 = vmatmul.bf16.gmra.mxu0 %v3336
        %v3590 = vpop.f32.mrf.mxu0
        %v3591 = vadd.f32 %v3392, %v3590
        %v3592 = vpop.f32.mrf.mxu0
        %v3593 = vadd.f32 %v3392, %v3592
        %3594 = vmatmul.bf16.gmra.mxu0 %v3338
        %v3595 = vpop.f32.mrf.mxu0
        %v3596 = vadd.f32 %v3392, %v3595
        %v3597 = vpop.f32.mrf.mxu0
        %v3598 = vadd.f32 %v3392, %v3597
        %3599 = vmatmul.bf16.gmra.mxu0 %v3340
        %v3600 = vpop.f32.mrf.mxu0
        %v3601 = vadd.f32 %v3392, %v3600
        %v3602 = vpop.f32.mrf.mxu0
        %v3603 = vadd.f32 %v3392, %v3602
        %3604 = vmatmul.bf16.gmra.mxu0 %v3342
        %v3605 = vpop.f32.mrf.mxu0
        %v3606 = vadd.f32 %v3392, %v3605
        %v3607 = vpop.f32.mrf.mxu0
        %v3608 = vadd.f32 %v3392, %v3607
        %3609 = vmatmul.bf16.gmra.mxu0 %v3344
        %v3610 = vpop.f32.mrf.mxu0
        %v3611 = vadd.f32 %v3392, %v3610
        %v3612 = vpop.f32.mrf.mxu0
        %v3613 = vadd.f32 %v3392, %v3612
        %3614 = vmatmul.bf16.gmra.mxu0 %v3346
        %v3615 = vpop.f32.mrf.mxu0
        %v3616 = vadd.f32 %v3392, %v3615
        %v3617 = vpop.f32.mrf.mxu0
        %v3618 = vadd.f32 %v3392, %v3617
        %3619 = vmatmul.bf16.gmra.mxu0 %v3348
        %v3620 = vpop.f32.mrf.mxu0
        %v3621 = vadd.f32 %v3392, %v3620
        %v3622 = vpop.f32.mrf.mxu0
        %v3623 = vadd.f32 %v3392, %v3622
        %3624 = vmatmul.bf16.gmra.mxu0 %v3350
        %v3625 = vpop.f32.mrf.mxu0
        %v3626 = vadd.f32 %v3392, %v3625
        %v3627 = vpop.f32.mrf.mxu0
        %v3628 = vadd.f32 %v3392, %v3627
        %3629 = vmatmul.bf16.gmra.mxu0 %v3352
        %v3630 = vpop.f32.mrf.mxu0
        %v3631 = vadd.f32 %v3392, %v3630
        %v3632 = vpop.f32.mrf.mxu0
        %v3633 = vadd.f32 %v3392, %v3632
        %3634 = vmatmul.bf16.gmra.mxu0 %v3354
        %v3635 = vpop.f32.mrf.mxu0
        %v3636 = vadd.f32 %v3392, %v3635
        %v3637 = vpop.f32.mrf.mxu0
        %v3638 = vadd.f32 %v3392, %v3637
        %3639 = vmatmul.bf16.gmra.mxu0 %v3356
        %v3640 = vpop.f32.mrf.mxu0
        %v3641 = vadd.f32 %v3392, %v3640
        %v3642 = vpop.f32.mrf.mxu0
        %v3643 = vadd.f32 %v3392, %v3642
        %3644 = vdwg.mxu0
        %3645 = vmatpush.bf16.msra.mxu0 %v3522
        %3646 = vmatpush.bf16.msra.mxu0 %v3520
        %3647 = vmatpush.bf16.msra.mxu0 %v3518
        %3648 = vmatpush.bf16.msra.mxu0 %v3516
        %3649 = vmatpush.bf16.msra.mxu0 %v3514
        %3650 = vmatpush.bf16.msra.mxu0 %v3512
        %3651 = vmatpush.bf16.msra.mxu0 %v3510
        %3652 = vmatpush.bf16.msra.mxu0 %v3508
        %3653 = vmatmul.bf16.gmra.mxu0 %v3327
        %v3654 = vpop.f32.mrf.mxu0
        %v3655 = vadd.f32 %v3566, %v3654
        %v3656 = vpop.f32.mrf.mxu0
        %v3657 = vadd.f32 %v3568, %v3656
        %3658 = vmatmul.bf16.gmra.mxu0 %v3329
        %v3659 = vpop.f32.mrf.mxu0
        %v3660 = vadd.f32 %v3571, %v3659
        %v3661 = vpop.f32.mrf.mxu0
        %v3662 = vadd.f32 %v3573, %v3661
        %3663 = vmatmul.bf16.gmra.mxu0 %v3331
        %v3664 = vpop.f32.mrf.mxu0
        %v3665 = vadd.f32 %v3576, %v3664
        %v3666 = vpop.f32.mrf.mxu0
        %v3667 = vadd.f32 %v3578, %v3666
        %3668 = vmatmul.bf16.gmra.mxu0 %v3333
        %v3669 = vpop.f32.mrf.mxu0
        %v3670 = vadd.f32 %v3581, %v3669
        %v3671 = vpop.f32.mrf.mxu0
        %v3672 = vadd.f32 %v3583, %v3671
        %3673 = vmatmul.bf16.gmra.mxu0 %v3335
        %v3674 = vpop.f32.mrf.mxu0
        %v3675 = vadd.f32 %v3586, %v3674
        %v3676 = vpop.f32.mrf.mxu0
        %v3677 = vadd.f32 %v3588, %v3676
        %3678 = vmatmul.bf16.gmra.mxu0 %v3337
        %v3679 = vpop.f32.mrf.mxu0
        %v3680 = vadd.f32 %v3591, %v3679
        %v3681 = vpop.f32.mrf.mxu0
        %v3682 = vadd.f32 %v3593, %v3681
        %3683 = vmatmul.bf16.gmra.mxu0 %v3339
        %v3684 = vpop.f32.mrf.mxu0
        %v3685 = vadd.f32 %v3596, %v3684
        %v3686 = vpop.f32.mrf.mxu0
        %v3687 = vadd.f32 %v3598, %v3686
        %3688 = vmatmul.bf16.gmra.mxu0 %v3341
        %v3689 = vpop.f32.mrf.mxu0
        %v3690 = vadd.f32 %v3601, %v3689
        %v3691 = vpop.f32.mrf.mxu0
        %v3692 = vadd.f32 %v3603, %v3691
        %3693 = vmatmul.bf16.gmra.mxu0 %v3343
        %v3694 = vpop.f32.mrf.mxu0
        %v3695 = vadd.f32 %v3606, %v3694
        %v3696 = vpop.f32.mrf.mxu0
        %v3697 = vadd.f32 %v3608, %v3696
        %3698 = vmatmul.bf16.gmra.mxu0 %v3345
        %v3699 = vpop.f32.mrf.mxu0
        %v3700 = vadd.f32 %v3611, %v3699
        %v3701 = vpop.f32.mrf.mxu0
        %v3702 = vadd.f32 %v3613, %v3701
        %3703 = vmatmul.bf16.gmra.mxu0 %v3347
        %v3704 = vpop.f32.mrf.mxu0
        %v3705 = vadd.f32 %v3616, %v3704
        %v3706 = vpop.f32.mrf.mxu0
        %v3707 = vadd.f32 %v3618, %v3706
        %3708 = vmatmul.bf16.gmra.mxu0 %v3349
        %v3709 = vpop.f32.mrf.mxu0
        %v3710 = vadd.f32 %v3621, %v3709
        %v3711 = vpop.f32.mrf.mxu0
        %v3712 = vadd.f32 %v3623, %v3711
        %3713 = vmatmul.bf16.gmra.mxu0 %v3351
        %v3714 = vpop.f32.mrf.mxu0
        %v3715 = vadd.f32 %v3626, %v3714
        %v3716 = vpop.f32.mrf.mxu0
        %v3717 = vadd.f32 %v3628, %v3716
        %3718 = vmatmul.bf16.gmra.mxu0 %v3353
        %v3719 = vpop.f32.mrf.mxu0
        %v3720 = vadd.f32 %v3631, %v3719
        %v3721 = vpop.f32.mrf.mxu0
        %v3722 = vadd.f32 %v3633, %v3721
        %3723 = vmatmul.bf16.gmra.mxu0 %v3355
        %v3724 = vpop.f32.mrf.mxu0
        %v3725 = vadd.f32 %v3636, %v3724
        %v3726 = vpop.f32.mrf.mxu0
        %v3727 = vadd.f32 %v3638, %v3726
        %3728 = vmatmul.bf16.gmra.mxu0 %v3357
        %v3729 = vpop.f32.mrf.mxu0
        %v3730 = vadd.f32 %v3641, %v3729
        %v3731 = vpop.f32.mrf.mxu0
        %v3732 = vadd.f32 %v3643, %v3731
        %3733 = vdwg.mxu0
        %3734 = vmatpush.bf16.msra.mxu0 %v3507
        %3735 = vmatpush.bf16.msra.mxu0 %v3505
        %3736 = vmatpush.bf16.msra.mxu0 %v3503
        %3737 = vmatpush.bf16.msra.mxu0 %v3501
        %3738 = vmatpush.bf16.msra.mxu0 %v3499
        %3739 = vmatpush.bf16.msra.mxu0 %v3497
        %3740 = vmatpush.bf16.msra.mxu0 %v3495
        %3741 = vmatpush.bf16.msra.mxu0 %v3493
        %3742 = vmatmul.bf16.gmra.mxu0 %v3326
        %v3743 = vpop.f32.mrf.mxu0
        %v3744 = vadd.f32 %v3393, %v3743
        %v3745 = vpop.f32.mrf.mxu0
        %v3746 = vadd.f32 %v3393, %v3745
        %3747 = vmatmul.bf16.gmra.mxu0 %v3328
        %v3748 = vpop.f32.mrf.mxu0
        %v3749 = vadd.f32 %v3393, %v3748
        %v3750 = vpop.f32.mrf.mxu0
        %v3751 = vadd.f32 %v3393, %v3750
        %3752 = vmatmul.bf16.gmra.mxu0 %v3330
        %v3753 = vpop.f32.mrf.mxu0
        %v3754 = vadd.f32 %v3393, %v3753
        %v3755 = vpop.f32.mrf.mxu0
        %v3756 = vadd.f32 %v3393, %v3755
        %3757 = vmatmul.bf16.gmra.mxu0 %v3332
        %v3758 = vpop.f32.mrf.mxu0
        %v3759 = vadd.f32 %v3393, %v3758
        %v3760 = vpop.f32.mrf.mxu0
        %v3761 = vadd.f32 %v3393, %v3760
        %3762 = vmatmul.bf16.gmra.mxu0 %v3334
        %v3763 = vpop.f32.mrf.mxu0
        %v3764 = vadd.f32 %v3393, %v3763
        %v3765 = vpop.f32.mrf.mxu0
        %v3766 = vadd.f32 %v3393, %v3765
        %3767 = vmatmul.bf16.gmra.mxu0 %v3336
        %v3768 = vpop.f32.mrf.mxu0
        %v3769 = vadd.f32 %v3393, %v3768
        %v3770 = vpop.f32.mrf.mxu0
        %v3771 = vadd.f32 %v3393, %v3770
        %3772 = vmatmul.bf16.gmra.mxu0 %v3338
        %v3773 = vpop.f32.mrf.mxu0
        %v3774 = vadd.f32 %v3393, %v3773
        %v3775 = vpop.f32.mrf.mxu0
        %v3776 = vadd.f32 %v3393, %v3775
        %3777 = vmatmul.bf16.gmra.mxu0 %v3340
        %v3778 = vpop.f32.mrf.mxu0
        %v3779 = vadd.f32 %v3393, %v3778
        %v3780 = vpop.f32.mrf.mxu0
        %v3781 = vadd.f32 %v3393, %v3780
        %3782 = vmatmul.bf16.gmra.mxu0 %v3342
        %v3783 = vpop.f32.mrf.mxu0
        %v3784 = vadd.f32 %v3393, %v3783
        %v3785 = vpop.f32.mrf.mxu0
        %v3786 = vadd.f32 %v3393, %v3785
        %3787 = vmatmul.bf16.gmra.mxu0 %v3344
        %v3788 = vpop.f32.mrf.mxu0
        %v3789 = vadd.f32 %v3393, %v3788
        %v3790 = vpop.f32.mrf.mxu0
        %v3791 = vadd.f32 %v3393, %v3790
        %3792 = vmatmul.bf16.gmra.mxu0 %v3346
        %v3793 = vpop.f32.mrf.mxu0
        %v3794 = vadd.f32 %v3393, %v3793
        %v3795 = vpop.f32.mrf.mxu0
        %v3796 = vadd.f32 %v3393, %v3795
        %3797 = vmatmul.bf16.gmra.mxu0 %v3348
        %v3798 = vpop.f32.mrf.mxu0
        %v3799 = vadd.f32 %v3393, %v3798
        %v3800 = vpop.f32.mrf.mxu0
        %v3801 = vadd.f32 %v3393, %v3800
        %3802 = vmatmul.bf16.gmra.mxu0 %v3350
        %v3803 = vpop.f32.mrf.mxu0
        %v3804 = vadd.f32 %v3393, %v3803
        %v3805 = vpop.f32.mrf.mxu0
        %v3806 = vadd.f32 %v3393, %v3805
        %3807 = vmatmul.bf16.gmra.mxu0 %v3352
        %v3808 = vpop.f32.mrf.mxu0
        %v3809 = vadd.f32 %v3393, %v3808
        %v3810 = vpop.f32.mrf.mxu0
        %v3811 = vadd.f32 %v3393, %v3810
        %3812 = vmatmul.bf16.gmra.mxu0 %v3354
        %v3813 = vpop.f32.mrf.mxu0
        %v3814 = vadd.f32 %v3393, %v3813
        %v3815 = vpop.f32.mrf.mxu0
        %v3816 = vadd.f32 %v3393, %v3815
        %3817 = vmatmul.bf16.gmra.mxu0 %v3356
        %v3818 = vpop.f32.mrf.mxu0
        %v3819 = vadd.f32 %v3393, %v3818
        %v3820 = vpop.f32.mrf.mxu0
        %v3821 = vadd.f32 %v3393, %v3820
        %3822 = vdwg.mxu0
        %3823 = vmatpush.bf16.msra.mxu0 %v3523
        %3824 = vmatpush.bf16.msra.mxu0 %v3521
        %3825 = vmatpush.bf16.msra.mxu0 %v3519
        %3826 = vmatpush.bf16.msra.mxu0 %v3517
        %3827 = vmatpush.bf16.msra.mxu0 %v3515
        %3828 = vmatpush.bf16.msra.mxu0 %v3513
        %3829 = vmatpush.bf16.msra.mxu0 %v3511
        %3830 = vmatpush.bf16.msra.mxu0 %v3509
        %3831 = vmatmul.bf16.gmra.mxu0 %v3327
        %v3832 = vpop.f32.mrf.mxu0
        %v3833 = vadd.f32 %v3744, %v3832
        %v3834 = vpop.f32.mrf.mxu0
        %v3835 = vadd.f32 %v3746, %v3834
        %3836 = vmatmul.bf16.gmra.mxu0 %v3329
        %v3837 = vpop.f32.mrf.mxu0
        %v3838 = vadd.f32 %v3749, %v3837
        %v3839 = vpop.f32.mrf.mxu0
        %v3840 = vadd.f32 %v3751, %v3839
        %3841 = vmatmul.bf16.gmra.mxu0 %v3331
        %v3842 = vpop.f32.mrf.mxu0
        %v3843 = vadd.f32 %v3754, %v3842
        %v3844 = vpop.f32.mrf.mxu0
        %v3845 = vadd.f32 %v3756, %v3844
        %3846 = vmatmul.bf16.gmra.mxu0 %v3333
        %v3847 = vpop.f32.mrf.mxu0
        %v3848 = vadd.f32 %v3759, %v3847
        %v3849 = vpop.f32.mrf.mxu0
        %v3850 = vadd.f32 %v3761, %v3849
        %3851 = vmatmul.bf16.gmra.mxu0 %v3335
        %v3852 = vpop.f32.mrf.mxu0
        %v3853 = vadd.f32 %v3764, %v3852
        %v3854 = vpop.f32.mrf.mxu0
        %v3855 = vadd.f32 %v3766, %v3854
        %3856 = vmatmul.bf16.gmra.mxu0 %v3337
        %v3857 = vpop.f32.mrf.mxu0
        %v3858 = vadd.f32 %v3769, %v3857
        %v3859 = vpop.f32.mrf.mxu0
        %v3860 = vadd.f32 %v3771, %v3859
        %3861 = vmatmul.bf16.gmra.mxu0 %v3339
        %v3862 = vpop.f32.mrf.mxu0
        %v3863 = vadd.f32 %v3774, %v3862
        %v3864 = vpop.f32.mrf.mxu0
        %v3865 = vadd.f32 %v3776, %v3864
        %3866 = vmatmul.bf16.gmra.mxu0 %v3341
        %v3867 = vpop.f32.mrf.mxu0
        %v3868 = vadd.f32 %v3779, %v3867
        %v3869 = vpop.f32.mrf.mxu0
        %v3870 = vadd.f32 %v3781, %v3869
        %3871 = vmatmul.bf16.gmra.mxu0 %v3343
        %v3872 = vpop.f32.mrf.mxu0
        %v3873 = vadd.f32 %v3784, %v3872
        %v3874 = vpop.f32.mrf.mxu0
        %v3875 = vadd.f32 %v3786, %v3874
        %3876 = vmatmul.bf16.gmra.mxu0 %v3345
        %v3877 = vpop.f32.mrf.mxu0
        %v3878 = vadd.f32 %v3789, %v3877
        %v3879 = vpop.f32.mrf.mxu0
        %v3880 = vadd.f32 %v3791, %v3879
        %3881 = vmatmul.bf16.gmra.mxu0 %v3347
        %v3882 = vpop.f32.mrf.mxu0
        %v3883 = vadd.f32 %v3794, %v3882
        %v3884 = vpop.f32.mrf.mxu0
        %v3885 = vadd.f32 %v3796, %v3884
        %3886 = vmatmul.bf16.gmra.mxu0 %v3349
        %v3887 = vpop.f32.mrf.mxu0
        %v3888 = vadd.f32 %v3799, %v3887
        %v3889 = vpop.f32.mrf.mxu0
        %v3890 = vadd.f32 %v3801, %v3889
        %3891 = vmatmul.bf16.gmra.mxu0 %v3351
        %v3892 = vpop.f32.mrf.mxu0
        %v3893 = vadd.f32 %v3804, %v3892
        %v3894 = vpop.f32.mrf.mxu0
        %v3895 = vadd.f32 %v3806, %v3894
        %3896 = vmatmul.bf16.gmra.mxu0 %v3353
        %v3897 = vpop.f32.mrf.mxu0
        %v3898 = vadd.f32 %v3809, %v3897
        %v3899 = vpop.f32.mrf.mxu0
        %v3900 = vadd.f32 %v3811, %v3899
        %3901 = vmatmul.bf16.gmra.mxu0 %v3355
        %v3902 = vpop.f32.mrf.mxu0
        %v3903 = vadd.f32 %v3814, %v3902
        %v3904 = vpop.f32.mrf.mxu0
        %v3905 = vadd.f32 %v3816, %v3904
        %3906 = vmatmul.bf16.gmra.mxu0 %v3357
        %v3907 = vpop.f32.mrf.mxu0
        %v3908 = vadd.f32 %v3819, %v3907
        %v3909 = vpop.f32.mrf.mxu0
        %v3910 = vadd.f32 %v3821, %v3909
        %3911 = vdwg.mxu0
        %v3912 = vtanh.pop %v3655
        %v3913 = vtanh.pop %v3833
        %v3914 = vtanh.pop %v3657
        %v3915 = vtanh.pop %v3835
        %v3916 = vtanh.pop %v3660
        %v3917 = vtanh.pop %v3838
        %v3918 = vtanh.pop %v3662
        %v3919 = vtanh.pop %v3840
        %v3920 = vtanh.pop %v3665
        %v3921 = vtanh.pop %v3843
        %v3922 = vtanh.pop %v3667
        %v3923 = vtanh.pop %v3845
        %v3924 = vtanh.pop %v3670
        %v3925 = vtanh.pop %v3848
        %v3926 = vtanh.pop %v3672
        %v3927 = vtanh.pop %v3850
        %v3928 = vtanh.pop %v3675
        %v3929 = vtanh.pop %v3853
        %v3930 = vtanh.pop %v3677
        %v3931 = vtanh.pop %v3855
        %v3932 = vtanh.pop %v3680
        %v3933 = vtanh.pop %v3858
        %v3934 = vtanh.pop %v3682
        %v3935 = vtanh.pop %v3860
        %v3936 = vtanh.pop %v3685
        %v3937 = vtanh.pop %v3863
        %v3938 = vtanh.pop %v3687
        %v3939 = vtanh.pop %v3865
        %v3940 = vtanh.pop %v3690
        %v3941 = vtanh.pop %v3868
        %v3942 = vtanh.pop %v3692
        %v3943 = vtanh.pop %v3870
        %v3944 = vtanh.pop %v3695
        %v3945 = vtanh.pop %v3873
        %v3946 = vtanh.pop %v3697
        %v3947 = vtanh.pop %v3875
        %v3948 = vtanh.pop %v3700
        %v3949 = vtanh.pop %v3878
        %v3950 = vtanh.pop %v3702
        %v3951 = vtanh.pop %v3880
        %v3952 = vtanh.pop %v3705
        %v3953 = vtanh.pop %v3883
        %v3954 = vtanh.pop %v3707
        %v3955 = vtanh.pop %v3885
        %v3956 = vtanh.pop %v3710
        %v3957 = vtanh.pop %v3888
        %v3958 = vtanh.pop %v3712
        %v3959 = vtanh.pop %v3890
        %v3960 = vtanh.pop %v3715
        %v3961 = vtanh.pop %v3893
        %v3962 = vtanh.pop %v3717
        %v3963 = vtanh.pop %v3895
        %v3964 = vtanh.pop %v3720
        %v3965 = vtanh.pop %v3898
        %v3966 = vtanh.pop %v3722
        %v3967 = vtanh.pop %v3900
        %v3968 = vtanh.pop %v3725
        %v3969 = vtanh.pop %v3903
        %v3970 = vtanh.pop %v3727
        %v3971 = vtanh.pop %v3905
        %v3972 = vtanh.pop %v3730
        %v3973 = vtanh.pop %v3908
        %v3974 = vtanh.pop %v3732
        %v3975 = vtanh.pop %v3910
        %v3976 = vpack.c.bf16 %v3914, %v3912
        %v3977 = vpack.c.bf16 %v3915, %v3913
        %v3978 = vpack.c.bf16 %v3918, %v3916
        %v3979 = vpack.c.bf16 %v3919, %v3917
        %v3980 = vpack.c.bf16 %v3922, %v3920
        %v3981 = vpack.c.bf16 %v3923, %v3921
        %v3982 = vpack.c.bf16 %v3926, %v3924
        %v3983 = vpack.c.bf16 %v3927, %v3925
        %v3984 = vpack.c.bf16 %v3930, %v3928
        %v3985 = vpack.c.bf16 %v3931, %v3929
        %v3986 = vpack.c.bf16 %v3934, %v3932
        %v3987 = vpack.c.bf16 %v3935, %v3933
        %v3988 = vpack.c.bf16 %v3938, %v3936
        %v3989 = vpack.c.bf16 %v3939, %v3937
        %v3990 = vpack.c.bf16 %v3942, %v3940
        %v3991 = vpack.c.bf16 %v3943, %v3941
        %v3992 = vpack.c.bf16 %v3946, %v3944
        %v3993 = vpack.c.bf16 %v3947, %v3945
        %v3994 = vpack.c.bf16 %v3950, %v3948
        %v3995 = vpack.c.bf16 %v3951, %v3949
        %v3996 = vpack.c.bf16 %v3954, %v3952
        %v3997 = vpack.c.bf16 %v3955, %v3953
        %v3998 = vpack.c.bf16 %v3958, %v3956
        %v3999 = vpack.c.bf16 %v3959, %v3957
        %v4000 = vpack.c.bf16 %v3962, %v3960
        %v4001 = vpack.c.bf16 %v3963, %v3961
        %v4002 = vpack.c.bf16 %v3966, %v3964
        %v4003 = vpack.c.bf16 %v3967, %v3965
        %v4004 = vpack.c.bf16 %v3970, %v3968
        %v4005 = vpack.c.bf16 %v3971, %v3969
        %v4006 = vpack.c.bf16 %v3974, %v3972
        %v4007 = vpack.c.bf16 %v3975, %v3973
        %v4008 = vld [vmem:[#allocation13] sm:$0xff]
        %v4009 = vld [vmem:[#allocation13 + $0x8] sm:$0xff]
        %v4010 = vld [vmem:[#allocation13 + $0x10] sm:$0xff]
        %v4011 = vld [vmem:[#allocation13 + $0x18] sm:$0xff]
        %v4012 = vld [vmem:[#allocation13 + $0x20] sm:$0xff]
        %v4013 = vld [vmem:[#allocation13 + $0x28] sm:$0xff]
        %v4014 = vld [vmem:[#allocation13 + $0x30] sm:$0xff]
        %v4015 = vld [vmem:[#allocation13 + $0x38] sm:$0xff]
        %v4016 = vld [vmem:[#allocation13 + $0x40] sm:$0xff]
        %v4017 = vld [vmem:[#allocation13 + $0x48] sm:$0xff]
        %v4018 = vld [vmem:[#allocation13 + $0x50] sm:$0xff]
        %v4019 = vld [vmem:[#allocation13 + $0x58] sm:$0xff]
        %v4020 = vld [vmem:[#allocation13 + $0x60] sm:$0xff]
        %v4021 = vld [vmem:[#allocation13 + $0x68] sm:$0xff]
        %v4022 = vld [vmem:[#allocation13 + $0x70] sm:$0xff]
        %v4023 = vld [vmem:[#allocation13 + $0x78] sm:$0xff]
        %v4024 = vld [vmem:[#allocation13 + $0x80] sm:$0xff]
        %v4025 = vld [vmem:[#allocation13 + $0x88] sm:$0xff]
        %v4026 = vld [vmem:[#allocation13 + $0x90] sm:$0xff]
        %v4027 = vld [vmem:[#allocation13 + $0x98] sm:$0xff]
        %v4028 = vld [vmem:[#allocation13 + $0xa0] sm:$0xff]
        %v4029 = vld [vmem:[#allocation13 + $0xa8] sm:$0xff]
        %v4030 = vld [vmem:[#allocation13 + $0xb0] sm:$0xff]
        %v4031 = vld [vmem:[#allocation13 + $0xb8] sm:$0xff]
        %v4032 = vld [vmem:[#allocation13 + $0xc0] sm:$0xff]
        %v4033 = vld [vmem:[#allocation13 + $0xc8] sm:$0xff]
        %v4034 = vld [vmem:[#allocation13 + $0xd0] sm:$0xff]
        %v4035 = vld [vmem:[#allocation13 + $0xd8] sm:$0xff]
        %v4036 = vld [vmem:[#allocation13 + $0xe0] sm:$0xff]
        %v4037 = vld [vmem:[#allocation13 + $0xe8] sm:$0xff]
        %v4038 = vld [vmem:[#allocation13 + $0xf0] sm:$0xff]
        %v4039 = vld [vmem:[#allocation13 + $0xf8] sm:$0xff]
        %v4040 = vld [vmem:[#allocation14] sm:$0x3]
        %v4042 = vperm.slane %v4040, 0
        %v4043 = vperm.slane %v4040, 1
        %v4078 = vunpack.c.l.b16 %v4008
        %v4079 = vunpack.c.h.b16 %v4008
        %v4080 = vunpack.c.l.b16 %v4009
        %v4081 = vunpack.c.h.b16 %v4009
        %v4082 = vunpack.c.l.b16 %v4010
        %v4083 = vunpack.c.h.b16 %v4010
        %v4084 = vunpack.c.l.b16 %v4011
        %v4085 = vunpack.c.h.b16 %v4011
        %v4086 = vunpack.c.l.b16 %v4012
        %v4087 = vunpack.c.h.b16 %v4012
        %v4088 = vunpack.c.l.b16 %v4013
        %v4089 = vunpack.c.h.b16 %v4013
        %v4090 = vunpack.c.l.b16 %v4014
        %v4091 = vunpack.c.h.b16 %v4014
        %v4092 = vunpack.c.l.b16 %v4015
        %v4093 = vunpack.c.h.b16 %v4015
        %v4094 = vunpack.c.l.b16 %v4016
        %v4095 = vunpack.c.h.b16 %v4016
        %v4096 = vunpack.c.l.b16 %v4017
        %v4097 = vunpack.c.h.b16 %v4017
        %v4098 = vunpack.c.l.b16 %v4018
        %v4099 = vunpack.c.h.b16 %v4018
        %v4100 = vunpack.c.l.b16 %v4019
        %v4101 = vunpack.c.h.b16 %v4019
        %v4102 = vunpack.c.l.b16 %v4020
        %v4103 = vunpack.c.h.b16 %v4020
        %v4104 = vunpack.c.l.b16 %v4021
        %v4105 = vunpack.c.h.b16 %v4021
        %v4106 = vunpack.c.l.b16 %v4022
        %v4107 = vunpack.c.h.b16 %v4022
        %v4108 = vunpack.c.l.b16 %v4023
        %v4109 = vunpack.c.h.b16 %v4023
        %v4110 = vunpack.c.l.b16 %v4024
        %v4111 = vunpack.c.h.b16 %v4024
        %v4112 = vunpack.c.l.b16 %v4025
        %v4113 = vunpack.c.h.b16 %v4025
        %v4114 = vunpack.c.l.b16 %v4026
        %v4115 = vunpack.c.h.b16 %v4026
        %v4116 = vunpack.c.l.b16 %v4027
        %v4117 = vunpack.c.h.b16 %v4027
        %v4118 = vunpack.c.l.b16 %v4028
        %v4119 = vunpack.c.h.b16 %v4028
        %v4120 = vunpack.c.l.b16 %v4029
        %v4121 = vunpack.c.h.b16 %v4029
        %v4122 = vunpack.c.l.b16 %v4030
        %v4123 = vunpack.c.h.b16 %v4030
        %v4124 = vunpack.c.l.b16 %v4031
        %v4125 = vunpack.c.h.b16 %v4031
        %v4126 = vunpack.c.l.b16 %v4032
        %v4127 = vunpack.c.h.b16 %v4032
        %v4128 = vunpack.c.l.b16 %v4033
        %v4129 = vunpack.c.h.b16 %v4033
        %v4130 = vunpack.c.l.b16 %v4034
        %v4131 = vunpack.c.h.b16 %v4034
        %v4132 = vunpack.c.l.b16 %v4035
        %v4133 = vunpack.c.h.b16 %v4035
        %v4134 = vunpack.c.l.b16 %v4036
        %v4135 = vunpack.c.h.b16 %v4036
        %v4136 = vunpack.c.l.b16 %v4037
        %v4137 = vunpack.c.h.b16 %v4037
        %v4138 = vunpack.c.l.b16 %v4038
        %v4139 = vunpack.c.h.b16 %v4038
        %v4140 = vunpack.c.l.b16 %v4039
        %v4141 = vunpack.c.h.b16 %v4039
        %v4142 = vpack.c.b16 %v4080, %v4078
        %v4143 = vpack.c.b16 %v4081, %v4079
        %v4144 = vpack.c.b16 %v4084, %v4082
        %v4145 = vpack.c.b16 %v4085, %v4083
        %v4146 = vpack.c.b16 %v4088, %v4086
        %v4147 = vpack.c.b16 %v4089, %v4087
        %v4148 = vpack.c.b16 %v4092, %v4090
        %v4149 = vpack.c.b16 %v4093, %v4091
        %v4150 = vpack.c.b16 %v4096, %v4094
        %v4151 = vpack.c.b16 %v4097, %v4095
        %v4152 = vpack.c.b16 %v4100, %v4098
        %v4153 = vpack.c.b16 %v4101, %v4099
        %v4154 = vpack.c.b16 %v4104, %v4102
        %v4155 = vpack.c.b16 %v4105, %v4103
        %v4156 = vpack.c.b16 %v4108, %v4106
        %v4157 = vpack.c.b16 %v4109, %v4107
        %v4158 = vpack.c.b16 %v4112, %v4110
        %v4159 = vpack.c.b16 %v4113, %v4111
        %v4160 = vpack.c.b16 %v4116, %v4114
        %v4161 = vpack.c.b16 %v4117, %v4115
        %v4162 = vpack.c.b16 %v4120, %v4118
        %v4163 = vpack.c.b16 %v4121, %v4119
        %v4164 = vpack.c.b16 %v4124, %v4122
        %v4165 = vpack.c.b16 %v4125, %v4123
        %v4166 = vpack.c.b16 %v4128, %v4126
        %v4167 = vpack.c.b16 %v4129, %v4127
        %v4168 = vpack.c.b16 %v4132, %v4130
        %v4169 = vpack.c.b16 %v4133, %v4131
        %v4170 = vpack.c.b16 %v4136, %v4134
        %v4171 = vpack.c.b16 %v4137, %v4135
        %v4172 = vpack.c.b16 %v4140, %v4138
        %v4173 = vpack.c.b16 %v4141, %v4139
        %4206 = vmatpush.bf16.msra.mxu0 %v4156
        %4207 = vmatpush.bf16.msra.mxu0 %v4154
        %4208 = vmatpush.bf16.msra.mxu0 %v4152
        %4209 = vmatpush.bf16.msra.mxu0 %v4150
        %4210 = vmatpush.bf16.msra.mxu0 %v4148
        %4211 = vmatpush.bf16.msra.mxu0 %v4146
        %4212 = vmatpush.bf16.msra.mxu0 %v4144
        %4213 = vmatpush.bf16.msra.mxu0 %v4142
        %4214 = vmatmul.bf16.gmra.mxu0 %v3976
        %v4215 = vpop.f32.mrf.mxu0
        %v4216 = vadd.f32 %v4042, %v4215
        %v4217 = vpop.f32.mrf.mxu0
        %v4218 = vadd.f32 %v4042, %v4217
        %4219 = vmatmul.bf16.gmra.mxu0 %v3978
        %v4220 = vpop.f32.mrf.mxu0
        %v4221 = vadd.f32 %v4042, %v4220
        %v4222 = vpop.f32.mrf.mxu0
        %v4223 = vadd.f32 %v4042, %v4222
        %4224 = vmatmul.bf16.gmra.mxu0 %v3980
        %v4225 = vpop.f32.mrf.mxu0
        %v4226 = vadd.f32 %v4042, %v4225
        %v4227 = vpop.f32.mrf.mxu0
        %v4228 = vadd.f32 %v4042, %v4227
        %4229 = vmatmul.bf16.gmra.mxu0 %v3982
        %v4230 = vpop.f32.mrf.mxu0
        %v4231 = vadd.f32 %v4042, %v4230
        %v4232 = vpop.f32.mrf.mxu0
        %v4233 = vadd.f32 %v4042, %v4232
        %4234 = vmatmul.bf16.gmra.mxu0 %v3984
        %v4235 = vpop.f32.mrf.mxu0
        %v4236 = vadd.f32 %v4042, %v4235
        %v4237 = vpop.f32.mrf.mxu0
        %v4238 = vadd.f32 %v4042, %v4237
        %4239 = vmatmul.bf16.gmra.mxu0 %v3986
        %v4240 = vpop.f32.mrf.mxu0
        %v4241 = vadd.f32 %v4042, %v4240
        %v4242 = vpop.f32.mrf.mxu0
        %v4243 = vadd.f32 %v4042, %v4242
        %4244 = vmatmul.bf16.gmra.mxu0 %v3988
        %v4245 = vpop.f32.mrf.mxu0
        %v4246 = vadd.f32 %v4042, %v4245
        %v4247 = vpop.f32.mrf.mxu0
        %v4248 = vadd.f32 %v4042, %v4247
        %4249 = vmatmul.bf16.gmra.mxu0 %v3990
        %v4250 = vpop.f32.mrf.mxu0
        %v4251 = vadd.f32 %v4042, %v4250
        %v4252 = vpop.f32.mrf.mxu0
        %v4253 = vadd.f32 %v4042, %v4252
        %4254 = vmatmul.bf16.gmra.mxu0 %v3992
        %v4255 = vpop.f32.mrf.mxu0
        %v4256 = vadd.f32 %v4042, %v4255
        %v4257 = vpop.f32.mrf.mxu0
        %v4258 = vadd.f32 %v4042, %v4257
        %4259 = vmatmul.bf16.gmra.mxu0 %v3994
        %v4260 = vpop.f32.mrf.mxu0
        %v4261 = vadd.f32 %v4042, %v4260
        %v4262 = vpop.f32.mrf.mxu0
        %v4263 = vadd.f32 %v4042, %v4262
        %4264 = vmatmul.bf16.gmra.mxu0 %v3996
        %v4265 = vpop.f32.mrf.mxu0
        %v4266 = vadd.f32 %v4042, %v4265
        %v4267 = vpop.f32.mrf.mxu0
        %v4268 = vadd.f32 %v4042, %v4267
        %4269 = vmatmul.bf16.gmra.mxu0 %v3998
        %v4270 = vpop.f32.mrf.mxu0
        %v4271 = vadd.f32 %v4042, %v4270
        %v4272 = vpop.f32.mrf.mxu0
        %v4273 = vadd.f32 %v4042, %v4272
        %4274 = vmatmul.bf16.gmra.mxu0 %v4000
        %v4275 = vpop.f32.mrf.mxu0
        %v4276 = vadd.f32 %v4042, %v4275
        %v4277 = vpop.f32.mrf.mxu0
        %v4278 = vadd.f32 %v4042, %v4277
        %4279 = vmatmul.bf16.gmra.mxu0 %v4002
        %v4280 = vpop.f32.mrf.mxu0
        %v4281 = vadd.f32 %v4042, %v4280
        %v4282 = vpop.f32.mrf.mxu0
        %v4283 = vadd.f32 %v4042, %v4282
        %4284 = vmatmul.bf16.gmra.mxu0 %v4004
        %v4285 = vpop.f32.mrf.mxu0
        %v4286 = vadd.f32 %v4042, %v4285
        %v4287 = vpop.f32.mrf.mxu0
        %v4288 = vadd.f32 %v4042, %v4287
        %4289 = vmatmul.bf16.gmra.mxu0 %v4006
        %v4290 = vpop.f32.mrf.mxu0
        %v4291 = vadd.f32 %v4042, %v4290
        %v4292 = vpop.f32.mrf.mxu0
        %v4293 = vadd.f32 %v4042, %v4292
        %4294 = vdwg.mxu0
        %4295 = vmatpush.bf16.msra.mxu0 %v4172
        %4296 = vmatpush.bf16.msra.mxu0 %v4170
        %4297 = vmatpush.bf16.msra.mxu0 %v4168
        %4298 = vmatpush.bf16.msra.mxu0 %v4166
        %4299 = vmatpush.bf16.msra.mxu0 %v4164
        %4300 = vmatpush.bf16.msra.mxu0 %v4162
        %4301 = vmatpush.bf16.msra.mxu0 %v4160
        %4302 = vmatpush.bf16.msra.mxu0 %v4158
        %4303 = vmatmul.bf16.gmra.mxu0 %v3977
        %v4304 = vpop.f32.mrf.mxu0
        %v4305 = vadd.f32 %v4216, %v4304
        %v4306 = vpop.f32.mrf.mxu0
        %v4307 = vadd.f32 %v4218, %v4306
        %4308 = vmatmul.bf16.gmra.mxu0 %v3979
        %v4309 = vpop.f32.mrf.mxu0
        %v4310 = vadd.f32 %v4221, %v4309
        %v4311 = vpop.f32.mrf.mxu0
        %v4312 = vadd.f32 %v4223, %v4311
        %4313 = vmatmul.bf16.gmra.mxu0 %v3981
        %v4314 = vpop.f32.mrf.mxu0
        %v4315 = vadd.f32 %v4226, %v4314
        %v4316 = vpop.f32.mrf.mxu0
        %v4317 = vadd.f32 %v4228, %v4316
        %4318 = vmatmul.bf16.gmra.mxu0 %v3983
        %v4319 = vpop.f32.mrf.mxu0
        %v4320 = vadd.f32 %v4231, %v4319
        %v4321 = vpop.f32.mrf.mxu0
        %v4322 = vadd.f32 %v4233, %v4321
        %4323 = vmatmul.bf16.gmra.mxu0 %v3985
        %v4324 = vpop.f32.mrf.mxu0
        %v4325 = vadd.f32 %v4236, %v4324
        %v4326 = vpop.f32.mrf.mxu0
        %v4327 = vadd.f32 %v4238, %v4326
        %4328 = vmatmul.bf16.gmra.mxu0 %v3987
        %v4329 = vpop.f32.mrf.mxu0
        %v4330 = vadd.f32 %v4241, %v4329
        %v4331 = vpop.f32.mrf.mxu0
        %v4332 = vadd.f32 %v4243, %v4331
        %4333 = vmatmul.bf16.gmra.mxu0 %v3989
        %v4334 = vpop.f32.mrf.mxu0
        %v4335 = vadd.f32 %v4246, %v4334
        %v4336 = vpop.f32.mrf.mxu0
        %v4337 = vadd.f32 %v4248, %v4336
        %4338 = vmatmul.bf16.gmra.mxu0 %v3991
        %v4339 = vpop.f32.mrf.mxu0
        %v4340 = vadd.f32 %v4251, %v4339
        %v4341 = vpop.f32.mrf.mxu0
        %v4342 = vadd.f32 %v4253, %v4341
        %4343 = vmatmul.bf16.gmra.mxu0 %v3993
        %v4344 = vpop.f32.mrf.mxu0
        %v4345 = vadd.f32 %v4256, %v4344
        %v4346 = vpop.f32.mrf.mxu0
        %v4347 = vadd.f32 %v4258, %v4346
        %4348 = vmatmul.bf16.gmra.mxu0 %v3995
        %v4349 = vpop.f32.mrf.mxu0
        %v4350 = vadd.f32 %v4261, %v4349
        %v4351 = vpop.f32.mrf.mxu0
        %v4352 = vadd.f32 %v4263, %v4351
        %4353 = vmatmul.bf16.gmra.mxu0 %v3997
        %v4354 = vpop.f32.mrf.mxu0
        %v4355 = vadd.f32 %v4266, %v4354
        %v4356 = vpop.f32.mrf.mxu0
        %v4357 = vadd.f32 %v4268, %v4356
        %4358 = vmatmul.bf16.gmra.mxu0 %v3999
        %v4359 = vpop.f32.mrf.mxu0
        %v4360 = vadd.f32 %v4271, %v4359
        %v4361 = vpop.f32.mrf.mxu0
        %v4362 = vadd.f32 %v4273, %v4361
        %4363 = vmatmul.bf16.gmra.mxu0 %v4001
        %v4364 = vpop.f32.mrf.mxu0
        %v4365 = vadd.f32 %v4276, %v4364
        %v4366 = vpop.f32.mrf.mxu0
        %v4367 = vadd.f32 %v4278, %v4366
        %4368 = vmatmul.bf16.gmra.mxu0 %v4003
        %v4369 = vpop.f32.mrf.mxu0
        %v4370 = vadd.f32 %v4281, %v4369
        %v4371 = vpop.f32.mrf.mxu0
        %v4372 = vadd.f32 %v4283, %v4371
        %4373 = vmatmul.bf16.gmra.mxu0 %v4005
        %v4374 = vpop.f32.mrf.mxu0
        %v4375 = vadd.f32 %v4286, %v4374
        %v4376 = vpop.f32.mrf.mxu0
        %v4377 = vadd.f32 %v4288, %v4376
        %4378 = vmatmul.bf16.gmra.mxu0 %v4007
        %v4379 = vpop.f32.mrf.mxu0
        %v4380 = vadd.f32 %v4291, %v4379
        %v4381 = vpop.f32.mrf.mxu0
        %v4382 = vadd.f32 %v4293, %v4381
        %4383 = vdwg.mxu0
        %4384 = vmatpush.bf16.msra.mxu0 %v4157
        %4385 = vmatpush.bf16.msra.mxu0 %v4155
        %4386 = vmatpush.bf16.msra.mxu0 %v4153
        %4387 = vmatpush.bf16.msra.mxu0 %v4151
        %4388 = vmatpush.bf16.msra.mxu0 %v4149
        %4389 = vmatpush.bf16.msra.mxu0 %v4147
        %4390 = vmatpush.bf16.msra.mxu0 %v4145
        %4391 = vmatpush.bf16.msra.mxu0 %v4143
        %4392 = vmatmul.bf16.gmra.mxu0 %v3976
        %v4393 = vpop.f32.mrf.mxu0
        %v4394 = vadd.f32 %v4043, %v4393
        %v4395 = vpop.f32.mrf.mxu0
        %v4396 = vadd.f32 %v4043, %v4395
        %4397 = vmatmul.bf16.gmra.mxu0 %v3978
        %v4398 = vpop.f32.mrf.mxu0
        %v4399 = vadd.f32 %v4043, %v4398
        %v4400 = vpop.f32.mrf.mxu0
        %v4401 = vadd.f32 %v4043, %v4400
        %4402 = vmatmul.bf16.gmra.mxu0 %v3980
        %v4403 = vpop.f32.mrf.mxu0
        %v4404 = vadd.f32 %v4043, %v4403
        %v4405 = vpop.f32.mrf.mxu0
        %v4406 = vadd.f32 %v4043, %v4405
        %4407 = vmatmul.bf16.gmra.mxu0 %v3982
        %v4408 = vpop.f32.mrf.mxu0
        %v4409 = vadd.f32 %v4043, %v4408
        %v4410 = vpop.f32.mrf.mxu0
        %v4411 = vadd.f32 %v4043, %v4410
        %4412 = vmatmul.bf16.gmra.mxu0 %v3984
        %v4413 = vpop.f32.mrf.mxu0
        %v4414 = vadd.f32 %v4043, %v4413
        %v4415 = vpop.f32.mrf.mxu0
        %v4416 = vadd.f32 %v4043, %v4415
        %4417 = vmatmul.bf16.gmra.mxu0 %v3986
        %v4418 = vpop.f32.mrf.mxu0
        %v4419 = vadd.f32 %v4043, %v4418
        %v4420 = vpop.f32.mrf.mxu0
        %v4421 = vadd.f32 %v4043, %v4420
        %4422 = vmatmul.bf16.gmra.mxu0 %v3988
        %v4423 = vpop.f32.mrf.mxu0
        %v4424 = vadd.f32 %v4043, %v4423
        %v4425 = vpop.f32.mrf.mxu0
        %v4426 = vadd.f32 %v4043, %v4425
        %4427 = vmatmul.bf16.gmra.mxu0 %v3990
        %v4428 = vpop.f32.mrf.mxu0
        %v4429 = vadd.f32 %v4043, %v4428
        %v4430 = vpop.f32.mrf.mxu0
        %v4431 = vadd.f32 %v4043, %v4430
        %4432 = vmatmul.bf16.gmra.mxu0 %v3992
        %v4433 = vpop.f32.mrf.mxu0
        %v4434 = vadd.f32 %v4043, %v4433
        %v4435 = vpop.f32.mrf.mxu0
        %v4436 = vadd.f32 %v4043, %v4435
        %4437 = vmatmul.bf16.gmra.mxu0 %v3994
        %v4438 = vpop.f32.mrf.mxu0
        %v4439 = vadd.f32 %v4043, %v4438
        %v4440 = vpop.f32.mrf.mxu0
        %v4441 = vadd.f32 %v4043, %v4440
        %4442 = vmatmul.bf16.gmra.mxu0 %v3996
        %v4443 = vpop.f32.mrf.mxu0
        %v4444 = vadd.f32 %v4043, %v4443
        %v4445 = vpop.f32.mrf.mxu0
        %v4446 = vadd.f32 %v4043, %v4445
        %4447 = vmatmul.bf16.gmra.mxu0 %v3998
        %v4448 = vpop.f32.mrf.mxu0
        %v4449 = vadd.f32 %v4043, %v4448
        %v4450 = vpop.f32.mrf.mxu0
        %v4451 = vadd.f32 %v4043, %v4450
        %4452 = vmatmul.bf16.gmra.mxu0 %v4000
        %v4453 = vpop.f32.mrf.mxu0
        %v4454 = vadd.f32 %v4043, %v4453
        %v4455 = vpop.f32.mrf.mxu0
        %v4456 = vadd.f32 %v4043, %v4455
        %4457 = vmatmul.bf16.gmra.mxu0 %v4002
        %v4458 = vpop.f32.mrf.mxu0
        %v4459 = vadd.f32 %v4043, %v4458
        %v4460 = vpop.f32.mrf.mxu0
        %v4461 = vadd.f32 %v4043, %v4460
        %4462 = vmatmul.bf16.gmra.mxu0 %v4004
        %v4463 = vpop.f32.mrf.mxu0
        %v4464 = vadd.f32 %v4043, %v4463
        %v4465 = vpop.f32.mrf.mxu0
        %v4466 = vadd.f32 %v4043, %v4465
        %4467 = vmatmul.bf16.gmra.mxu0 %v4006
        %v4468 = vpop.f32.mrf.mxu0
        %v4469 = vadd.f32 %v4043, %v4468
        %v4470 = vpop.f32.mrf.mxu0
        %v4471 = vadd.f32 %v4043, %v4470
        %4472 = vdwg.mxu0
        %4473 = vmatpush.bf16.msra.mxu0 %v4173
        %4474 = vmatpush.bf16.msra.mxu0 %v4171
        %4475 = vmatpush.bf16.msra.mxu0 %v4169
        %4476 = vmatpush.bf16.msra.mxu0 %v4167
        %4477 = vmatpush.bf16.msra.mxu0 %v4165
        %4478 = vmatpush.bf16.msra.mxu0 %v4163
        %4479 = vmatpush.bf16.msra.mxu0 %v4161
        %4480 = vmatpush.bf16.msra.mxu0 %v4159
        %4481 = vmatmul.bf16.gmra.mxu0 %v3977
        %v4482 = vpop.f32.mrf.mxu0
        %v4483 = vadd.f32 %v4394, %v4482
        %v4484 = vpop.f32.mrf.mxu0
        %v4485 = vadd.f32 %v4396, %v4484
        %4486 = vmatmul.bf16.gmra.mxu0 %v3979
        %v4487 = vpop.f32.mrf.mxu0
        %v4488 = vadd.f32 %v4399, %v4487
        %v4489 = vpop.f32.mrf.mxu0
        %v4490 = vadd.f32 %v4401, %v4489
        %4491 = vmatmul.bf16.gmra.mxu0 %v3981
        %v4492 = vpop.f32.mrf.mxu0
        %v4493 = vadd.f32 %v4404, %v4492
        %v4494 = vpop.f32.mrf.mxu0
        %v4495 = vadd.f32 %v4406, %v4494
        %4496 = vmatmul.bf16.gmra.mxu0 %v3983
        %v4497 = vpop.f32.mrf.mxu0
        %v4498 = vadd.f32 %v4409, %v4497
        %v4499 = vpop.f32.mrf.mxu0
        %v4500 = vadd.f32 %v4411, %v4499
        %4501 = vmatmul.bf16.gmra.mxu0 %v3985
        %v4502 = vpop.f32.mrf.mxu0
        %v4503 = vadd.f32 %v4414, %v4502
        %v4504 = vpop.f32.mrf.mxu0
        %v4505 = vadd.f32 %v4416, %v4504
        %4506 = vmatmul.bf16.gmra.mxu0 %v3987
        %v4507 = vpop.f32.mrf.mxu0
        %v4508 = vadd.f32 %v4419, %v4507
        %v4509 = vpop.f32.mrf.mxu0
        %v4510 = vadd.f32 %v4421, %v4509
        %4511 = vmatmul.bf16.gmra.mxu0 %v3989
        %v4512 = vpop.f32.mrf.mxu0
        %v4513 = vadd.f32 %v4424, %v4512
        %v4514 = vpop.f32.mrf.mxu0
        %v4515 = vadd.f32 %v4426, %v4514
        %4516 = vmatmul.bf16.gmra.mxu0 %v3991
        %v4517 = vpop.f32.mrf.mxu0
        %v4518 = vadd.f32 %v4429, %v4517
        %v4519 = vpop.f32.mrf.mxu0
        %v4520 = vadd.f32 %v4431, %v4519
        %4521 = vmatmul.bf16.gmra.mxu0 %v3993
        %v4522 = vpop.f32.mrf.mxu0
        %v4523 = vadd.f32 %v4434, %v4522
        %v4524 = vpop.f32.mrf.mxu0
        %v4525 = vadd.f32 %v4436, %v4524
        %4526 = vmatmul.bf16.gmra.mxu0 %v3995
        %v4527 = vpop.f32.mrf.mxu0
        %v4528 = vadd.f32 %v4439, %v4527
        %v4529 = vpop.f32.mrf.mxu0
        %v4530 = vadd.f32 %v4441, %v4529
        %4531 = vmatmul.bf16.gmra.mxu0 %v3997
        %v4532 = vpop.f32.mrf.mxu0
        %v4533 = vadd.f32 %v4444, %v4532
        %v4534 = vpop.f32.mrf.mxu0
        %v4535 = vadd.f32 %v4446, %v4534
        %4536 = vmatmul.bf16.gmra.mxu0 %v3999
        %v4537 = vpop.f32.mrf.mxu0
        %v4538 = vadd.f32 %v4449, %v4537
        %v4539 = vpop.f32.mrf.mxu0
        %v4540 = vadd.f32 %v4451, %v4539
        %4541 = vmatmul.bf16.gmra.mxu0 %v4001
        %v4542 = vpop.f32.mrf.mxu0
        %v4543 = vadd.f32 %v4454, %v4542
        %v4544 = vpop.f32.mrf.mxu0
        %v4545 = vadd.f32 %v4456, %v4544
        %4546 = vmatmul.bf16.gmra.mxu0 %v4003
        %v4547 = vpop.f32.mrf.mxu0
        %v4548 = vadd.f32 %v4459, %v4547
        %v4549 = vpop.f32.mrf.mxu0
        %v4550 = vadd.f32 %v4461, %v4549
        %4551 = vmatmul.bf16.gmra.mxu0 %v4005
        %v4552 = vpop.f32.mrf.mxu0
        %v4553 = vadd.f32 %v4464, %v4552
        %v4554 = vpop.f32.mrf.mxu0
        %v4555 = vadd.f32 %v4466, %v4554
        %4556 = vmatmul.bf16.gmra.mxu0 %v4007
        %v4557 = vpop.f32.mrf.mxu0
        %v4558 = vadd.f32 %v4469, %v4557
        %v4559 = vpop.f32.mrf.mxu0
        %v4560 = vadd.f32 %v4471, %v4559
        %4561 = vdwg.mxu0
        %v4562 = vxor.u32 %v4305, 2147483648
        %v4563 = vxor.u32 %v4483, 2147483648
        %v4564 = vxor.u32 %v4307, 2147483648
        %v4565 = vxor.u32 %v4485, 2147483648
        %v4566 = vxor.u32 %v4310, 2147483648
        %v4567 = vxor.u32 %v4488, 2147483648
        %v4568 = vxor.u32 %v4312, 2147483648
        %v4569 = vxor.u32 %v4490, 2147483648
        %v4570 = vxor.u32 %v4315, 2147483648
        %v4571 = vxor.u32 %v4493, 2147483648
        %v4572 = vxor.u32 %v4317, 2147483648
        %v4573 = vxor.u32 %v4495, 2147483648
        %v4574 = vxor.u32 %v4320, 2147483648
        %v4575 = vxor.u32 %v4498, 2147483648
        %v4576 = vxor.u32 %v4322, 2147483648
        %v4577 = vxor.u32 %v4500, 2147483648
        %v4578 = vxor.u32 %v4325, 2147483648
        %v4579 = vxor.u32 %v4503, 2147483648
        %v4580 = vxor.u32 %v4327, 2147483648
        %v4581 = vxor.u32 %v4505, 2147483648
        %v4582 = vxor.u32 %v4330, 2147483648
        %v4583 = vxor.u32 %v4508, 2147483648
        %v4584 = vxor.u32 %v4332, 2147483648
        %v4585 = vxor.u32 %v4510, 2147483648
        %v4586 = vxor.u32 %v4335, 2147483648
        %v4587 = vxor.u32 %v4513, 2147483648
        %v4588 = vxor.u32 %v4337, 2147483648
        %v4589 = vxor.u32 %v4515, 2147483648
        %v4590 = vxor.u32 %v4340, 2147483648
        %v4591 = vxor.u32 %v4518, 2147483648
        %v4592 = vxor.u32 %v4342, 2147483648
        %v4593 = vxor.u32 %v4520, 2147483648
        %v4594 = vxor.u32 %v4345, 2147483648
        %v4595 = vxor.u32 %v4523, 2147483648
        %v4596 = vxor.u32 %v4347, 2147483648
        %v4597 = vxor.u32 %v4525, 2147483648
        %v4598 = vxor.u32 %v4350, 2147483648
        %v4599 = vxor.u32 %v4528, 2147483648
        %v4600 = vxor.u32 %v4352, 2147483648
        %v4601 = vxor.u32 %v4530, 2147483648
        %v4602 = vxor.u32 %v4355, 2147483648
        %v4603 = vxor.u32 %v4533, 2147483648
        %v4604 = vxor.u32 %v4357, 2147483648
        %v4605 = vxor.u32 %v4535, 2147483648
        %v4606 = vxor.u32 %v4360, 2147483648
        %v4607 = vxor.u32 %v4538, 2147483648
        %v4608 = vxor.u32 %v4362, 2147483648
        %v4609 = vxor.u32 %v4540, 2147483648
        %v4610 = vxor.u32 %v4365, 2147483648
        %v4611 = vxor.u32 %v4543, 2147483648
        %v4612 = vxor.u32 %v4367, 2147483648
        %v4613 = vxor.u32 %v4545, 2147483648
        %v4614 = vxor.u32 %v4370, 2147483648
        %v4615 = vxor.u32 %v4548, 2147483648
        %v4616 = vxor.u32 %v4372, 2147483648
        %v4617 = vxor.u32 %v4550, 2147483648
        %v4618 = vxor.u32 %v4375, 2147483648
        %v4619 = vxor.u32 %v4553, 2147483648
        %v4620 = vxor.u32 %v4377, 2147483648
        %v4621 = vxor.u32 %v4555, 2147483648
        %v4622 = vxor.u32 %v4380, 2147483648
        %v4623 = vxor.u32 %v4558, 2147483648
        %v4624 = vxor.u32 %v4382, 2147483648
        %v4625 = vxor.u32 %v4560, 2147483648
        %v4626 = vmul.f32 %v4562, 1.442695
        %v4627 = vpow.pop %v4626
        %v4628 = vmul.f32 %v4563, 1.442695
        %v4629 = vpow.pop %v4628
        %v4630 = vmul.f32 %v4564, 1.442695
        %v4631 = vpow.pop %v4630
        %v4632 = vmul.f32 %v4565, 1.442695
        %v4633 = vpow.pop %v4632
        %v4634 = vmul.f32 %v4566, 1.442695
        %v4635 = vpow.pop %v4634
        %v4636 = vmul.f32 %v4567, 1.442695
        %v4637 = vpow.pop %v4636
        %v4638 = vmul.f32 %v4568, 1.442695
        %v4639 = vpow.pop %v4638
        %v4640 = vmul.f32 %v4569, 1.442695
        %v4641 = vpow.pop %v4640
        %v4642 = vmul.f32 %v4570, 1.442695
        %v4643 = vpow.pop %v4642
        %v4644 = vmul.f32 %v4571, 1.442695
        %v4645 = vpow.pop %v4644
        %v4646 = vmul.f32 %v4572, 1.442695
        %v4647 = vpow.pop %v4646
        %v4648 = vmul.f32 %v4573, 1.442695
        %v4649 = vpow.pop %v4648
        %v4650 = vmul.f32 %v4574, 1.442695
        %v4651 = vpow.pop %v4650
        %v4652 = vmul.f32 %v4575, 1.442695
        %v4653 = vpow.pop %v4652
        %v4654 = vmul.f32 %v4576, 1.442695
        %v4655 = vpow.pop %v4654
        %v4656 = vmul.f32 %v4577, 1.442695
        %v4657 = vpow.pop %v4656
        %v4658 = vmul.f32 %v4578, 1.442695
        %v4659 = vpow.pop %v4658
        %v4660 = vmul.f32 %v4579, 1.442695
        %v4661 = vpow.pop %v4660
        %v4662 = vmul.f32 %v4580, 1.442695
        %v4663 = vpow.pop %v4662
        %v4664 = vmul.f32 %v4581, 1.442695
        %v4665 = vpow.pop %v4664
        %v4666 = vmul.f32 %v4582, 1.442695
        %v4667 = vpow.pop %v4666
        %v4668 = vmul.f32 %v4583, 1.442695
        %v4669 = vpow.pop %v4668
        %v4670 = vmul.f32 %v4584, 1.442695
        %v4671 = vpow.pop %v4670
        %v4672 = vmul.f32 %v4585, 1.442695
        %v4673 = vpow.pop %v4672
        %v4674 = vmul.f32 %v4586, 1.442695
        %v4675 = vpow.pop %v4674
        %v4676 = vmul.f32 %v4587, 1.442695
        %v4677 = vpow.pop %v4676
        %v4678 = vmul.f32 %v4588, 1.442695
        %v4679 = vpow.pop %v4678
        %v4680 = vmul.f32 %v4589, 1.442695
        %v4681 = vpow.pop %v4680
        %v4682 = vmul.f32 %v4590, 1.442695
        %v4683 = vpow.pop %v4682
        %v4684 = vmul.f32 %v4591, 1.442695
        %v4685 = vpow.pop %v4684
        %v4686 = vmul.f32 %v4592, 1.442695
        %v4687 = vpow.pop %v4686
        %v4688 = vmul.f32 %v4593, 1.442695
        %v4689 = vpow.pop %v4688
        %v4690 = vmul.f32 %v4594, 1.442695
        %v4691 = vpow.pop %v4690
        %v4692 = vmul.f32 %v4595, 1.442695
        %v4693 = vpow.pop %v4692
        %v4694 = vmul.f32 %v4596, 1.442695
        %v4695 = vpow.pop %v4694
        %v4696 = vmul.f32 %v4597, 1.442695
        %v4697 = vpow.pop %v4696
        %v4698 = vmul.f32 %v4598, 1.442695
        %v4699 = vpow.pop %v4698
        %v4700 = vmul.f32 %v4599, 1.442695
        %v4701 = vpow.pop %v4700
        %v4702 = vmul.f32 %v4600, 1.442695
        %v4703 = vpow.pop %v4702
        %v4704 = vmul.f32 %v4601, 1.442695
        %v4705 = vpow.pop %v4704
        %v4706 = vmul.f32 %v4602, 1.442695
        %v4707 = vpow.pop %v4706
        %v4708 = vmul.f32 %v4603, 1.442695
        %v4709 = vpow.pop %v4708
        %v4710 = vmul.f32 %v4604, 1.442695
        %v4711 = vpow.pop %v4710
        %v4712 = vmul.f32 %v4605, 1.442695
        %v4713 = vpow.pop %v4712
        %v4714 = vmul.f32 %v4606, 1.442695
        %v4715 = vpow.pop %v4714
        %v4716 = vmul.f32 %v4607, 1.442695
        %v4717 = vpow.pop %v4716
        %v4718 = vmul.f32 %v4608, 1.442695
        %v4719 = vpow.pop %v4718
        %v4720 = vmul.f32 %v4609, 1.442695
        %v4721 = vpow.pop %v4720
        %v4722 = vmul.f32 %v4610, 1.442695
        %v4723 = vpow.pop %v4722
        %v4724 = vmul.f32 %v4611, 1.442695
        %v4725 = vpow.pop %v4724
        %v4726 = vmul.f32 %v4612, 1.442695
        %v4727 = vpow.pop %v4726
        %v4728 = vmul.f32 %v4613, 1.442695
        %v4729 = vpow.pop %v4728
        %v4730 = vmul.f32 %v4614, 1.442695
        %v4731 = vpow.pop %v4730
        %v4732 = vmul.f32 %v4615, 1.442695
        %v4733 = vpow.pop %v4732
        %v4734 = vmul.f32 %v4616, 1.442695
        %v4735 = vpow.pop %v4734
        %v4736 = vmul.f32 %v4617, 1.442695
        %v4737 = vpow.pop %v4736
        %v4738 = vmul.f32 %v4618, 1.442695
        %v4739 = vpow.pop %v4738
        %v4740 = vmul.f32 %v4619, 1.442695
        %v4741 = vpow.pop %v4740
        %v4742 = vmul.f32 %v4620, 1.442695
        %v4743 = vpow.pop %v4742
        %v4744 = vmul.f32 %v4621, 1.442695
        %v4745 = vpow.pop %v4744
        %v4746 = vmul.f32 %v4622, 1.442695
        %v4747 = vpow.pop %v4746
        %v4748 = vmul.f32 %v4623, 1.442695
        %v4749 = vpow.pop %v4748
        %v4750 = vmul.f32 %v4624, 1.442695
        %v4751 = vpow.pop %v4750
        %v4752 = vmul.f32 %v4625, 1.442695
        %v4753 = vpow.pop %v4752
        %v4754 = vadd.f32 %v4627, 1.0
        %v4755 = vadd.f32 %v4629, 1.0
        %v4756 = vadd.f32 %v4631, 1.0
        %v4757 = vadd.f32 %v4633, 1.0
        %v4758 = vadd.f32 %v4635, 1.0
        %v4759 = vadd.f32 %v4637, 1.0
        %v4760 = vadd.f32 %v4639, 1.0
        %v4761 = vadd.f32 %v4641, 1.0
        %v4762 = vadd.f32 %v4643, 1.0
        %v4763 = vadd.f32 %v4645, 1.0
        %v4764 = vadd.f32 %v4647, 1.0
        %v4765 = vadd.f32 %v4649, 1.0
        %v4766 = vadd.f32 %v4651, 1.0
        %v4767 = vadd.f32 %v4653, 1.0
        %v4768 = vadd.f32 %v4655, 1.0
        %v4769 = vadd.f32 %v4657, 1.0
        %v4770 = vadd.f32 %v4659, 1.0
        %v4771 = vadd.f32 %v4661, 1.0
        %v4772 = vadd.f32 %v4663, 1.0
        %v4773 = vadd.f32 %v4665, 1.0
        %v4774 = vadd.f32 %v4667, 1.0
        %v4775 = vadd.f32 %v4669, 1.0
        %v4776 = vadd.f32 %v4671, 1.0
        %v4777 = vadd.f32 %v4673, 1.0
        %v4778 = vadd.f32 %v4675, 1.0
        %v4779 = vadd.f32 %v4677, 1.0
        %v4780 = vadd.f32 %v4679, 1.0
        %v4781 = vadd.f32 %v4681, 1.0
        %v4782 = vadd.f32 %v4683, 1.0
        %v4783 = vadd.f32 %v4685, 1.0
        %v4784 = vadd.f32 %v4687, 1.0
        %v4785 = vadd.f32 %v4689, 1.0
        %v4786 = vadd.f32 %v4691, 1.0
        %v4787 = vadd.f32 %v4693, 1.0
        %v4788 = vadd.f32 %v4695, 1.0
        %v4789 = vadd.f32 %v4697, 1.0
        %v4790 = vadd.f32 %v4699, 1.0
        %v4791 = vadd.f32 %v4701, 1.0
        %v4792 = vadd.f32 %v4703, 1.0
        %v4793 = vadd.f32 %v4705, 1.0
        %v4794 = vadd.f32 %v4707, 1.0
        %v4795 = vadd.f32 %v4709, 1.0
        %v4796 = vadd.f32 %v4711, 1.0
        %v4797 = vadd.f32 %v4713, 1.0
        %v4798 = vadd.f32 %v4715, 1.0
        %v4799 = vadd.f32 %v4717, 1.0
        %v4800 = vadd.f32 %v4719, 1.0
        %v4801 = vadd.f32 %v4721, 1.0
        %v4802 = vadd.f32 %v4723, 1.0
        %v4803 = vadd.f32 %v4725, 1.0
        %v4804 = vadd.f32 %v4727, 1.0
        %v4805 = vadd.f32 %v4729, 1.0
        %v4806 = vadd.f32 %v4731, 1.0
        %v4807 = vadd.f32 %v4733, 1.0
        %v4808 = vadd.f32 %v4735, 1.0
        %v4809 = vadd.f32 %v4737, 1.0
        %v4810 = vadd.f32 %v4739, 1.0
        %v4811 = vadd.f32 %v4741, 1.0
        %v4812 = vadd.f32 %v4743, 1.0
        %v4813 = vadd.f32 %v4745, 1.0
        %v4814 = vadd.f32 %v4747, 1.0
        %v4815 = vadd.f32 %v4749, 1.0
        %v4816 = vadd.f32 %v4751, 1.0
        %v4817 = vadd.f32 %v4753, 1.0
        %v4818 = vrcp.pop %v4754
        %v4819 = vmul.f32 %v4754, %v4818
        %v4820 = vsub.f32 1.0, %v4819
        %v4821 = vmul.f32 %v4818, %v4820
        %v4822 = vadd.f32 %v4818, %v4821
        %vm4823 = vweird.f32 %v4754
        %vm4824 = vweird.f32 %v4818
        %vm4825 = vmor %vm4823, %vm4824
        %v4826 = vsel %vm4825, %v4818, %v4822
        %v4827 = vand.u32 2147483647, %v4754
        %vm4828 = vcmp.eq.f32.partialorder %v4827, 8.507059e+37
        %v4829 = vand.u32 %v4754, 2147483648
        %v4830 = vor.u32 1.1754944e-38, %v4829
        %v4831 = vsel %vm4828, %v4830, %v4826
        %v4832 = vmul.f32 1.0, %v4831
        %v4833 = vrcp.pop %v4755
        %v4834 = vmul.f32 %v4755, %v4833
        %v4835 = vsub.f32 1.0, %v4834
        %v4836 = vmul.f32 %v4833, %v4835
        %v4837 = vadd.f32 %v4833, %v4836
        %vm4838 = vweird.f32 %v4755
        %vm4839 = vweird.f32 %v4833
        %vm4840 = vmor %vm4838, %vm4839
        %v4841 = vsel %vm4840, %v4833, %v4837
        %v4842 = vand.u32 2147483647, %v4755
        %vm4843 = vcmp.eq.f32.partialorder %v4842, 8.507059e+37
        %v4844 = vand.u32 %v4755, 2147483648
        %v4845 = vor.u32 1.1754944e-38, %v4844
        %v4846 = vsel %vm4843, %v4845, %v4841
        %v4847 = vmul.f32 1.0, %v4846
        %v4848 = vrcp.pop %v4756
        %v4849 = vmul.f32 %v4756, %v4848
        %v4850 = vsub.f32 1.0, %v4849
        %v4851 = vmul.f32 %v4848, %v4850
        %v4852 = vadd.f32 %v4848, %v4851
        %vm4853 = vweird.f32 %v4756
        %vm4854 = vweird.f32 %v4848
        %vm4855 = vmor %vm4853, %vm4854
        %v4856 = vsel %vm4855, %v4848, %v4852
        %v4857 = vand.u32 2147483647, %v4756
        %vm4858 = vcmp.eq.f32.partialorder %v4857, 8.507059e+37
        %v4859 = vand.u32 %v4756, 2147483648
        %v4860 = vor.u32 1.1754944e-38, %v4859
        %v4861 = vsel %vm4858, %v4860, %v4856
        %v4862 = vmul.f32 1.0, %v4861
        %v4863 = vrcp.pop %v4757
        %v4864 = vmul.f32 %v4757, %v4863
        %v4865 = vsub.f32 1.0, %v4864
        %v4866 = vmul.f32 %v4863, %v4865
        %v4867 = vadd.f32 %v4863, %v4866
        %vm4868 = vweird.f32 %v4757
        %vm4869 = vweird.f32 %v4863
        %vm4870 = vmor %vm4868, %vm4869
        %v4871 = vsel %vm4870, %v4863, %v4867
        %v4872 = vand.u32 2147483647, %v4757
        %vm4873 = vcmp.eq.f32.partialorder %v4872, 8.507059e+37
        %v4874 = vand.u32 %v4757, 2147483648
        %v4875 = vor.u32 1.1754944e-38, %v4874
        %v4876 = vsel %vm4873, %v4875, %v4871
        %v4877 = vmul.f32 1.0, %v4876
        %v4878 = vrcp.pop %v4758
        %v4879 = vmul.f32 %v4758, %v4878
        %v4880 = vsub.f32 1.0, %v4879
        %v4881 = vmul.f32 %v4878, %v4880
        %v4882 = vadd.f32 %v4878, %v4881
        %vm4883 = vweird.f32 %v4758
        %vm4884 = vweird.f32 %v4878
        %vm4885 = vmor %vm4883, %vm4884
        %v4886 = vsel %vm4885, %v4878, %v4882
        %v4887 = vand.u32 2147483647, %v4758
        %vm4888 = vcmp.eq.f32.partialorder %v4887, 8.507059e+37
        %v4889 = vand.u32 %v4758, 2147483648
        %v4890 = vor.u32 1.1754944e-38, %v4889
        %v4891 = vsel %vm4888, %v4890, %v4886
        %v4892 = vmul.f32 1.0, %v4891
        %v4893 = vrcp.pop %v4759
        %v4894 = vmul.f32 %v4759, %v4893
        %v4895 = vsub.f32 1.0, %v4894
        %v4896 = vmul.f32 %v4893, %v4895
        %v4897 = vadd.f32 %v4893, %v4896
        %vm4898 = vweird.f32 %v4759
        %vm4899 = vweird.f32 %v4893
        %vm4900 = vmor %vm4898, %vm4899
        %v4901 = vsel %vm4900, %v4893, %v4897
        %v4902 = vand.u32 2147483647, %v4759
        %vm4903 = vcmp.eq.f32.partialorder %v4902, 8.507059e+37
        %v4904 = vand.u32 %v4759, 2147483648
        %v4905 = vor.u32 1.1754944e-38, %v4904
        %v4906 = vsel %vm4903, %v4905, %v4901
        %v4907 = vmul.f32 1.0, %v4906
        %v4908 = vrcp.pop %v4760
        %v4909 = vmul.f32 %v4760, %v4908
        %v4910 = vsub.f32 1.0, %v4909
        %v4911 = vmul.f32 %v4908, %v4910
        %v4912 = vadd.f32 %v4908, %v4911
        %vm4913 = vweird.f32 %v4760
        %vm4914 = vweird.f32 %v4908
        %vm4915 = vmor %vm4913, %vm4914
        %v4916 = vsel %vm4915, %v4908, %v4912
        %v4917 = vand.u32 2147483647, %v4760
        %vm4918 = vcmp.eq.f32.partialorder %v4917, 8.507059e+37
        %v4919 = vand.u32 %v4760, 2147483648
        %v4920 = vor.u32 1.1754944e-38, %v4919
        %v4921 = vsel %vm4918, %v4920, %v4916
        %v4922 = vmul.f32 1.0, %v4921
        %v4923 = vrcp.pop %v4761
        %v4924 = vmul.f32 %v4761, %v4923
        %v4925 = vsub.f32 1.0, %v4924
        %v4926 = vmul.f32 %v4923, %v4925
        %v4927 = vadd.f32 %v4923, %v4926
        %vm4928 = vweird.f32 %v4761
        %vm4929 = vweird.f32 %v4923
        %vm4930 = vmor %vm4928, %vm4929
        %v4931 = vsel %vm4930, %v4923, %v4927
        %v4932 = vand.u32 2147483647, %v4761
        %vm4933 = vcmp.eq.f32.partialorder %v4932, 8.507059e+37
        %v4934 = vand.u32 %v4761, 2147483648
        %v4935 = vor.u32 1.1754944e-38, %v4934
        %v4936 = vsel %vm4933, %v4935, %v4931
        %v4937 = vmul.f32 1.0, %v4936
        %v4938 = vrcp.pop %v4762
        %v4939 = vmul.f32 %v4762, %v4938
        %v4940 = vsub.f32 1.0, %v4939
        %v4941 = vmul.f32 %v4938, %v4940
        %v4942 = vadd.f32 %v4938, %v4941
        %vm4943 = vweird.f32 %v4762
        %vm4944 = vweird.f32 %v4938
        %vm4945 = vmor %vm4943, %vm4944
        %v4946 = vsel %vm4945, %v4938, %v4942
        %v4947 = vand.u32 2147483647, %v4762
        %vm4948 = vcmp.eq.f32.partialorder %v4947, 8.507059e+37
        %v4949 = vand.u32 %v4762, 2147483648
        %v4950 = vor.u32 1.1754944e-38, %v4949
        %v4951 = vsel %vm4948, %v4950, %v4946
        %v4952 = vmul.f32 1.0, %v4951
        %v4953 = vrcp.pop %v4763
        %v4954 = vmul.f32 %v4763, %v4953
        %v4955 = vsub.f32 1.0, %v4954
        %v4956 = vmul.f32 %v4953, %v4955
        %v4957 = vadd.f32 %v4953, %v4956
        %vm4958 = vweird.f32 %v4763
        %vm4959 = vweird.f32 %v4953
        %vm4960 = vmor %vm4958, %vm4959
        %v4961 = vsel %vm4960, %v4953, %v4957
        %v4962 = vand.u32 2147483647, %v4763
        %vm4963 = vcmp.eq.f32.partialorder %v4962, 8.507059e+37
        %v4964 = vand.u32 %v4763, 2147483648
        %v4965 = vor.u32 1.1754944e-38, %v4964
        %v4966 = vsel %vm4963, %v4965, %v4961
        %v4967 = vmul.f32 1.0, %v4966
        %v4968 = vrcp.pop %v4764
        %v4969 = vmul.f32 %v4764, %v4968
        %v4970 = vsub.f32 1.0, %v4969
        %v4971 = vmul.f32 %v4968, %v4970
        %v4972 = vadd.f32 %v4968, %v4971
        %vm4973 = vweird.f32 %v4764
        %vm4974 = vweird.f32 %v4968
        %vm4975 = vmor %vm4973, %vm4974
        %v4976 = vsel %vm4975, %v4968, %v4972
        %v4977 = vand.u32 2147483647, %v4764
        %vm4978 = vcmp.eq.f32.partialorder %v4977, 8.507059e+37
        %v4979 = vand.u32 %v4764, 2147483648
        %v4980 = vor.u32 1.1754944e-38, %v4979
        %v4981 = vsel %vm4978, %v4980, %v4976
        %v4982 = vmul.f32 1.0, %v4981
        %v4983 = vrcp.pop %v4765
        %v4984 = vmul.f32 %v4765, %v4983
        %v4985 = vsub.f32 1.0, %v4984
        %v4986 = vmul.f32 %v4983, %v4985
        %v4987 = vadd.f32 %v4983, %v4986
        %vm4988 = vweird.f32 %v4765
        %vm4989 = vweird.f32 %v4983
        %vm4990 = vmor %vm4988, %vm4989
        %v4991 = vsel %vm4990, %v4983, %v4987
        %v4992 = vand.u32 2147483647, %v4765
        %vm4993 = vcmp.eq.f32.partialorder %v4992, 8.507059e+37
        %v4994 = vand.u32 %v4765, 2147483648
        %v4995 = vor.u32 1.1754944e-38, %v4994
        %v4996 = vsel %vm4993, %v4995, %v4991
        %v4997 = vmul.f32 1.0, %v4996
        %v4998 = vrcp.pop %v4766
        %v4999 = vmul.f32 %v4766, %v4998
        %v5000 = vsub.f32 1.0, %v4999
        %v5001 = vmul.f32 %v4998, %v5000
        %v5002 = vadd.f32 %v4998, %v5001
        %vm5003 = vweird.f32 %v4766
        %vm5004 = vweird.f32 %v4998
        %vm5005 = vmor %vm5003, %vm5004
        %v5006 = vsel %vm5005, %v4998, %v5002
        %v5007 = vand.u32 2147483647, %v4766
        %vm5008 = vcmp.eq.f32.partialorder %v5007, 8.507059e+37
        %v5009 = vand.u32 %v4766, 2147483648
        %v5010 = vor.u32 1.1754944e-38, %v5009
        %v5011 = vsel %vm5008, %v5010, %v5006
        %v5012 = vmul.f32 1.0, %v5011
        %v5013 = vrcp.pop %v4767
        %v5014 = vmul.f32 %v4767, %v5013
        %v5015 = vsub.f32 1.0, %v5014
        %v5016 = vmul.f32 %v5013, %v5015
        %v5017 = vadd.f32 %v5013, %v5016
        %vm5018 = vweird.f32 %v4767
        %vm5019 = vweird.f32 %v5013
        %vm5020 = vmor %vm5018, %vm5019
        %v5021 = vsel %vm5020, %v5013, %v5017
        %v5022 = vand.u32 2147483647, %v4767
        %vm5023 = vcmp.eq.f32.partialorder %v5022, 8.507059e+37
        %v5024 = vand.u32 %v4767, 2147483648
        %v5025 = vor.u32 1.1754944e-38, %v5024
        %v5026 = vsel %vm5023, %v5025, %v5021
        %v5027 = vmul.f32 1.0, %v5026
        %v5028 = vrcp.pop %v4768
        %v5029 = vmul.f32 %v4768, %v5028
        %v5030 = vsub.f32 1.0, %v5029
        %v5031 = vmul.f32 %v5028, %v5030
        %v5032 = vadd.f32 %v5028, %v5031
        %vm5033 = vweird.f32 %v4768
        %vm5034 = vweird.f32 %v5028
        %vm5035 = vmor %vm5033, %vm5034
        %v5036 = vsel %vm5035, %v5028, %v5032
        %v5037 = vand.u32 2147483647, %v4768
        %vm5038 = vcmp.eq.f32.partialorder %v5037, 8.507059e+37
        %v5039 = vand.u32 %v4768, 2147483648
        %v5040 = vor.u32 1.1754944e-38, %v5039
        %v5041 = vsel %vm5038, %v5040, %v5036
        %v5042 = vmul.f32 1.0, %v5041
        %v5043 = vrcp.pop %v4769
        %v5044 = vmul.f32 %v4769, %v5043
        %v5045 = vsub.f32 1.0, %v5044
        %v5046 = vmul.f32 %v5043, %v5045
        %v5047 = vadd.f32 %v5043, %v5046
        %vm5048 = vweird.f32 %v4769
        %vm5049 = vweird.f32 %v5043
        %vm5050 = vmor %vm5048, %vm5049
        %v5051 = vsel %vm5050, %v5043, %v5047
        %v5052 = vand.u32 2147483647, %v4769
        %vm5053 = vcmp.eq.f32.partialorder %v5052, 8.507059e+37
        %v5054 = vand.u32 %v4769, 2147483648
        %v5055 = vor.u32 1.1754944e-38, %v5054
        %v5056 = vsel %vm5053, %v5055, %v5051
        %v5057 = vmul.f32 1.0, %v5056
        %v5058 = vrcp.pop %v4770
        %v5059 = vmul.f32 %v4770, %v5058
        %v5060 = vsub.f32 1.0, %v5059
        %v5061 = vmul.f32 %v5058, %v5060
        %v5062 = vadd.f32 %v5058, %v5061
        %vm5063 = vweird.f32 %v4770
        %vm5064 = vweird.f32 %v5058
        %vm5065 = vmor %vm5063, %vm5064
        %v5066 = vsel %vm5065, %v5058, %v5062
        %v5067 = vand.u32 2147483647, %v4770
        %vm5068 = vcmp.eq.f32.partialorder %v5067, 8.507059e+37
        %v5069 = vand.u32 %v4770, 2147483648
        %v5070 = vor.u32 1.1754944e-38, %v5069
        %v5071 = vsel %vm5068, %v5070, %v5066
        %v5072 = vmul.f32 1.0, %v5071
        %v5073 = vrcp.pop %v4771
        %v5074 = vmul.f32 %v4771, %v5073
        %v5075 = vsub.f32 1.0, %v5074
        %v5076 = vmul.f32 %v5073, %v5075
        %v5077 = vadd.f32 %v5073, %v5076
        %vm5078 = vweird.f32 %v4771
        %vm5079 = vweird.f32 %v5073
        %vm5080 = vmor %vm5078, %vm5079
        %v5081 = vsel %vm5080, %v5073, %v5077
        %v5082 = vand.u32 2147483647, %v4771
        %vm5083 = vcmp.eq.f32.partialorder %v5082, 8.507059e+37
        %v5084 = vand.u32 %v4771, 2147483648
        %v5085 = vor.u32 1.1754944e-38, %v5084
        %v5086 = vsel %vm5083, %v5085, %v5081
        %v5087 = vmul.f32 1.0, %v5086
        %v5088 = vrcp.pop %v4772
        %v5089 = vmul.f32 %v4772, %v5088
        %v5090 = vsub.f32 1.0, %v5089
        %v5091 = vmul.f32 %v5088, %v5090
        %v5092 = vadd.f32 %v5088, %v5091
        %vm5093 = vweird.f32 %v4772
        %vm5094 = vweird.f32 %v5088
        %vm5095 = vmor %vm5093, %vm5094
        %v5096 = vsel %vm5095, %v5088, %v5092
        %v5097 = vand.u32 2147483647, %v4772
        %vm5098 = vcmp.eq.f32.partialorder %v5097, 8.507059e+37
        %v5099 = vand.u32 %v4772, 2147483648
        %v5100 = vor.u32 1.1754944e-38, %v5099
        %v5101 = vsel %vm5098, %v5100, %v5096
        %v5102 = vmul.f32 1.0, %v5101
        %v5103 = vrcp.pop %v4773
        %v5104 = vmul.f32 %v4773, %v5103
        %v5105 = vsub.f32 1.0, %v5104
        %v5106 = vmul.f32 %v5103, %v5105
        %v5107 = vadd.f32 %v5103, %v5106
        %vm5108 = vweird.f32 %v4773
        %vm5109 = vweird.f32 %v5103
        %vm5110 = vmor %vm5108, %vm5109
        %v5111 = vsel %vm5110, %v5103, %v5107
        %v5112 = vand.u32 2147483647, %v4773
        %vm5113 = vcmp.eq.f32.partialorder %v5112, 8.507059e+37
        %v5114 = vand.u32 %v4773, 2147483648
        %v5115 = vor.u32 1.1754944e-38, %v5114
        %v5116 = vsel %vm5113, %v5115, %v5111
        %v5117 = vmul.f32 1.0, %v5116
        %v5118 = vrcp.pop %v4774
        %v5119 = vmul.f32 %v4774, %v5118
        %v5120 = vsub.f32 1.0, %v5119
        %v5121 = vmul.f32 %v5118, %v5120
        %v5122 = vadd.f32 %v5118, %v5121
        %vm5123 = vweird.f32 %v4774
        %vm5124 = vweird.f32 %v5118
        %vm5125 = vmor %vm5123, %vm5124
        %v5126 = vsel %vm5125, %v5118, %v5122
        %v5127 = vand.u32 2147483647, %v4774
        %vm5128 = vcmp.eq.f32.partialorder %v5127, 8.507059e+37
        %v5129 = vand.u32 %v4774, 2147483648
        %v5130 = vor.u32 1.1754944e-38, %v5129
        %v5131 = vsel %vm5128, %v5130, %v5126
        %v5132 = vmul.f32 1.0, %v5131
        %v5133 = vrcp.pop %v4775
        %v5134 = vmul.f32 %v4775, %v5133
        %v5135 = vsub.f32 1.0, %v5134
        %v5136 = vmul.f32 %v5133, %v5135
        %v5137 = vadd.f32 %v5133, %v5136
        %vm5138 = vweird.f32 %v4775
        %vm5139 = vweird.f32 %v5133
        %vm5140 = vmor %vm5138, %vm5139
        %v5141 = vsel %vm5140, %v5133, %v5137
        %v5142 = vand.u32 2147483647, %v4775
        %vm5143 = vcmp.eq.f32.partialorder %v5142, 8.507059e+37
        %v5144 = vand.u32 %v4775, 2147483648
        %v5145 = vor.u32 1.1754944e-38, %v5144
        %v5146 = vsel %vm5143, %v5145, %v5141
        %v5147 = vmul.f32 1.0, %v5146
        %v5148 = vrcp.pop %v4776
        %v5149 = vmul.f32 %v4776, %v5148
        %v5150 = vsub.f32 1.0, %v5149
        %v5151 = vmul.f32 %v5148, %v5150
        %v5152 = vadd.f32 %v5148, %v5151
        %vm5153 = vweird.f32 %v4776
        %vm5154 = vweird.f32 %v5148
        %vm5155 = vmor %vm5153, %vm5154
        %v5156 = vsel %vm5155, %v5148, %v5152
        %v5157 = vand.u32 2147483647, %v4776
        %vm5158 = vcmp.eq.f32.partialorder %v5157, 8.507059e+37
        %v5159 = vand.u32 %v4776, 2147483648
        %v5160 = vor.u32 1.1754944e-38, %v5159
        %v5161 = vsel %vm5158, %v5160, %v5156
        %v5162 = vmul.f32 1.0, %v5161
        %v5163 = vrcp.pop %v4777
        %v5164 = vmul.f32 %v4777, %v5163
        %v5165 = vsub.f32 1.0, %v5164
        %v5166 = vmul.f32 %v5163, %v5165
        %v5167 = vadd.f32 %v5163, %v5166
        %vm5168 = vweird.f32 %v4777
        %vm5169 = vweird.f32 %v5163
        %vm5170 = vmor %vm5168, %vm5169
        %v5171 = vsel %vm5170, %v5163, %v5167
        %v5172 = vand.u32 2147483647, %v4777
        %vm5173 = vcmp.eq.f32.partialorder %v5172, 8.507059e+37
        %v5174 = vand.u32 %v4777, 2147483648
        %v5175 = vor.u32 1.1754944e-38, %v5174
        %v5176 = vsel %vm5173, %v5175, %v5171
        %v5177 = vmul.f32 1.0, %v5176
        %v5178 = vrcp.pop %v4778
        %v5179 = vmul.f32 %v4778, %v5178
        %v5180 = vsub.f32 1.0, %v5179
        %v5181 = vmul.f32 %v5178, %v5180
        %v5182 = vadd.f32 %v5178, %v5181
        %vm5183 = vweird.f32 %v4778
        %vm5184 = vweird.f32 %v5178
        %vm5185 = vmor %vm5183, %vm5184
        %v5186 = vsel %vm5185, %v5178, %v5182
        %v5187 = vand.u32 2147483647, %v4778
        %vm5188 = vcmp.eq.f32.partialorder %v5187, 8.507059e+37
        %v5189 = vand.u32 %v4778, 2147483648
        %v5190 = vor.u32 1.1754944e-38, %v5189
        %v5191 = vsel %vm5188, %v5190, %v5186
        %v5192 = vmul.f32 1.0, %v5191
        %v5193 = vrcp.pop %v4779
        %v5194 = vmul.f32 %v4779, %v5193
        %v5195 = vsub.f32 1.0, %v5194
        %v5196 = vmul.f32 %v5193, %v5195
        %v5197 = vadd.f32 %v5193, %v5196
        %vm5198 = vweird.f32 %v4779
        %vm5199 = vweird.f32 %v5193
        %vm5200 = vmor %vm5198, %vm5199
        %v5201 = vsel %vm5200, %v5193, %v5197
        %v5202 = vand.u32 2147483647, %v4779
        %vm5203 = vcmp.eq.f32.partialorder %v5202, 8.507059e+37
        %v5204 = vand.u32 %v4779, 2147483648
        %v5205 = vor.u32 1.1754944e-38, %v5204
        %v5206 = vsel %vm5203, %v5205, %v5201
        %v5207 = vmul.f32 1.0, %v5206
        %v5208 = vrcp.pop %v4780
        %v5209 = vmul.f32 %v4780, %v5208
        %v5210 = vsub.f32 1.0, %v5209
        %v5211 = vmul.f32 %v5208, %v5210
        %v5212 = vadd.f32 %v5208, %v5211
        %vm5213 = vweird.f32 %v4780
        %vm5214 = vweird.f32 %v5208
        %vm5215 = vmor %vm5213, %vm5214
        %v5216 = vsel %vm5215, %v5208, %v5212
        %v5217 = vand.u32 2147483647, %v4780
        %vm5218 = vcmp.eq.f32.partialorder %v5217, 8.507059e+37
        %v5219 = vand.u32 %v4780, 2147483648
        %v5220 = vor.u32 1.1754944e-38, %v5219
        %v5221 = vsel %vm5218, %v5220, %v5216
        %v5222 = vmul.f32 1.0, %v5221
        %v5223 = vrcp.pop %v4781
        %v5224 = vmul.f32 %v4781, %v5223
        %v5225 = vsub.f32 1.0, %v5224
        %v5226 = vmul.f32 %v5223, %v5225
        %v5227 = vadd.f32 %v5223, %v5226
        %vm5228 = vweird.f32 %v4781
        %vm5229 = vweird.f32 %v5223
        %vm5230 = vmor %vm5228, %vm5229
        %v5231 = vsel %vm5230, %v5223, %v5227
        %v5232 = vand.u32 2147483647, %v4781
        %vm5233 = vcmp.eq.f32.partialorder %v5232, 8.507059e+37
        %v5234 = vand.u32 %v4781, 2147483648
        %v5235 = vor.u32 1.1754944e-38, %v5234
        %v5236 = vsel %vm5233, %v5235, %v5231
        %v5237 = vmul.f32 1.0, %v5236
        %v5238 = vrcp.pop %v4782
        %v5239 = vmul.f32 %v4782, %v5238
        %v5240 = vsub.f32 1.0, %v5239
        %v5241 = vmul.f32 %v5238, %v5240
        %v5242 = vadd.f32 %v5238, %v5241
        %vm5243 = vweird.f32 %v4782
        %vm5244 = vweird.f32 %v5238
        %vm5245 = vmor %vm5243, %vm5244
        %v5246 = vsel %vm5245, %v5238, %v5242
        %v5247 = vand.u32 2147483647, %v4782
        %vm5248 = vcmp.eq.f32.partialorder %v5247, 8.507059e+37
        %v5249 = vand.u32 %v4782, 2147483648
        %v5250 = vor.u32 1.1754944e-38, %v5249
        %v5251 = vsel %vm5248, %v5250, %v5246
        %v5252 = vmul.f32 1.0, %v5251
        %v5253 = vrcp.pop %v4783
        %v5254 = vmul.f32 %v4783, %v5253
        %v5255 = vsub.f32 1.0, %v5254
        %v5256 = vmul.f32 %v5253, %v5255
        %v5257 = vadd.f32 %v5253, %v5256
        %vm5258 = vweird.f32 %v4783
        %vm5259 = vweird.f32 %v5253
        %vm5260 = vmor %vm5258, %vm5259
        %v5261 = vsel %vm5260, %v5253, %v5257
        %v5262 = vand.u32 2147483647, %v4783
        %vm5263 = vcmp.eq.f32.partialorder %v5262, 8.507059e+37
        %v5264 = vand.u32 %v4783, 2147483648
        %v5265 = vor.u32 1.1754944e-38, %v5264
        %v5266 = vsel %vm5263, %v5265, %v5261
        %v5267 = vmul.f32 1.0, %v5266
        %v5268 = vrcp.pop %v4784
        %v5269 = vmul.f32 %v4784, %v5268
        %v5270 = vsub.f32 1.0, %v5269
        %v5271 = vmul.f32 %v5268, %v5270
        %v5272 = vadd.f32 %v5268, %v5271
        %vm5273 = vweird.f32 %v4784
        %vm5274 = vweird.f32 %v5268
        %vm5275 = vmor %vm5273, %vm5274
        %v5276 = vsel %vm5275, %v5268, %v5272
        %v5277 = vand.u32 2147483647, %v4784
        %vm5278 = vcmp.eq.f32.partialorder %v5277, 8.507059e+37
        %v5279 = vand.u32 %v4784, 2147483648
        %v5280 = vor.u32 1.1754944e-38, %v5279
        %v5281 = vsel %vm5278, %v5280, %v5276
        %v5282 = vmul.f32 1.0, %v5281
        %v5283 = vrcp.pop %v4785
        %v5284 = vmul.f32 %v4785, %v5283
        %v5285 = vsub.f32 1.0, %v5284
        %v5286 = vmul.f32 %v5283, %v5285
        %v5287 = vadd.f32 %v5283, %v5286
        %vm5288 = vweird.f32 %v4785
        %vm5289 = vweird.f32 %v5283
        %vm5290 = vmor %vm5288, %vm5289
        %v5291 = vsel %vm5290, %v5283, %v5287
        %v5292 = vand.u32 2147483647, %v4785
        %vm5293 = vcmp.eq.f32.partialorder %v5292, 8.507059e+37
        %v5294 = vand.u32 %v4785, 2147483648
        %v5295 = vor.u32 1.1754944e-38, %v5294
        %v5296 = vsel %vm5293, %v5295, %v5291
        %v5297 = vmul.f32 1.0, %v5296
        %v5298 = vrcp.pop %v4786
        %v5299 = vmul.f32 %v4786, %v5298
        %v5300 = vsub.f32 1.0, %v5299
        %v5301 = vmul.f32 %v5298, %v5300
        %v5302 = vadd.f32 %v5298, %v5301
        %vm5303 = vweird.f32 %v4786
        %vm5304 = vweird.f32 %v5298
        %vm5305 = vmor %vm5303, %vm5304
        %v5306 = vsel %vm5305, %v5298, %v5302
        %v5307 = vand.u32 2147483647, %v4786
        %vm5308 = vcmp.eq.f32.partialorder %v5307, 8.507059e+37
        %v5309 = vand.u32 %v4786, 2147483648
        %v5310 = vor.u32 1.1754944e-38, %v5309
        %v5311 = vsel %vm5308, %v5310, %v5306
        %v5312 = vmul.f32 1.0, %v5311
        %v5313 = vrcp.pop %v4787
        %v5314 = vmul.f32 %v4787, %v5313
        %v5315 = vsub.f32 1.0, %v5314
        %v5316 = vmul.f32 %v5313, %v5315
        %v5317 = vadd.f32 %v5313, %v5316
        %vm5318 = vweird.f32 %v4787
        %vm5319 = vweird.f32 %v5313
        %vm5320 = vmor %vm5318, %vm5319
        %v5321 = vsel %vm5320, %v5313, %v5317
        %v5322 = vand.u32 2147483647, %v4787
        %vm5323 = vcmp.eq.f32.partialorder %v5322, 8.507059e+37
        %v5324 = vand.u32 %v4787, 2147483648
        %v5325 = vor.u32 1.1754944e-38, %v5324
        %v5326 = vsel %vm5323, %v5325, %v5321
        %v5327 = vmul.f32 1.0, %v5326
        %v5328 = vrcp.pop %v4788
        %v5329 = vmul.f32 %v4788, %v5328
        %v5330 = vsub.f32 1.0, %v5329
        %v5331 = vmul.f32 %v5328, %v5330
        %v5332 = vadd.f32 %v5328, %v5331
        %vm5333 = vweird.f32 %v4788
        %vm5334 = vweird.f32 %v5328
        %vm5335 = vmor %vm5333, %vm5334
        %v5336 = vsel %vm5335, %v5328, %v5332
        %v5337 = vand.u32 2147483647, %v4788
        %vm5338 = vcmp.eq.f32.partialorder %v5337, 8.507059e+37
        %v5339 = vand.u32 %v4788, 2147483648
        %v5340 = vor.u32 1.1754944e-38, %v5339
        %v5341 = vsel %vm5338, %v5340, %v5336
        %v5342 = vmul.f32 1.0, %v5341
        %v5343 = vrcp.pop %v4789
        %v5344 = vmul.f32 %v4789, %v5343
        %v5345 = vsub.f32 1.0, %v5344
        %v5346 = vmul.f32 %v5343, %v5345
        %v5347 = vadd.f32 %v5343, %v5346
        %vm5348 = vweird.f32 %v4789
        %vm5349 = vweird.f32 %v5343
        %vm5350 = vmor %vm5348, %vm5349
        %v5351 = vsel %vm5350, %v5343, %v5347
        %v5352 = vand.u32 2147483647, %v4789
        %vm5353 = vcmp.eq.f32.partialorder %v5352, 8.507059e+37
        %v5354 = vand.u32 %v4789, 2147483648
        %v5355 = vor.u32 1.1754944e-38, %v5354
        %v5356 = vsel %vm5353, %v5355, %v5351
        %v5357 = vmul.f32 1.0, %v5356
        %v5358 = vrcp.pop %v4790
        %v5359 = vmul.f32 %v4790, %v5358
        %v5360 = vsub.f32 1.0, %v5359
        %v5361 = vmul.f32 %v5358, %v5360
        %v5362 = vadd.f32 %v5358, %v5361
        %vm5363 = vweird.f32 %v4790
        %vm5364 = vweird.f32 %v5358
        %vm5365 = vmor %vm5363, %vm5364
        %v5366 = vsel %vm5365, %v5358, %v5362
        %v5367 = vand.u32 2147483647, %v4790
        %vm5368 = vcmp.eq.f32.partialorder %v5367, 8.507059e+37
        %v5369 = vand.u32 %v4790, 2147483648
        %v5370 = vor.u32 1.1754944e-38, %v5369
        %v5371 = vsel %vm5368, %v5370, %v5366
        %v5372 = vmul.f32 1.0, %v5371
        %v5373 = vrcp.pop %v4791
        %v5374 = vmul.f32 %v4791, %v5373
        %v5375 = vsub.f32 1.0, %v5374
        %v5376 = vmul.f32 %v5373, %v5375
        %v5377 = vadd.f32 %v5373, %v5376
        %vm5378 = vweird.f32 %v4791
        %vm5379 = vweird.f32 %v5373
        %vm5380 = vmor %vm5378, %vm5379
        %v5381 = vsel %vm5380, %v5373, %v5377
        %v5382 = vand.u32 2147483647, %v4791
        %vm5383 = vcmp.eq.f32.partialorder %v5382, 8.507059e+37
        %v5384 = vand.u32 %v4791, 2147483648
        %v5385 = vor.u32 1.1754944e-38, %v5384
        %v5386 = vsel %vm5383, %v5385, %v5381
        %v5387 = vmul.f32 1.0, %v5386
        %v5388 = vrcp.pop %v4792
        %v5389 = vmul.f32 %v4792, %v5388
        %v5390 = vsub.f32 1.0, %v5389
        %v5391 = vmul.f32 %v5388, %v5390
        %v5392 = vadd.f32 %v5388, %v5391
        %vm5393 = vweird.f32 %v4792
        %vm5394 = vweird.f32 %v5388
        %vm5395 = vmor %vm5393, %vm5394
        %v5396 = vsel %vm5395, %v5388, %v5392
        %v5397 = vand.u32 2147483647, %v4792
        %vm5398 = vcmp.eq.f32.partialorder %v5397, 8.507059e+37
        %v5399 = vand.u32 %v4792, 2147483648
        %v5400 = vor.u32 1.1754944e-38, %v5399
        %v5401 = vsel %vm5398, %v5400, %v5396
        %v5402 = vmul.f32 1.0, %v5401
        %v5403 = vrcp.pop %v4793
        %v5404 = vmul.f32 %v4793, %v5403
        %v5405 = vsub.f32 1.0, %v5404
        %v5406 = vmul.f32 %v5403, %v5405
        %v5407 = vadd.f32 %v5403, %v5406
        %vm5408 = vweird.f32 %v4793
        %vm5409 = vweird.f32 %v5403
        %vm5410 = vmor %vm5408, %vm5409
        %v5411 = vsel %vm5410, %v5403, %v5407
        %v5412 = vand.u32 2147483647, %v4793
        %vm5413 = vcmp.eq.f32.partialorder %v5412, 8.507059e+37
        %v5414 = vand.u32 %v4793, 2147483648
        %v5415 = vor.u32 1.1754944e-38, %v5414
        %v5416 = vsel %vm5413, %v5415, %v5411
        %v5417 = vmul.f32 1.0, %v5416
        %v5418 = vrcp.pop %v4794
        %v5419 = vmul.f32 %v4794, %v5418
        %v5420 = vsub.f32 1.0, %v5419
        %v5421 = vmul.f32 %v5418, %v5420
        %v5422 = vadd.f32 %v5418, %v5421
        %vm5423 = vweird.f32 %v4794
        %vm5424 = vweird.f32 %v5418
        %vm5425 = vmor %vm5423, %vm5424
        %v5426 = vsel %vm5425, %v5418, %v5422
        %v5427 = vand.u32 2147483647, %v4794
        %vm5428 = vcmp.eq.f32.partialorder %v5427, 8.507059e+37
        %v5429 = vand.u32 %v4794, 2147483648
        %v5430 = vor.u32 1.1754944e-38, %v5429
        %v5431 = vsel %vm5428, %v5430, %v5426
        %v5432 = vmul.f32 1.0, %v5431
        %v5433 = vrcp.pop %v4795
        %v5434 = vmul.f32 %v4795, %v5433
        %v5435 = vsub.f32 1.0, %v5434
        %v5436 = vmul.f32 %v5433, %v5435
        %v5437 = vadd.f32 %v5433, %v5436
        %vm5438 = vweird.f32 %v4795
        %vm5439 = vweird.f32 %v5433
        %vm5440 = vmor %vm5438, %vm5439
        %v5441 = vsel %vm5440, %v5433, %v5437
        %v5442 = vand.u32 2147483647, %v4795
        %vm5443 = vcmp.eq.f32.partialorder %v5442, 8.507059e+37
        %v5444 = vand.u32 %v4795, 2147483648
        %v5445 = vor.u32 1.1754944e-38, %v5444
        %v5446 = vsel %vm5443, %v5445, %v5441
        %v5447 = vmul.f32 1.0, %v5446
        %v5448 = vrcp.pop %v4796
        %v5449 = vmul.f32 %v4796, %v5448
        %v5450 = vsub.f32 1.0, %v5449
        %v5451 = vmul.f32 %v5448, %v5450
        %v5452 = vadd.f32 %v5448, %v5451
        %vm5453 = vweird.f32 %v4796
        %vm5454 = vweird.f32 %v5448
        %vm5455 = vmor %vm5453, %vm5454
        %v5456 = vsel %vm5455, %v5448, %v5452
        %v5457 = vand.u32 2147483647, %v4796
        %vm5458 = vcmp.eq.f32.partialorder %v5457, 8.507059e+37
        %v5459 = vand.u32 %v4796, 2147483648
        %v5460 = vor.u32 1.1754944e-38, %v5459
        %v5461 = vsel %vm5458, %v5460, %v5456
        %v5462 = vmul.f32 1.0, %v5461
        %v5463 = vrcp.pop %v4797
        %v5464 = vmul.f32 %v4797, %v5463
        %v5465 = vsub.f32 1.0, %v5464
        %v5466 = vmul.f32 %v5463, %v5465
        %v5467 = vadd.f32 %v5463, %v5466
        %vm5468 = vweird.f32 %v4797
        %vm5469 = vweird.f32 %v5463
        %vm5470 = vmor %vm5468, %vm5469
        %v5471 = vsel %vm5470, %v5463, %v5467
        %v5472 = vand.u32 2147483647, %v4797
        %vm5473 = vcmp.eq.f32.partialorder %v5472, 8.507059e+37
        %v5474 = vand.u32 %v4797, 2147483648
        %v5475 = vor.u32 1.1754944e-38, %v5474
        %v5476 = vsel %vm5473, %v5475, %v5471
        %v5477 = vmul.f32 1.0, %v5476
        %v5478 = vrcp.pop %v4798
        %v5479 = vmul.f32 %v4798, %v5478
        %v5480 = vsub.f32 1.0, %v5479
        %v5481 = vmul.f32 %v5478, %v5480
        %v5482 = vadd.f32 %v5478, %v5481
        %vm5483 = vweird.f32 %v4798
        %vm5484 = vweird.f32 %v5478
        %vm5485 = vmor %vm5483, %vm5484
        %v5486 = vsel %vm5485, %v5478, %v5482
        %v5487 = vand.u32 2147483647, %v4798
        %vm5488 = vcmp.eq.f32.partialorder %v5487, 8.507059e+37
        %v5489 = vand.u32 %v4798, 2147483648
        %v5490 = vor.u32 1.1754944e-38, %v5489
        %v5491 = vsel %vm5488, %v5490, %v5486
        %v5492 = vmul.f32 1.0, %v5491
        %v5493 = vrcp.pop %v4799
        %v5494 = vmul.f32 %v4799, %v5493
        %v5495 = vsub.f32 1.0, %v5494
        %v5496 = vmul.f32 %v5493, %v5495
        %v5497 = vadd.f32 %v5493, %v5496
        %vm5498 = vweird.f32 %v4799
        %vm5499 = vweird.f32 %v5493
        %vm5500 = vmor %vm5498, %vm5499
        %v5501 = vsel %vm5500, %v5493, %v5497
        %v5502 = vand.u32 2147483647, %v4799
        %vm5503 = vcmp.eq.f32.partialorder %v5502, 8.507059e+37
        %v5504 = vand.u32 %v4799, 2147483648
        %v5505 = vor.u32 1.1754944e-38, %v5504
        %v5506 = vsel %vm5503, %v5505, %v5501
        %v5507 = vmul.f32 1.0, %v5506
        %v5508 = vrcp.pop %v4800
        %v5509 = vmul.f32 %v4800, %v5508
        %v5510 = vsub.f32 1.0, %v5509
        %v5511 = vmul.f32 %v5508, %v5510
        %v5512 = vadd.f32 %v5508, %v5511
        %vm5513 = vweird.f32 %v4800
        %vm5514 = vweird.f32 %v5508
        %vm5515 = vmor %vm5513, %vm5514
        %v5516 = vsel %vm5515, %v5508, %v5512
        %v5517 = vand.u32 2147483647, %v4800
        %vm5518 = vcmp.eq.f32.partialorder %v5517, 8.507059e+37
        %v5519 = vand.u32 %v4800, 2147483648
        %v5520 = vor.u32 1.1754944e-38, %v5519
        %v5521 = vsel %vm5518, %v5520, %v5516
        %v5522 = vmul.f32 1.0, %v5521
        %v5523 = vrcp.pop %v4801
        %v5524 = vmul.f32 %v4801, %v5523
        %v5525 = vsub.f32 1.0, %v5524
        %v5526 = vmul.f32 %v5523, %v5525
        %v5527 = vadd.f32 %v5523, %v5526
        %vm5528 = vweird.f32 %v4801
        %vm5529 = vweird.f32 %v5523
        %vm5530 = vmor %vm5528, %vm5529
        %v5531 = vsel %vm5530, %v5523, %v5527
        %v5532 = vand.u32 2147483647, %v4801
        %vm5533 = vcmp.eq.f32.partialorder %v5532, 8.507059e+37
        %v5534 = vand.u32 %v4801, 2147483648
        %v5535 = vor.u32 1.1754944e-38, %v5534
        %v5536 = vsel %vm5533, %v5535, %v5531
        %v5537 = vmul.f32 1.0, %v5536
        %v5538 = vrcp.pop %v4802
        %v5539 = vmul.f32 %v4802, %v5538
        %v5540 = vsub.f32 1.0, %v5539
        %v5541 = vmul.f32 %v5538, %v5540
        %v5542 = vadd.f32 %v5538, %v5541
        %vm5543 = vweird.f32 %v4802
        %vm5544 = vweird.f32 %v5538
        %vm5545 = vmor %vm5543, %vm5544
        %v5546 = vsel %vm5545, %v5538, %v5542
        %v5547 = vand.u32 2147483647, %v4802
        %vm5548 = vcmp.eq.f32.partialorder %v5547, 8.507059e+37
        %v5549 = vand.u32 %v4802, 2147483648
        %v5550 = vor.u32 1.1754944e-38, %v5549
        %v5551 = vsel %vm5548, %v5550, %v5546
        %v5552 = vmul.f32 1.0, %v5551
        %v5553 = vrcp.pop %v4803
        %v5554 = vmul.f32 %v4803, %v5553
        %v5555 = vsub.f32 1.0, %v5554
        %v5556 = vmul.f32 %v5553, %v5555
        %v5557 = vadd.f32 %v5553, %v5556
        %vm5558 = vweird.f32 %v4803
        %vm5559 = vweird.f32 %v5553
        %vm5560 = vmor %vm5558, %vm5559
        %v5561 = vsel %vm5560, %v5553, %v5557
        %v5562 = vand.u32 2147483647, %v4803
        %vm5563 = vcmp.eq.f32.partialorder %v5562, 8.507059e+37
        %v5564 = vand.u32 %v4803, 2147483648
        %v5565 = vor.u32 1.1754944e-38, %v5564
        %v5566 = vsel %vm5563, %v5565, %v5561
        %v5567 = vmul.f32 1.0, %v5566
        %v5568 = vrcp.pop %v4804
        %v5569 = vmul.f32 %v4804, %v5568
        %v5570 = vsub.f32 1.0, %v5569
        %v5571 = vmul.f32 %v5568, %v5570
        %v5572 = vadd.f32 %v5568, %v5571
        %vm5573 = vweird.f32 %v4804
        %vm5574 = vweird.f32 %v5568
        %vm5575 = vmor %vm5573, %vm5574
        %v5576 = vsel %vm5575, %v5568, %v5572
        %v5577 = vand.u32 2147483647, %v4804
        %vm5578 = vcmp.eq.f32.partialorder %v5577, 8.507059e+37
        %v5579 = vand.u32 %v4804, 2147483648
        %v5580 = vor.u32 1.1754944e-38, %v5579
        %v5581 = vsel %vm5578, %v5580, %v5576
        %v5582 = vmul.f32 1.0, %v5581
        %v5583 = vrcp.pop %v4805
        %v5584 = vmul.f32 %v4805, %v5583
        %v5585 = vsub.f32 1.0, %v5584
        %v5586 = vmul.f32 %v5583, %v5585
        %v5587 = vadd.f32 %v5583, %v5586
        %vm5588 = vweird.f32 %v4805
        %vm5589 = vweird.f32 %v5583
        %vm5590 = vmor %vm5588, %vm5589
        %v5591 = vsel %vm5590, %v5583, %v5587
        %v5592 = vand.u32 2147483647, %v4805
        %vm5593 = vcmp.eq.f32.partialorder %v5592, 8.507059e+37
        %v5594 = vand.u32 %v4805, 2147483648
        %v5595 = vor.u32 1.1754944e-38, %v5594
        %v5596 = vsel %vm5593, %v5595, %v5591
        %v5597 = vmul.f32 1.0, %v5596
        %v5598 = vrcp.pop %v4806
        %v5599 = vmul.f32 %v4806, %v5598
        %v5600 = vsub.f32 1.0, %v5599
        %v5601 = vmul.f32 %v5598, %v5600
        %v5602 = vadd.f32 %v5598, %v5601
        %vm5603 = vweird.f32 %v4806
        %vm5604 = vweird.f32 %v5598
        %vm5605 = vmor %vm5603, %vm5604
        %v5606 = vsel %vm5605, %v5598, %v5602
        %v5607 = vand.u32 2147483647, %v4806
        %vm5608 = vcmp.eq.f32.partialorder %v5607, 8.507059e+37
        %v5609 = vand.u32 %v4806, 2147483648
        %v5610 = vor.u32 1.1754944e-38, %v5609
        %v5611 = vsel %vm5608, %v5610, %v5606
        %v5612 = vmul.f32 1.0, %v5611
        %v5613 = vrcp.pop %v4807
        %v5614 = vmul.f32 %v4807, %v5613
        %v5615 = vsub.f32 1.0, %v5614
        %v5616 = vmul.f32 %v5613, %v5615
        %v5617 = vadd.f32 %v5613, %v5616
        %vm5618 = vweird.f32 %v4807
        %vm5619 = vweird.f32 %v5613
        %vm5620 = vmor %vm5618, %vm5619
        %v5621 = vsel %vm5620, %v5613, %v5617
        %v5622 = vand.u32 2147483647, %v4807
        %vm5623 = vcmp.eq.f32.partialorder %v5622, 8.507059e+37
        %v5624 = vand.u32 %v4807, 2147483648
        %v5625 = vor.u32 1.1754944e-38, %v5624
        %v5626 = vsel %vm5623, %v5625, %v5621
        %v5627 = vmul.f32 1.0, %v5626
        %v5628 = vrcp.pop %v4808
        %v5629 = vmul.f32 %v4808, %v5628
        %v5630 = vsub.f32 1.0, %v5629
        %v5631 = vmul.f32 %v5628, %v5630
        %v5632 = vadd.f32 %v5628, %v5631
        %vm5633 = vweird.f32 %v4808
        %vm5634 = vweird.f32 %v5628
        %vm5635 = vmor %vm5633, %vm5634
        %v5636 = vsel %vm5635, %v5628, %v5632
        %v5637 = vand.u32 2147483647, %v4808
        %vm5638 = vcmp.eq.f32.partialorder %v5637, 8.507059e+37
        %v5639 = vand.u32 %v4808, 2147483648
        %v5640 = vor.u32 1.1754944e-38, %v5639
        %v5641 = vsel %vm5638, %v5640, %v5636
        %v5642 = vmul.f32 1.0, %v5641
        %v5643 = vrcp.pop %v4809
        %v5644 = vmul.f32 %v4809, %v5643
        %v5645 = vsub.f32 1.0, %v5644
        %v5646 = vmul.f32 %v5643, %v5645
        %v5647 = vadd.f32 %v5643, %v5646
        %vm5648 = vweird.f32 %v4809
        %vm5649 = vweird.f32 %v5643
        %vm5650 = vmor %vm5648, %vm5649
        %v5651 = vsel %vm5650, %v5643, %v5647
        %v5652 = vand.u32 2147483647, %v4809
        %vm5653 = vcmp.eq.f32.partialorder %v5652, 8.507059e+37
        %v5654 = vand.u32 %v4809, 2147483648
        %v5655 = vor.u32 1.1754944e-38, %v5654
        %v5656 = vsel %vm5653, %v5655, %v5651
        %v5657 = vmul.f32 1.0, %v5656
        %v5658 = vrcp.pop %v4810
        %v5659 = vmul.f32 %v4810, %v5658
        %v5660 = vsub.f32 1.0, %v5659
        %v5661 = vmul.f32 %v5658, %v5660
        %v5662 = vadd.f32 %v5658, %v5661
        %vm5663 = vweird.f32 %v4810
        %vm5664 = vweird.f32 %v5658
        %vm5665 = vmor %vm5663, %vm5664
        %v5666 = vsel %vm5665, %v5658, %v5662
        %v5667 = vand.u32 2147483647, %v4810
        %vm5668 = vcmp.eq.f32.partialorder %v5667, 8.507059e+37
        %v5669 = vand.u32 %v4810, 2147483648
        %v5670 = vor.u32 1.1754944e-38, %v5669
        %v5671 = vsel %vm5668, %v5670, %v5666
        %v5672 = vmul.f32 1.0, %v5671
        %v5673 = vrcp.pop %v4811
        %v5674 = vmul.f32 %v4811, %v5673
        %v5675 = vsub.f32 1.0, %v5674
        %v5676 = vmul.f32 %v5673, %v5675
        %v5677 = vadd.f32 %v5673, %v5676
        %vm5678 = vweird.f32 %v4811
        %vm5679 = vweird.f32 %v5673
        %vm5680 = vmor %vm5678, %vm5679
        %v5681 = vsel %vm5680, %v5673, %v5677
        %v5682 = vand.u32 2147483647, %v4811
        %vm5683 = vcmp.eq.f32.partialorder %v5682, 8.507059e+37
        %v5684 = vand.u32 %v4811, 2147483648
        %v5685 = vor.u32 1.1754944e-38, %v5684
        %v5686 = vsel %vm5683, %v5685, %v5681
        %v5687 = vmul.f32 1.0, %v5686
        %v5688 = vrcp.pop %v4812
        %v5689 = vmul.f32 %v4812, %v5688
        %v5690 = vsub.f32 1.0, %v5689
        %v5691 = vmul.f32 %v5688, %v5690
        %v5692 = vadd.f32 %v5688, %v5691
        %vm5693 = vweird.f32 %v4812
        %vm5694 = vweird.f32 %v5688
        %vm5695 = vmor %vm5693, %vm5694
        %v5696 = vsel %vm5695, %v5688, %v5692
        %v5697 = vand.u32 2147483647, %v4812
        %vm5698 = vcmp.eq.f32.partialorder %v5697, 8.507059e+37
        %v5699 = vand.u32 %v4812, 2147483648
        %v5700 = vor.u32 1.1754944e-38, %v5699
        %v5701 = vsel %vm5698, %v5700, %v5696
        %v5702 = vmul.f32 1.0, %v5701
        %v5703 = vrcp.pop %v4813
        %v5704 = vmul.f32 %v4813, %v5703
        %v5705 = vsub.f32 1.0, %v5704
        %v5706 = vmul.f32 %v5703, %v5705
        %v5707 = vadd.f32 %v5703, %v5706
        %vm5708 = vweird.f32 %v4813
        %vm5709 = vweird.f32 %v5703
        %vm5710 = vmor %vm5708, %vm5709
        %v5711 = vsel %vm5710, %v5703, %v5707
        %v5712 = vand.u32 2147483647, %v4813
        %vm5713 = vcmp.eq.f32.partialorder %v5712, 8.507059e+37
        %v5714 = vand.u32 %v4813, 2147483648
        %v5715 = vor.u32 1.1754944e-38, %v5714
        %v5716 = vsel %vm5713, %v5715, %v5711
        %v5717 = vmul.f32 1.0, %v5716
        %v5718 = vrcp.pop %v4814
        %v5719 = vmul.f32 %v4814, %v5718
        %v5720 = vsub.f32 1.0, %v5719
        %v5721 = vmul.f32 %v5718, %v5720
        %v5722 = vadd.f32 %v5718, %v5721
        %vm5723 = vweird.f32 %v4814
        %vm5724 = vweird.f32 %v5718
        %vm5725 = vmor %vm5723, %vm5724
        %v5726 = vsel %vm5725, %v5718, %v5722
        %v5727 = vand.u32 2147483647, %v4814
        %vm5728 = vcmp.eq.f32.partialorder %v5727, 8.507059e+37
        %v5729 = vand.u32 %v4814, 2147483648
        %v5730 = vor.u32 1.1754944e-38, %v5729
        %v5731 = vsel %vm5728, %v5730, %v5726
        %v5732 = vmul.f32 1.0, %v5731
        %v5733 = vrcp.pop %v4815
        %v5734 = vmul.f32 %v4815, %v5733
        %v5735 = vsub.f32 1.0, %v5734
        %v5736 = vmul.f32 %v5733, %v5735
        %v5737 = vadd.f32 %v5733, %v5736
        %vm5738 = vweird.f32 %v4815
        %vm5739 = vweird.f32 %v5733
        %vm5740 = vmor %vm5738, %vm5739
        %v5741 = vsel %vm5740, %v5733, %v5737
        %v5742 = vand.u32 2147483647, %v4815
        %vm5743 = vcmp.eq.f32.partialorder %v5742, 8.507059e+37
        %v5744 = vand.u32 %v4815, 2147483648
        %v5745 = vor.u32 1.1754944e-38, %v5744
        %v5746 = vsel %vm5743, %v5745, %v5741
        %v5747 = vmul.f32 1.0, %v5746
        %v5748 = vrcp.pop %v4816
        %v5749 = vmul.f32 %v4816, %v5748
        %v5750 = vsub.f32 1.0, %v5749
        %v5751 = vmul.f32 %v5748, %v5750
        %v5752 = vadd.f32 %v5748, %v5751
        %vm5753 = vweird.f32 %v4816
        %vm5754 = vweird.f32 %v5748
        %vm5755 = vmor %vm5753, %vm5754
        %v5756 = vsel %vm5755, %v5748, %v5752
        %v5757 = vand.u32 2147483647, %v4816
        %vm5758 = vcmp.eq.f32.partialorder %v5757, 8.507059e+37
        %v5759 = vand.u32 %v4816, 2147483648
        %v5760 = vor.u32 1.1754944e-38, %v5759
        %v5761 = vsel %vm5758, %v5760, %v5756
        %v5762 = vmul.f32 1.0, %v5761
        %v5763 = vrcp.pop %v4817
        %v5764 = vmul.f32 %v4817, %v5763
        %v5765 = vsub.f32 1.0, %v5764
        %v5766 = vmul.f32 %v5763, %v5765
        %v5767 = vadd.f32 %v5763, %v5766
        %vm5768 = vweird.f32 %v4817
        %vm5769 = vweird.f32 %v5763
        %vm5770 = vmor %vm5768, %vm5769
        %v5771 = vsel %vm5770, %v5763, %v5767
        %v5772 = vand.u32 2147483647, %v4817
        %vm5773 = vcmp.eq.f32.partialorder %v5772, 8.507059e+37
        %v5774 = vand.u32 %v4817, 2147483648
        %v5775 = vor.u32 1.1754944e-38, %v5774
        %v5776 = vsel %vm5773, %v5775, %v5771
        %v5777 = vmul.f32 1.0, %v5776
        %5778 = vst [vmem:[%s669] sm:$0xff] %v4832
        %5779 = vst [vmem:[%s669 + $0x8] sm:$0xff] %v4847
        %5780 = vst [vmem:[%s669 + $0x10] sm:$0xff] %v4862
        %5781 = vst [vmem:[%s669 + $0x18] sm:$0xff] %v4877
        %5782 = vst [vmem:[%s669 + $0x20] sm:$0xff] %v4892
        %5783 = vst [vmem:[%s669 + $0x28] sm:$0xff] %v4907
        %5784 = vst [vmem:[%s669 + $0x30] sm:$0xff] %v4922
        %5785 = vst [vmem:[%s669 + $0x38] sm:$0xff] %v4937
        %5786 = vst [vmem:[%s669 + $0x40] sm:$0xff] %v4952
        %5787 = vst [vmem:[%s669 + $0x48] sm:$0xff] %v4967
        %5788 = vst [vmem:[%s669 + $0x50] sm:$0xff] %v4982
        %5789 = vst [vmem:[%s669 + $0x58] sm:$0xff] %v4997
        %5790 = vst [vmem:[%s669 + $0x60] sm:$0xff] %v5012
        %5791 = vst [vmem:[%s669 + $0x68] sm:$0xff] %v5027
        %5792 = vst [vmem:[%s669 + $0x70] sm:$0xff] %v5042
        %5793 = vst [vmem:[%s669 + $0x78] sm:$0xff] %v5057
        %5794 = vst [vmem:[%s669 + $0x80] sm:$0xff] %v5072
        %5795 = vst [vmem:[%s669 + $0x88] sm:$0xff] %v5087
        %5796 = vst [vmem:[%s669 + $0x90] sm:$0xff] %v5102
        %5797 = vst [vmem:[%s669 + $0x98] sm:$0xff] %v5117
        %5798 = vst [vmem:[%s669 + $0xa0] sm:$0xff] %v5132
        %5799 = vst [vmem:[%s669 + $0xa8] sm:$0xff] %v5147
        %5800 = vst [vmem:[%s669 + $0xb0] sm:$0xff] %v5162
        %5801 = vst [vmem:[%s669 + $0xb8] sm:$0xff] %v5177
        %5802 = vst [vmem:[%s669 + $0xc0] sm:$0xff] %v5192
        %5803 = vst [vmem:[%s669 + $0xc8] sm:$0xff] %v5207
        %5804 = vst [vmem:[%s669 + $0xd0] sm:$0xff] %v5222
        %5805 = vst [vmem:[%s669 + $0xd8] sm:$0xff] %v5237
        %5806 = vst [vmem:[%s669 + $0xe0] sm:$0xff] %v5252
        %5807 = vst [vmem:[%s669 + $0xe8] sm:$0xff] %v5267
        %5808 = vst [vmem:[%s669 + $0xf0] sm:$0xff] %v5282
        %5809 = vst [vmem:[%s669 + $0xf8] sm:$0xff] %v5297
        %5810 = vst [vmem:[%s669 + $0x100] sm:$0xff] %v5312
        %5811 = vst [vmem:[%s669 + $0x108] sm:$0xff] %v5327
        %5812 = vst [vmem:[%s669 + $0x110] sm:$0xff] %v5342
        %5813 = vst [vmem:[%s669 + $0x118] sm:$0xff] %v5357
        %5814 = vst [vmem:[%s669 + $0x120] sm:$0xff] %v5372
        %5815 = vst [vmem:[%s669 + $0x128] sm:$0xff] %v5387
        %5816 = vst [vmem:[%s669 + $0x130] sm:$0xff] %v5402
        %5817 = vst [vmem:[%s669 + $0x138] sm:$0xff] %v5417
        %5818 = vst [vmem:[%s669 + $0x140] sm:$0xff] %v5432
        %5819 = vst [vmem:[%s669 + $0x148] sm:$0xff] %v5447
        %5820 = vst [vmem:[%s669 + $0x150] sm:$0xff] %v5462
        %5821 = vst [vmem:[%s669 + $0x158] sm:$0xff] %v5477
        %5822 = vst [vmem:[%s669 + $0x160] sm:$0xff] %v5492
        %5823 = vst [vmem:[%s669 + $0x168] sm:$0xff] %v5507
        %5824 = vst [vmem:[%s669 + $0x170] sm:$0xff] %v5522
        %5825 = vst [vmem:[%s669 + $0x178] sm:$0xff] %v5537
        %5826 = vst [vmem:[%s669 + $0x180] sm:$0xff] %v5552
        %5827 = vst [vmem:[%s669 + $0x188] sm:$0xff] %v5567
        %5828 = vst [vmem:[%s669 + $0x190] sm:$0xff] %v5582
        %5829 = vst [vmem:[%s669 + $0x198] sm:$0xff] %v5597
        %5830 = vst [vmem:[%s669 + $0x1a0] sm:$0xff] %v5612
        %5831 = vst [vmem:[%s669 + $0x1a8] sm:$0xff] %v5627
        %5832 = vst [vmem:[%s669 + $0x1b0] sm:$0xff] %v5642
        %5833 = vst [vmem:[%s669 + $0x1b8] sm:$0xff] %v5657
        %5834 = vst [vmem:[%s669 + $0x1c0] sm:$0xff] %v5672
        %5835 = vst [vmem:[%s669 + $0x1c8] sm:$0xff] %v5687
        %5836 = vst [vmem:[%s669 + $0x1d0] sm:$0xff] %v5702
        %5837 = vst [vmem:[%s669 + $0x1d8] sm:$0xff] %v5717
        %5838 = vst [vmem:[%s669 + $0x1e0] sm:$0xff] %v5732
        %5839 = vst [vmem:[%s669 + $0x1e8] sm:$0xff] %v5747
        %5840 = vst [vmem:[%s669 + $0x1f0] sm:$0xff] %v5762
        %5841 = vst [vmem:[%s669 + $0x1f8] sm:$0xff] %v5777
        %s5842 = smul.u32 32, %s36
        %p5843 = scmp.lt.s32.totalorder %s5842, 63
        %s5844 = scalar_select %p5843, %s5842, 63
        %s5845 = smul.addr %s5844, 8
        %s5846 = scalar_lea.vmem %s14, %s5845
        %s5847 = smul.u32 32, %s36
        %p5848 = scmp.lt.s32.totalorder %s5847, 63
        %s5849 = scalar_select %p5848, %s5847, 63
        %s5850 = smul.addr %s5849, 8
        %s5851 = scalar_lea.vmem %s15, %s5850
        %s5852 = sand.u32 %s400, 1
        %s5853 = scalar_lea.sflag [#allocation4], %s5852
        %s5854 = sand.u32 %s400, 1
        %s5855 = smul.addr %s5854, 512
        %s5856 = scalar_lea.vmem [#allocation16], %s5855
        // Predicated region
        $region109: #{forward.1} parent=75 // pred_check
          %p5857 = pneg %p358
        $region110: #{forward.1} parent=75 // pred_check_branch
          %5859 = sbr.rel (%p5857) target = $region112
        $region111: #{forward.1} parent=75 // pred_region
          %s5860 = smul.u32 32, %s36
        $region112: #{forward.1} parent=75 // pred_fallthru
          _
        // Predicated region
        $region113: #{forward.1} parent=75 // pred_check
          %p5861 = pneg %p384
        $region114: #{forward.1} parent=75 // pred_check_branch
          %5863 = sbr.rel (%p5861) target = $region116
        $region115: #{forward.1} parent=75 // pred_region
          %s5864 = smul.u32 32, %s36
        $region116: #{forward.1} parent=75 // pred_fallthru
          _
        // Predicated region
        $region117: #{forward.1} parent=75 // pred_check
          %p5865 = pneg %p410
        $region118: #{forward.1} parent=75 // pred_check_branch
          %5867 = sbr.rel (%p5865) target = $region120
        $region119: #{forward.1} parent=75 // pred_region
          %s5868 = smul.u32 32, %s36
          %5870 = vsyncadd %s5853, 0
          %s5871 = smul.addr %s5868, 2
          %s5872 = smul.addr %s5871, 8
          %s5873 = scalar_lea.hbm %s16, %s5872
          %s5874 = sshll.u32 %s5856, 4
          %s5875 = int_to_ptr.vmem [resolvable:$true] %s5874
          %s5876 = sshll.u32 %s5873, 4
          %s5877 = int_to_ptr.hbm [resolvable:$true] %s5876
          %5882 = dma.vmem_to_hbm [thread:$0]  %s5875, 8192, %s5877, %s5853, 256, 256, 16
        $region120: #{forward.1} parent=75 // pred_fallthru
          _
      $region76: #{forward.1} parent=5 // pred_fallthru
        _
      %p5883 = scmp.le.s32.totalorder 2, %s31
      // Predicated region
      $region121: #{forward.1} parent=5 // pred_check
        %p5884 = pneg %p5883
      $region122: #{forward.1} parent=5 // pred_check_branch
        %5886 = sbr.rel (%p5884) target = $region124
      $region123: #{forward.1} parent=5 // pred_region
        %s5887 = ssub.s32 %s31, 2
        // Predicated region
        $region125: #{forward.1} parent=123 // pred_check
          %p5888 = pneg %p364
        $region126: #{forward.1} parent=123 // pred_check_branch
          %5890 = sbr.rel (%p5888) target = $region128
        $region127: #{forward.1} parent=123 // pred_region
          %s5891 = smul.u32 32, %s37
          %p5892 = scmp.lt.s32.totalorder %s5891, 63
          %s5893 = scalar_select %p5892, %s5891, 63
          %s5894 = smul.addr %s5893, 8
          %s5895 = scalar_lea.vmem %s14, %s5894
        $region128: #{forward.1} parent=123 // pred_fallthru
          _
        // Predicated region
        $region129: #{forward.1} parent=123 // pred_check
          %p5896 = pneg %p390
        $region130: #{forward.1} parent=123 // pred_check_branch
          %5898 = sbr.rel (%p5896) target = $region132
        $region131: #{forward.1} parent=123 // pred_region
          %s5899 = smul.u32 32, %s37
          %p5900 = scmp.lt.s32.totalorder %s5899, 63
          %s5901 = scalar_select %p5900, %s5899, 63
          %s5902 = smul.addr %s5901, 8
          %s5903 = scalar_lea.vmem %s15, %s5902
        $region132: #{forward.1} parent=123 // pred_fallthru
          _
        // Predicated region
        $region133: #{forward.1} parent=123 // pred_check
          %p5904 = pneg %p416
        $region134: #{forward.1} parent=123 // pred_check_branch
          %5906 = sbr.rel (%p5904) target = $region136
        $region135: #{forward.1} parent=123 // pred_region
          %s5907 = sand.u32 %s401, 1
          %s5908 = scalar_lea.sflag [#allocation4], %s5907
          %s5909 = sand.u32 %s401, 1
          %s5910 = smul.addr %s5909, 512
          %s5911 = scalar_lea.vmem [#allocation16], %s5910
          %5913 = dma.done %s5908, 8192
        $region136: #{forward.1} parent=123 // pred_fallthru
          _
      $region124: #{forward.1} parent=5 // pred_fallthru
        _
    $region6: #{forward.1} parent=1 // loop_footer
      %s35 = sadd.s32 1, %s31
    $region7: #{forward.1} parent=1 // loop_footer_branch
      %30 = sbr.rel target = $region3
    $region8: #{forward.1} parent=1 // loop_exit
      _
    %5914 = vsyncpa [#allocation3], 1
    %s5915 = scalar_lea.sflag [#allocation3], 1
    %5916 = vsyncpa %s5915, 1
    %5917 = vsyncpa [#allocation6], 1
    %5918 = vsyncpa [#allocation9], 1
    %5919 = vsyncpa [#allocation12], 1
    %5920 = vsyncpa [#allocation15], 1
    %5921 = vsyncpa [#allocation4], 1
    %s5922 = scalar_lea.sflag [#allocation4], 1
    %5923 = vsyncpa %s5922, 1

</llo_original>
